<compile_context>
chip_gen: v5e
topology: v5e:2x2
jax: 0.10.0
libtpu: 0.0.40
codegen_flags: <defaults>
</compile_context>

<pallas_src>
import functools

import jax
import jax.numpy as jnp
from jax import lax
from jax.experimental import pallas as pl
from jax.experimental.pallas import tpu as pltpu

# Explicit VMEM cap: below v7x's 64 MiB physical per-TC, far above what the per-image
# blocks used here actually need (plenty of double-buffering headroom on v5e/v6e too).
_VMEM_LIMIT = 48 * 1024 * 1024
_LANE = 128  # pad Cout to a multiple of this so output stores are lane-dense


def _round_up(x, m):
    return (x + m - 1) // m * m


# ----------------------------------------------------------------------------
# Pallas kernel 1: fused 3x3 conv (9-tap shifted matmul) + channel stats
#                  (+ optional fused BN+ReLU prologue on the input tile).
# ----------------------------------------------------------------------------
def conv3x3_bn_stats(x_split, w_taps, *, stride, ho, wo, hs,
                     in_scale=None, in_shift=None, out_dtype=jnp.bfloat16):
    """Fused 3x3 conv (shifted matmul) + per-channel (sum, sum_sq) statistics.

    x_split : (N, S*S*hs, Wi, Cin) bf16.  For stride=1 this is the zero-padded NHWC
              input (S*S=1, hs = H+2).  For stride=2 it is the 2x2 parity
              (space-to-batch) split of the padded input, so every tap read in the
              kernel is a contiguous static slice (no in-kernel strided loads).
    w_taps  : (9, Cin, Coutp) bf16, tap order di*3+dj, Coutp padded to a lane multiple.
    in_scale/in_shift : optional (Cin,) f32.  When given, relu(x*scale+shift) is applied
              to the loaded tile before the taps (previous layer's BatchNorm+ReLU fused
              into this conv's prologue); the 1-pixel spatial border is then re-zeroed
              because zero padding must be applied *after* that activation.

    Returns y:(N, ho, wo, Coutp) out_dtype (pre-BN conv output) and
            stats:(N, 2, Coutp) f32 holding per-image (sum, sum of squares).
    """
    n, hh, wi, cin = x_split.shape
    taps, cin_w, coutp = w_taps.shape
    assert taps == 9 and cin_w == cin
    fuse_in = in_scale is not None
    s = stride

    def kernel(*refs):
        if fuse_in:
            x_ref, w_ref, sc_ref, sh_ref, y_ref, st_ref = refs
        else:
            x_ref, w_ref, y_ref, st_ref = refs

        x = x_ref[0]                                            # (hh, wi, cin)
        if fuse_in:
            # BN(prev layer) + ReLU on the VPU (slack under an MXU-bound body).
            a = jnp.maximum(x.astype(jnp.float32) * sc_ref[...] + sh_ref[...], 0.0)
            # Zero padding must come after the activation: re-zero the 1-px border.
            r = lax.broadcasted_iota(jnp.int32, (hh, wi, 1), 0)
            c = lax.broadcasted_iota(jnp.int32, (hh, wi, 1), 1)
            inside = (r >= 1) & (r <= hh - 2) & (c >= 1) & (c <= wi - 2)
            x = jnp.where(inside, a, 0.0).astype(jnp.bfloat16)

        acc = jnp.zeros((ho * wo, coutp), jnp.float32)
        for di in range(3):                                     # unrolled 9 taps
            for dj in range(3):
                b = (di % s) * s + (dj % s)                     # parity sub-image
                r0 = b * hs + di // s
                c0 = dj // s
                tap = x[r0:r0 + ho, c0:c0 + wo, :].reshape(ho * wo, cin)
                acc = acc + jnp.dot(tap, w_ref[di * 3 + dj],
                                    preferred_element_type=jnp.float32)

        st_ref[...] = jnp.concatenate(
            [jnp.sum(acc, axis=0, keepdims=True),
             jnp.sum(acc * acc, axis=0, keepdims=True)], axis=0)[None]
        y_ref[...] = acc.reshape(1, ho, wo, coutp).astype(y_ref.dtype)

    in_specs = [pl.BlockSpec((1, hh, wi, cin), lambda i: (i, 0, 0, 0)),
                pl.BlockSpec((9, cin, coutp), lambda i: (0, 0, 0))]
    args = [x_split, w_taps]
    if fuse_in:
        in_specs += [pl.BlockSpec((1, cin), lambda i: (0, 0)),
                     pl.BlockSpec((1, cin), lambda i: (0, 0))]
        args += [in_scale.reshape(1, cin).astype(jnp.float32),
                 in_shift.reshape(1, cin).astype(jnp.float32)]

    return pl.pallas_call(
        kernel,
        out_shape=(jax.ShapeDtypeStruct((n, ho, wo, coutp), out_dtype),
                   jax.ShapeDtypeStruct((n, 2, coutp), jnp.float32)),
        grid_spec=pltpu.PrefetchScalarGridSpec(
            num_scalar_prefetch=0,
            grid=(n,),
            in_specs=in_specs,
            out_specs=[pl.BlockSpec((1, ho, wo, coutp), lambda i: (i, 0, 0, 0)),
                       pl.BlockSpec((1, 2, coutp), lambda i: (i, 0, 0))]),
        compiler_params=pltpu.CompilerParams(
            dimension_semantics=("parallel",),
            vmem_limit_bytes=_VMEM_LIMIT),
    )(*args)


# ----------------------------------------------------------------------------
# Pallas kernel 2: final BatchNorm(scale/shift) + ReLU (lane-dense 128-ch blocks).
# ----------------------------------------------------------------------------
def _bn_relu_kernel(y_ref, sc_ref, sh_ref, o_ref):
    o_ref[...] = jnp.maximum(
        y_ref[...].astype(jnp.float32) * sc_ref[...] + sh_ref[...], 0.0)


def bn_relu_apply(y, scale, shift):
    """y:(N, M, C) -> f32 (N, M, C); one image-sized block per grid step."""
    n, m, c = y.shape
    return pl.pallas_call(
        _bn_relu_kernel,
        out_shape=jax.ShapeDtypeStruct((n, m, c), jnp.float32),
        grid_spec=pltpu.PrefetchScalarGridSpec(
            num_scalar_prefetch=0,
            grid=(n,),
            in_specs=[pl.BlockSpec((1, m, c), lambda i: (i, 0, 0)),
                      pl.BlockSpec((1, c), lambda i: (0, 0)),
                      pl.BlockSpec((1, c), lambda i: (0, 0))],
            out_specs=pl.BlockSpec((1, m, c), lambda i: (i, 0, 0))),
        compiler_params=pltpu.CompilerParams(
            dimension_semantics=("parallel",),
            vmem_limit_bytes=_VMEM_LIMIT),
    )(y, scale.reshape(1, c).astype(jnp.float32),
      shift.reshape(1, c).astype(jnp.float32))


# ----------------------------------------------------------------------------
# One-time parameter preprocessing (outside the per-call hot path).
# ----------------------------------------------------------------------------
def _conv_w_to_taps(w_oihw, cin_pad, cout_pad):
    """PyTorch (Cout,Cin,3,3) -> (9, cin_pad, cout_pad) bf16, tap order di*3+dj."""
    cout, cin, kh, kw = w_oihw.shape
    w = jnp.transpose(w_oihw, (2, 3, 1, 0)).reshape(kh * kw, cin, cout)
    w = jnp.pad(w, ((0, 0), (0, cin_pad - cin), (0, cout_pad - cout)))
    return w.astype(jnp.bfloat16)


def prepare_params(params):
    w1, g1, b1, w2, g2, b2 = params
    cout, cin = w1.shape[0], w1.shape[1]
    cp = _round_up(cout, _LANE)
    w1_t = _conv_w_to_taps(w1, cin, cp)   # conv1 input channels stay unpadded in HBM
    w2_t = _conv_w_to_taps(w2, cp, cp)    # conv2 consumes the lane-padded activations
    return (w1_t, g1, b1, w2_t, g2, b2)


def _bn_scale_shift(stats, m_valid, gamma, beta, eps):
    """Fold training-mode BatchNorm (batch mean / biased var) into scale & shift."""
    sums = jnp.sum(stats[:, 0, :], axis=0)
    ssqs = jnp.sum(stats[:, 1, :], axis=0)
    mean = sums / m_valid
    var = jnp.maximum(ssqs / m_valid - mean * mean, 0.0)
    scale = gamma * lax.rsqrt(var + eps)
    shift = beta - mean * scale
    return scale, shift


# ----------------------------------------------------------------------------
# PlainBlock forward.
# ----------------------------------------------------------------------------
def plain_block_forward(x_nchw, prepared, *, downsample=False, eps=1e-5):
    w1_t, g1, b1, w2_t, g2, b2 = prepared
    cout = g1.shape[0]
    cp = w1_t.shape[2]
    stride = 2 if downsample else 1
    n, cin, h, w = x_nchw.shape

    # Lane-pad the BN affine params (tiny); padded channels stay exactly zero
    # end-to-end (zero weight columns -> zero stats -> zero scale/shift).
    g1p, b1p = jnp.pad(g1, (0, cp - cout)), jnp.pad(b1, (0, cp - cout))
    g2p, b2p = jnp.pad(g2, (0, cp - cout)), jnp.pad(b2, (0, cp - cout))

    x = jnp.transpose(x_nchw, (0, 2, 3, 1)).astype(jnp.bfloat16)   # NCHW -> NHWC bf16

    ho = (h + 2 - 3) // stride + 1
    wo = (w + 2 - 3) // stride + 1

    # conv1 input: zero-pad; for stride=2 additionally parity-split (space-to-batch)
    # so the kernel's nine tap reads are contiguous static slices.
    if stride == 1:
        xs = jnp.pad(x, ((0, 0), (1, 1), (1, 1), (0, 0)))
        hs = h + 2
    else:
        hp, wp = _round_up(h + 2, 2), _round_up(w + 2, 2)
        xp = jnp.pad(x, ((0, 0), (1, hp - h - 1), (1, wp - w - 1), (0, 0)))
        subs = [xp[:, pi::2, pj::2, :] for pi in (0, 1) for pj in (0, 1)]
        hs = hp // 2
        xs = jnp.stack(subs, axis=1).reshape(n, 4 * hs, wp // 2, cin)

    # conv1 -> pre-BN output (bf16, lane-padded channels) + channel stats, one kernel.
    y1, st1 = conv3x3_bn_stats(xs, w1_t, stride=stride, ho=ho, wo=wo, hs=hs,
                               out_dtype=jnp.bfloat16)
    sc1, sh1 = _bn_scale_shift(st1, n * ho * wo, g1p, b1p, eps)

    # conv2 with BN1+ReLU fused into its prologue.  The spatial pad here is
    # *pre-activation* zeros; the kernel re-zeros the border after the activation.
    y1p = jnp.pad(y1, ((0, 0), (1, 1), (1, 1), (0, 0)))
    # conv2 output kept f32 for final-output fidelity (bf16 would halve its HBM
    # traffic at ~1e-2 extra error if desired).
    y2, st2 = conv3x3_bn_stats(y1p, w2_t, stride=1, ho=ho, wo=wo, hs=ho + 2,
                               in_scale=sc1, in_shift=sh1, out_dtype=jnp.float32)
    sc2, sh2 = _bn_scale_shift(st2, n * ho * wo, g2p, b2p, eps)

    # Final BN2 + ReLU (needs global conv2 stats, hence a separate lane-dense pass).
    out = bn_relu_apply(y2.reshape(n, ho * wo, cp), sc2, sh2)
    out = out.reshape(n, ho, wo, cp)[..., :cout]
    return jnp.transpose(out, (0, 3, 1, 2))                       # NHWC -> NCHW


# ----------------------------------------------------------------------------
# Pure-JAX reference (training-mode BN, matches PyTorch PlainBlock().forward(x)).
# ----------------------------------------------------------------------------
def reference_forward(x_nchw, params, *, downsample=False, eps=1e-5):
    w1, g1, b1, w2, g2, b2 = params
    s1 = (2, 2) if downsample else (1, 1)

    def conv(x, w, strides):
        dn = lax.conv_dimension_numbers(x.shape, w.shape, ("NCHW", "OIHW", "NCHW"))
        return lax.conv_general_dilated(x, w, strides, [(1, 1), (1, 1)],
                                        dimension_numbers=dn)

    def bn_relu(y, gamma, beta):
        mean = jnp.mean(y, axis=(0, 2, 3), keepdims=True)
        var = jnp.mean((y - mean) ** 2, axis=(0, 2, 3), keepdims=True)
        yhat = (y - mean) / jnp.sqrt(var + eps)
        return jnp.maximum(yhat * gamma[None, :, None, None]
                           + beta[None, :, None, None], 0.0)

    y = bn_relu(conv(x_nchw, w1, s1), g1, b1)
    y = bn_relu(conv(y, w2, (1, 1)), g2, b2)
    return y


def init_params(key, cin, cout):
    ks = jax.random.split(key, 6)
    w1 = 0.1 * jax.random.normal(ks[0], (cout, cin, 3, 3), jnp.float32)
    g1 = 1.0 + 0.1 * jax.random.normal(ks[1], (cout,), jnp.float32)
    b1 = 0.1 * jax.random.normal(ks[2], (cout,), jnp.float32)
    w2 = 0.1 * jax.random.normal(ks[3], (cout, cout, 3, 3), jnp.float32)
    g2 = 1.0 + 0.1 * jax.random.normal(ks[4], (cout,), jnp.float32)
    b2 = 0.1 * jax.random.normal(ks[5], (cout,), jnp.float32)
    return (w1, g1, b1, w2, g2, b2)


if __name__ == "__main__":
    cin, cout = 16, 32
    batch, height, width = 2, 16, 16

    key = jax.random.PRNGKey(0)
    kx, kp = jax.random.split(key)
    x = jax.random.normal(kx, (batch, cin, height, width), jnp.float32)
    params = init_params(kp, cin, cout)
    prepared = prepare_params(params)

    for downsample in (False, True):
        fwd = jax.jit(functools.partial(plain_block_forward, downsample=downsample))
        out = jax.block_until_ready(fwd(x, prepared))
        ref = jax.block_until_ready(
            reference_forward(x, params, downsample=downsample))
        assert out.shape == ref.shape, (out.shape, ref.shape)
        max_diff = float(jnp.max(jnp.abs(out - ref)))
        # bf16 MXU operands / bf16 intermediates => ~1e-2 level differences expected.
        assert jnp.allclose(out, ref, atol=5e-2, rtol=5e-2), (
            "mismatch vs reference (downsample=%s), max abs diff %.4g"
            % (downsample, max_diff))

    print("KERNEL_OK")
</pallas_src>

<mosaic_0001>
module attributes {stable_mosaic.version = 11 : i64} {
  func.func @kernel(%arg0: i32, %arg1: memref<1x18x18x16xbf16, #tpu.memory_space<vmem>>, %arg2: memref<9x16x128xbf16, #tpu.memory_space<vmem>>, %arg3: memref<1x16x16x128xbf16, #tpu.memory_space<vmem>>, %arg4: memref<1x2x128xf32, #tpu.memory_space<vmem>>) attributes {dimension_semantics = [#tpu.dimension_semantics<parallel>], iteration_bounds = array<i64: 2>, scalar_prefetch = 0 : i64, scratch_operands = 0 : i64, tpu.core_type = #tpu.core_type<tc>, window_params = [{transform_indices = @transform_0, window_bounds = array<i64: 1, 18, 18, 16>}, {pipeline_mode = #tpu.pipeline_mode<synchronous>, transform_indices = @transform_1, window_bounds = array<i64: 9, 16, 128>}, {transform_indices = @transform_2, window_bounds = array<i64: 1, 16, 16, 128>}, {transform_indices = @transform_3, window_bounds = array<i64: 1, 2, 128>}]} {
    %c0 = arith.constant 0 : index
    %c0_0 = arith.constant 0 : index
    %c0_1 = arith.constant 0 : index
    %c0_2 = arith.constant 0 : index
    %0 = vector.load %arg1[%c0, %c0_0, %c0_1, %c0_2] : memref<1x18x18x16xbf16, #tpu.memory_space<vmem>>, vector<1x18x18x16xbf16>
    %1 = vector.shape_cast %0 : vector<1x18x18x16xbf16> to vector<18x18x16xbf16>
    %cst = arith.constant 0.000000e+00 : f32
    %2 = vector.broadcast %cst : f32 to vector<256x128xf32>
    %3 = vector.extract_strided_slice %1 {offsets = [0, 0, 0], sizes = [16, 16, 16], strides = [1, 1, 1]} : vector<18x18x16xbf16> to vector<16x16x16xbf16>
    %4 = vector.shape_cast %3 : vector<16x16x16xbf16> to vector<256x16xbf16>
    %c0_3 = arith.constant 0 : index
    %c0_4 = arith.constant 0 : index
    %c0_5 = arith.constant 0 : index
    %5 = vector.load %arg2[%c0_3, %c0_4, %c0_5] : memref<9x16x128xbf16, #tpu.memory_space<vmem>>, vector<1x16x128xbf16>
    %6 = vector.shape_cast %5 : vector<1x16x128xbf16> to vector<16x128xbf16>
    %cst_6 = arith.constant dense<0.000000e+00> : vector<256x128xf32>
    %7 = tpu.matmul %4, %6, %cst_6 {dimension_numbers = #tpu.dot_dimension_numbers<[1], [0], [0], [1], [0, 0, 1, 1], [], []>} : vector<256x16xbf16>, vector<16x128xbf16>, vector<256x128xf32> -> vector<256x128xf32>
    %8 = arith.addf %2, %7 : vector<256x128xf32>
    %9 = vector.extract_strided_slice %1 {offsets = [0, 1, 0], sizes = [16, 16, 16], strides = [1, 1, 1]} : vector<18x18x16xbf16> to vector<16x16x16xbf16>
    %10 = vector.shape_cast %9 : vector<16x16x16xbf16> to vector<256x16xbf16>
    %c1 = arith.constant 1 : index
    %c0_7 = arith.constant 0 : index
    %c0_8 = arith.constant 0 : index
    %11 = vector.load %arg2[%c1, %c0_7, %c0_8] : memref<9x16x128xbf16, #tpu.memory_space<vmem>>, vector<1x16x128xbf16>
    %12 = vector.shape_cast %11 : vector<1x16x128xbf16> to vector<16x128xbf16>
    %cst_9 = arith.constant dense<0.000000e+00> : vector<256x128xf32>
    %13 = tpu.matmul %10, %12, %cst_9 {dimension_numbers = #tpu.dot_dimension_numbers<[1], [0], [0], [1], [0, 0, 1, 1], [], []>} : vector<256x16xbf16>, vector<16x128xbf16>, vector<256x128xf32> -> vector<256x128xf32>
    %14 = arith.addf %8, %13 : vector<256x128xf32>
    %15 = vector.extract_strided_slice %1 {offsets = [0, 2, 0], sizes = [16, 16, 16], strides = [1, 1, 1]} : vector<18x18x16xbf16> to vector<16x16x16xbf16>
    %16 = vector.shape_cast %15 : vector<16x16x16xbf16> to vector<256x16xbf16>
    %c2 = arith.constant 2 : index
    %c0_10 = arith.constant 0 : index
    %c0_11 = arith.constant 0 : index
    %17 = vector.load %arg2[%c2, %c0_10, %c0_11] : memref<9x16x128xbf16, #tpu.memory_space<vmem>>, vector<1x16x128xbf16>
    %18 = vector.shape_cast %17 : vector<1x16x128xbf16> to vector<16x128xbf16>
    %cst_12 = arith.constant dense<0.000000e+00> : vector<256x128xf32>
    %19 = tpu.matmul %16, %18, %cst_12 {dimension_numbers = #tpu.dot_dimension_numbers<[1], [0], [0], [1], [0, 0, 1, 1], [], []>} : vector<256x16xbf16>, vector<16x128xbf16>, vector<256x128xf32> -> vector<256x128xf32>
    %20 = arith.addf %14, %19 : vector<256x128xf32>
    %21 = vector.extract_strided_slice %1 {offsets = [1, 0, 0], sizes = [16, 16, 16], strides = [1, 1, 1]} : vector<18x18x16xbf16> to vector<16x16x16xbf16>
    %22 = vector.shape_cast %21 : vector<16x16x16xbf16> to vector<256x16xbf16>
    %c3 = arith.constant 3 : index
    %c0_13 = arith.constant 0 : index
    %c0_14 = arith.constant 0 : index
    %23 = vector.load %arg2[%c3, %c0_13, %c0_14] : memref<9x16x128xbf16, #tpu.memory_space<vmem>>, vector<1x16x128xbf16>
    %24 = vector.shape_cast %23 : vector<1x16x128xbf16> to vector<16x128xbf16>
    %cst_15 = arith.constant dense<0.000000e+00> : vector<256x128xf32>
    %25 = tpu.matmul %22, %24, %cst_15 {dimension_numbers = #tpu.dot_dimension_numbers<[1], [0], [0], [1], [0, 0, 1, 1], [], []>} : vector<256x16xbf16>, vector<16x128xbf16>, vector<256x128xf32> -> vector<256x128xf32>
    %26 = arith.addf %20, %25 : vector<256x128xf32>
    %27 = vector.extract_strided_slice %1 {offsets = [1, 1, 0], sizes = [16, 16, 16], strides = [1, 1, 1]} : vector<18x18x16xbf16> to vector<16x16x16xbf16>
    %28 = vector.shape_cast %27 : vector<16x16x16xbf16> to vector<256x16xbf16>
    %c4 = arith.constant 4 : index
    %c0_16 = arith.constant 0 : index
    %c0_17 = arith.constant 0 : index
    %29 = vector.load %arg2[%c4, %c0_16, %c0_17] : memref<9x16x128xbf16, #tpu.memory_space<vmem>>, vector<1x16x128xbf16>
    %30 = vector.shape_cast %29 : vector<1x16x128xbf16> to vector<16x128xbf16>
    %cst_18 = arith.constant dense<0.000000e+00> : vector<256x128xf32>
    %31 = tpu.matmul %28, %30, %cst_18 {dimension_numbers = #tpu.dot_dimension_numbers<[1], [0], [0], [1], [0, 0, 1, 1], [], []>} : vector<256x16xbf16>, vector<16x128xbf16>, vector<256x128xf32> -> vector<256x128xf32>
    %32 = arith.addf %26, %31 : vector<256x128xf32>
    %33 = vector.extract_strided_slice %1 {offsets = [1, 2, 0], sizes = [16, 16, 16], strides = [1, 1, 1]} : vector<18x18x16xbf16> to vector<16x16x16xbf16>
    %34 = vector.shape_cast %33 : vector<16x16x16xbf16> to vector<256x16xbf16>
    %c5 = arith.constant 5 : index
    %c0_19 = arith.constant 0 : index
    %c0_20 = arith.constant 0 : index
    %35 = vector.load %arg2[%c5, %c0_19, %c0_20] : memref<9x16x128xbf16, #tpu.memory_space<vmem>>, vector<1x16x128xbf16>
    %36 = vector.shape_cast %35 : vector<1x16x128xbf16> to vector<16x128xbf16>
    %cst_21 = arith.constant dense<0.000000e+00> : vector<256x128xf32>
    %37 = tpu.matmul %34, %36, %cst_21 {dimension_numbers = #tpu.dot_dimension_numbers<[1], [0], [0], [1], [0, 0, 1, 1], [], []>} : vector<256x16xbf16>, vector<16x128xbf16>, vector<256x128xf32> -> vector<256x128xf32>
    %38 = arith.addf %32, %37 : vector<256x128xf32>
    %39 = vector.extract_strided_slice %1 {offsets = [2, 0, 0], sizes = [16, 16, 16], strides = [1, 1, 1]} : vector<18x18x16xbf16> to vector<16x16x16xbf16>
    %40 = vector.shape_cast %39 : vector<16x16x16xbf16> to vector<256x16xbf16>
    %c6 = arith.constant 6 : index
    %c0_22 = arith.constant 0 : index
    %c0_23 = arith.constant 0 : index
    %41 = vector.load %arg2[%c6, %c0_22, %c0_23] : memref<9x16x128xbf16, #tpu.memory_space<vmem>>, vector<1x16x128xbf16>
    %42 = vector.shape_cast %41 : vector<1x16x128xbf16> to vector<16x128xbf16>
    %cst_24 = arith.constant dense<0.000000e+00> : vector<256x128xf32>
    %43 = tpu.matmul %40, %42, %cst_24 {dimension_numbers = #tpu.dot_dimension_numbers<[1], [0], [0], [1], [0, 0, 1, 1], [], []>} : vector<256x16xbf16>, vector<16x128xbf16>, vector<256x128xf32> -> vector<256x128xf32>
    %44 = arith.addf %38, %43 : vector<256x128xf32>
    %45 = vector.extract_strided_slice %1 {offsets = [2, 1, 0], sizes = [16, 16, 16], strides = [1, 1, 1]} : vector<18x18x16xbf16> to vector<16x16x16xbf16>
    %46 = vector.shape_cast %45 : vector<16x16x16xbf16> to vector<256x16xbf16>
    %c7 = arith.constant 7 : index
    %c0_25 = arith.constant 0 : index
    %c0_26 = arith.constant 0 : index
    %47 = vector.load %arg2[%c7, %c0_25, %c0_26] : memref<9x16x128xbf16, #tpu.memory_space<vmem>>, vector<1x16x128xbf16>
    %48 = vector.shape_cast %47 : vector<1x16x128xbf16> to vector<16x128xbf16>
    %cst_27 = arith.constant dense<0.000000e+00> : vector<256x128xf32>
    %49 = tpu.matmul %46, %48, %cst_27 {dimension_numbers = #tpu.dot_dimension_numbers<[1], [0], [0], [1], [0, 0, 1, 1], [], []>} : vector<256x16xbf16>, vector<16x128xbf16>, vector<256x128xf32> -> vector<256x128xf32>
    %50 = arith.addf %44, %49 : vector<256x128xf32>
    %51 = vector.extract_strided_slice %1 {offsets = [2, 2, 0], sizes = [16, 16, 16], strides = [1, 1, 1]} : vector<18x18x16xbf16> to vector<16x16x16xbf16>
    %52 = vector.shape_cast %51 : vector<16x16x16xbf16> to vector<256x16xbf16>
    %c8 = arith.constant 8 : index
    %c0_28 = arith.constant 0 : index
    %c0_29 = arith.constant 0 : index
    %53 = vector.load %arg2[%c8, %c0_28, %c0_29] : memref<9x16x128xbf16, #tpu.memory_space<vmem>>, vector<1x16x128xbf16>
    %54 = vector.shape_cast %53 : vector<1x16x128xbf16> to vector<16x128xbf16>
    %cst_30 = arith.constant dense<0.000000e+00> : vector<256x128xf32>
    %55 = tpu.matmul %52, %54, %cst_30 {dimension_numbers = #tpu.dot_dimension_numbers<[1], [0], [0], [1], [0, 0, 1, 1], [], []>} : vector<256x16xbf16>, vector<16x128xbf16>, vector<256x128xf32> -> vector<256x128xf32>
    %56 = arith.addf %50, %55 : vector<256x128xf32>
    %cst_31 = arith.constant dense<0.000000e+00> : vector<128xf32>
    %57 = vector.multi_reduction <add>, %56, %cst_31 [0] : vector<256x128xf32> to vector<128xf32>
    %58 = vector.shape_cast %57 : vector<128xf32> to vector<1x128xf32>
    %59 = arith.mulf %56, %56 : vector<256x128xf32>
    %cst_32 = arith.constant dense<0.000000e+00> : vector<128xf32>
    %60 = vector.multi_reduction <add>, %59, %cst_32 [0] : vector<256x128xf32> to vector<128xf32>
    %61 = vector.shape_cast %60 : vector<128xf32> to vector<1x128xf32>
    %62 = tpu.concatenate %58, %61 in 0 : vector<1x128xf32>, vector<1x128xf32> -> vector<2x128xf32>
    %63 = vector.shape_cast %62 : vector<2x128xf32> to vector<1x2x128xf32>
    %c0_33 = arith.constant 0 : index
    %c0_34 = arith.constant 0 : index
    %c0_35 = arith.constant 0 : index
    %64 = vector.load %arg4[%c0_33, %c0_34, %c0_35] : memref<1x2x128xf32, #tpu.memory_space<vmem>>, vector<1x2x128xf32>
    tpu.vector_store %arg4[%c0_33, %c0_34, %c0_35], %63 {strides = array<i32>} : memref<1x2x128xf32, #tpu.memory_space<vmem>>, vector<1x2x128xf32>,
    %65 = vector.shape_cast %56 : vector<256x128xf32> to vector<1x16x16x128xf32>
    %66 = arith.truncf %65 : vector<1x16x16x128xf32> to vector<1x16x16x128xbf16>
    %c0_36 = arith.constant 0 : index
    %c0_37 = arith.constant 0 : index
    %c0_38 = arith.constant 0 : index
    %c0_39 = arith.constant 0 : index
    %67 = vector.load %arg3[%c0_36, %c0_37, %c0_38, %c0_39] : memref<1x16x16x128xbf16, #tpu.memory_space<vmem>>, vector<1x16x16x128xbf16>
    tpu.vector_store %arg3[%c0_36, %c0_37, %c0_38, %c0_39], %66 {strides = array<i32>} : memref<1x16x16x128xbf16, #tpu.memory_space<vmem>>, vector<1x16x16x128xbf16>,
    return
  }
  func.func @transform_0(%arg0: i32) -> (i32, i32, i32, i32) {
    %c0_i32 = arith.constant 0 : i32
    %c0_i32_0 = arith.constant 0 : i32
    %c0_i32_1 = arith.constant 0 : i32
    %c0_i32_2 = arith.constant 0 : i32
    return %arg0, %c0_i32, %c0_i32_0, %c0_i32_1 : i32, i32, i32, i32
  }
  func.func @transform_1(%arg0: i32) -> (i32, i32, i32) {
    %c0_i32 = arith.constant 0 : i32
    %c0_i32_0 = arith.constant 0 : i32
    %c0_i32_1 = arith.constant 0 : i32
    %c0_i32_2 = arith.constant 0 : i32
    return %c0_i32, %c0_i32_0, %c0_i32_1 : i32, i32, i32
  }
  func.func @transform_2(%arg0: i32) -> (i32, i32, i32, i32) {
    %c0_i32 = arith.constant 0 : i32
    %c0_i32_0 = arith.constant 0 : i32
    %c0_i32_1 = arith.constant 0 : i32
    %c0_i32_2 = arith.constant 0 : i32
    return %arg0, %c0_i32, %c0_i32_0, %c0_i32_1 : i32, i32, i32, i32
  }
  func.func @transform_3(%arg0: i32) -> (i32, i32, i32) {
    %c0_i32 = arith.constant 0 : i32
    %c0_i32_0 = arith.constant 0 : i32
    %c0_i32_1 = arith.constant 0 : i32
    return %arg0, %c0_i32, %c0_i32_0 : i32, i32, i32
  }
}

module attributes {stable_mosaic.version = 11 : i64} {
  func.func @_bn_relu_kernel(%arg0: i32, %arg1: memref<1x256x128xf32, #tpu.memory_space<vmem>>, %arg2: memref<1x128xf32, #tpu.memory_space<vmem>>, %arg3: memref<1x128xf32, #tpu.memory_space<vmem>>, %arg4: memref<1x256x128xf32, #tpu.memory_space<vmem>>) attributes {dimension_semantics = [#tpu.dimension_semantics<parallel>], iteration_bounds = array<i64: 2>, scalar_prefetch = 0 : i64, scratch_operands = 0 : i64, tpu.core_type = #tpu.core_type<tc>, window_params = [{transform_indices = @transform_0, window_bounds = array<i64: 1, 256, 128>}, {pipeline_mode = #tpu.pipeline_mode<synchronous>, transform_indices = @transform_1, window_bounds = array<i64: 1, 128>}, {pipeline_mode = #tpu.pipeline_mode<synchronous>, transform_indices = @transform_2, window_bounds = array<i64: 1, 128>}, {transform_indices = @transform_3, window_bounds = array<i64: 1, 256, 128>}]} {
    %c0 = arith.constant 0 : index
    %c0_0 = arith.constant 0 : index
    %c0_1 = arith.constant 0 : index
    %0 = vector.load %arg1[%c0, %c0_0, %c0_1] : memref<1x256x128xf32, #tpu.memory_space<vmem>>, vector<1x256x128xf32>
    %c0_2 = arith.constant 0 : index
    %c0_3 = arith.constant 0 : index
    %1 = vector.load %arg2[%c0_2, %c0_3] : memref<1x128xf32, #tpu.memory_space<vmem>>, vector<1x128xf32>
    %2 = vector.shape_cast %1 : vector<1x128xf32> to vector<1x1x128xf32>
    %3 = vector.broadcast %2 : vector<1x1x128xf32> to vector<1x256x128xf32>
    %4 = arith.mulf %0, %3 : vector<1x256x128xf32>
    %c0_4 = arith.constant 0 : index
    %c0_5 = arith.constant 0 : index
    %5 = vector.load %arg3[%c0_4, %c0_5] : memref<1x128xf32, #tpu.memory_space<vmem>>, vector<1x128xf32>
    %6 = vector.shape_cast %5 : vector<1x128xf32> to vector<1x1x128xf32>
    %7 = vector.broadcast %6 : vector<1x1x128xf32> to vector<1x256x128xf32>
    %8 = arith.addf %4, %7 : vector<1x256x128xf32>
    %cst = arith.constant 0.000000e+00 : f32
    %9 = vector.broadcast %cst : f32 to vector<1x256x128xf32>
    %10 = arith.maximumf %8, %9 : vector<1x256x128xf32>
    %c0_6 = arith.constant 0 : index
    %c0_7 = arith.constant 0 : index
    %c0_8 = arith.constant 0 : index
    %11 = vector.load %arg4[%c0_6, %c0_7, %c0_8] : memref<1x256x128xf32, #tpu.memory_space<vmem>>, vector<1x256x128xf32>
    tpu.vector_store %arg4[%c0_6, %c0_7, %c0_8], %10 {strides = array<i32>} : memref<1x256x128xf32, #tpu.memory_space<vmem>>, vector<1x256x128xf32>,
    return
  }
  func.func @transform_0(%arg0: i32) -> (i32, i32, i32) {
    %c0_i32 = arith.constant 0 : i32
    %c0_i32_0 = arith.constant 0 : i32
    %c0_i32_1 = arith.constant 0 : i32
    return %arg0, %c0_i32, %c0_i32_0 : i32, i32, i32
  }
  func.func @transform_1(%arg0: i32) -> (i32, i32) {
    %c0_i32 = arith.constant 0 : i32
    %c0_i32_0 = arith.constant 0 : i32
    %c0_i32_1 = arith.constant 0 : i32
    return %c0_i32, %c0_i32_0 : i32, i32
  }
  func.func @transform_2(%arg0: i32) -> (i32, i32) {
    %c0_i32 = arith.constant 0 : i32
    %c0_i32_0 = arith.constant 0 : i32
    %c0_i32_1 = arith.constant 0 : i32
    return %c0_i32, %c0_i32_0 : i32, i32
  }
  func.func @transform_3(%arg0: i32) -> (i32, i32, i32) {
    %c0_i32 = arith.constant 0 : i32
    %c0_i32_0 = arith.constant 0 : i32
    %c0_i32_1 = arith.constant 0 : i32
    return %arg0, %c0_i32, %c0_i32_0 : i32, i32, i32
  }
}

module attributes {stable_mosaic.version = 11 : i64} {
  func.func @kernel(%arg0: i32, %arg1: memref<1x18x18x128xbf16, #tpu.memory_space<vmem>>, %arg2: memref<9x128x128xbf16, #tpu.memory_space<vmem>>, %arg3: memref<1x128xf32, #tpu.memory_space<vmem>>, %arg4: memref<1x128xf32, #tpu.memory_space<vmem>>, %arg5: memref<1x16x16x128xf32, #tpu.memory_space<vmem>>, %arg6: memref<1x2x128xf32, #tpu.memory_space<vmem>>) attributes {dimension_semantics = [#tpu.dimension_semantics<parallel>], iteration_bounds = array<i64: 2>, scalar_prefetch = 0 : i64, scratch_operands = 0 : i64, tpu.core_type = #tpu.core_type<tc>, window_params = [{transform_indices = @transform_0, window_bounds = array<i64: 1, 18, 18, 128>}, {pipeline_mode = #tpu.pipeline_mode<synchronous>, transform_indices = @transform_1, window_bounds = array<i64: 9, 128, 128>}, {pipeline_mode = #tpu.pipeline_mode<synchronous>, transform_indices = @transform_2, window_bounds = array<i64: 1, 128>}, {pipeline_mode = #tpu.pipeline_mode<synchronous>, transform_indices = @transform_3, window_bounds = array<i64: 1, 128>}, {transform_indices = @transform_4, window_bounds = array<i64: 1, 16, 16, 128>}, {transform_indices = @transform_5, window_bounds = array<i64: 1, 2, 128>}]} {
    %c0 = arith.constant 0 : index
    %c0_0 = arith.constant 0 : index
    %c0_1 = arith.constant 0 : index
    %c0_2 = arith.constant 0 : index
    %0 = vector.load %arg1[%c0, %c0_0, %c0_1, %c0_2] : memref<1x18x18x128xbf16, #tpu.memory_space<vmem>>, vector<1x18x18x128xbf16>
    %1 = vector.shape_cast %0 : vector<1x18x18x128xbf16> to vector<18x18x128xbf16>
    %2 = arith.extf %1 : vector<18x18x128xbf16> to vector<18x18x128xf32>
    %c0_3 = arith.constant 0 : index
    %c0_4 = arith.constant 0 : index
    %3 = vector.load %arg3[%c0_3, %c0_4] : memref<1x128xf32, #tpu.memory_space<vmem>>, vector<1x128xf32>
    %4 = vector.shape_cast %3 : vector<1x128xf32> to vector<1x1x128xf32>
    %5 = vector.broadcast %4 : vector<1x1x128xf32> to vector<18x18x128xf32>
    %6 = arith.mulf %2, %5 : vector<18x18x128xf32>
    %c0_5 = arith.constant 0 : index
    %c0_6 = arith.constant 0 : index
    %7 = vector.load %arg4[%c0_5, %c0_6] : memref<1x128xf32, #tpu.memory_space<vmem>>, vector<1x128xf32>
    %8 = vector.shape_cast %7 : vector<1x128xf32> to vector<1x1x128xf32>
    %9 = vector.broadcast %8 : vector<1x1x128xf32> to vector<18x18x128xf32>
    %10 = arith.addf %6, %9 : vector<18x18x128xf32>
    %cst = arith.constant 0.000000e+00 : f32
    %11 = vector.broadcast %cst : f32 to vector<18x18x128xf32>
    %12 = arith.maximumf %10, %11 : vector<18x18x128xf32>
    %13 = tpu.iota {dimensions = array<i32: 0>} : vector<18x18x1xi32>
    %14 = tpu.iota {dimensions = array<i32: 1>} : vector<18x18x1xi32>
    %c1_i32 = arith.constant 1 : i32
    %15 = vector.broadcast %c1_i32 : i32 to vector<18x18x1xi32>
    %16 = arith.cmpi sge, %13, %15 : vector<18x18x1xi32>
    %c16_i32 = arith.constant 16 : i32
    %17 = vector.broadcast %c16_i32 : i32 to vector<18x18x1xi32>
    %18 = arith.cmpi sle, %13, %17 : vector<18x18x1xi32>
    %19 = arith.andi %16, %18 : vector<18x18x1xi1>
    %c1_i32_7 = arith.constant 1 : i32
    %20 = vector.broadcast %c1_i32_7 : i32 to vector<18x18x1xi32>
    %21 = arith.cmpi sge, %14, %20 : vector<18x18x1xi32>
    %22 = arith.andi %19, %21 : vector<18x18x1xi1>
    %c16_i32_8 = arith.constant 16 : i32
    %23 = vector.broadcast %c16_i32_8 : i32 to vector<18x18x1xi32>
    %24 = arith.cmpi sle, %14, %23 : vector<18x18x1xi32>
    %25 = arith.andi %22, %24 : vector<18x18x1xi1>
    %cst_9 = arith.constant 0.000000e+00 : f32
    %26 = vector.shape_cast %25 : vector<18x18x1xi1> to vector<18x18x1xi1>
    %27 = vector.broadcast %26 : vector<18x18x1xi1> to vector<18x18x128xi1>
    %28 = vector.broadcast %cst_9 : f32 to vector<18x18x128xf32>
    %29 = arith.select %27, %12, %28 : vector<18x18x128xi1>, vector<18x18x128xf32>
    %30 = arith.truncf %29 : vector<18x18x128xf32> to vector<18x18x128xbf16>
    %cst_10 = arith.constant 0.000000e+00 : f32
    %31 = vector.broadcast %cst_10 : f32 to vector<256x128xf32>
    %32 = vector.extract_strided_slice %30 {offsets = [0, 0, 0], sizes = [16, 16, 128], strides = [1, 1, 1]} : vector<18x18x128xbf16> to vector<16x16x128xbf16>
    %33 = vector.shape_cast %32 : vector<16x16x128xbf16> to vector<256x128xbf16>
    %c0_11 = arith.constant 0 : index
    %c0_12 = arith.constant 0 : index
    %c0_13 = arith.constant 0 : index
    %34 = vector.load %arg2[%c0_11, %c0_12, %c0_13] : memref<9x128x128xbf16, #tpu.memory_space<vmem>>, vector<1x128x128xbf16>
    %35 = vector.shape_cast %34 : vector<1x128x128xbf16> to vector<128x128xbf16>
    %cst_14 = arith.constant dense<0.000000e+00> : vector<256x128xf32>
    %36 = tpu.matmul %33, %35, %cst_14 {dimension_numbers = #tpu.dot_dimension_numbers<[1], [0], [0], [1], [0, 0, 1, 1], [], []>} : vector<256x128xbf16>, vector<128x128xbf16>, vector<256x128xf32> -> vector<256x128xf32>
    %37 = arith.addf %31, %36 : vector<256x128xf32>
    %38 = vector.extract_strided_slice %30 {offsets = [0, 1, 0], sizes = [16, 16, 128], strides = [1, 1, 1]} : vector<18x18x128xbf16> to vector<16x16x128xbf16>
    %39 = vector.shape_cast %38 : vector<16x16x128xbf16> to vector<256x128xbf16>
    %c1 = arith.constant 1 : index
    %c0_15 = arith.constant 0 : index
    %c0_16 = arith.constant 0 : index
    %40 = vector.load %arg2[%c1, %c0_15, %c0_16] : memref<9x128x128xbf16, #tpu.memory_space<vmem>>, vector<1x128x128xbf16>
    %41 = vector.shape_cast %40 : vector<1x128x128xbf16> to vector<128x128xbf16>
    %cst_17 = arith.constant dense<0.000000e+00> : vector<256x128xf32>
    %42 = tpu.matmul %39, %41, %cst_17 {dimension_numbers = #tpu.dot_dimension_numbers<[1], [0], [0], [1], [0, 0, 1, 1], [], []>} : vector<256x128xbf16>, vector<128x128xbf16>, vector<256x128xf32> -> vector<256x128xf32>
    %43 = arith.addf %37, %42 : vector<256x128xf32>
    %44 = vector.extract_strided_slice %30 {offsets = [0, 2, 0], sizes = [16, 16, 128], strides = [1, 1, 1]} : vector<18x18x128xbf16> to vector<16x16x128xbf16>
    %45 = vector.shape_cast %44 : vector<16x16x128xbf16> to vector<256x128xbf16>
    %c2 = arith.constant 2 : index
    %c0_18 = arith.constant 0 : index
    %c0_19 = arith.constant 0 : index
    %46 = vector.load %arg2[%c2, %c0_18, %c0_19] : memref<9x128x128xbf16, #tpu.memory_space<vmem>>, vector<1x128x128xbf16>
    %47 = vector.shape_cast %46 : vector<1x128x128xbf16> to vector<128x128xbf16>
    %cst_20 = arith.constant dense<0.000000e+00> : vector<256x128xf32>
    %48 = tpu.matmul %45, %47, %cst_20 {dimension_numbers = #tpu.dot_dimension_numbers<[1], [0], [0], [1], [0, 0, 1, 1], [], []>} : vector<256x128xbf16>, vector<128x128xbf16>, vector<256x128xf32> -> vector<256x128xf32>
    %49 = arith.addf %43, %48 : vector<256x128xf32>
    %50 = vector.extract_strided_slice %30 {offsets = [1, 0, 0], sizes = [16, 16, 128], strides = [1, 1, 1]} : vector<18x18x128xbf16> to vector<16x16x128xbf16>
    %51 = vector.shape_cast %50 : vector<16x16x128xbf16> to vector<256x128xbf16>
    %c3 = arith.constant 3 : index
    %c0_21 = arith.constant 0 : index
    %c0_22 = arith.constant 0 : index
    %52 = vector.load %arg2[%c3, %c0_21, %c0_22] : memref<9x128x128xbf16, #tpu.memory_space<vmem>>, vector<1x128x128xbf16>
    %53 = vector.shape_cast %52 : vector<1x128x128xbf16> to vector<128x128xbf16>
    %cst_23 = arith.constant dense<0.000000e+00> : vector<256x128xf32>
    %54 = tpu.matmul %51, %53, %cst_23 {dimension_numbers = #tpu.dot_dimension_numbers<[1], [0], [0], [1], [0, 0, 1, 1], [], []>} : vector<256x128xbf16>, vector<128x128xbf16>, vector<256x128xf32> -> vector<256x128xf32>
    %55 = arith.addf %49, %54 : vector<256x128xf32>
    %56 = vector.extract_strided_slice %30 {offsets = [1, 1, 0], sizes = [16, 16, 128], strides = [1, 1, 1]} : vector<18x18x128xbf16> to vector<16x16x128xbf16>
    %57 = vector.shape_cast %56 : vector<16x16x128xbf16> to vector<256x128xbf16>
    %c4 = arith.constant 4 : index
    %c0_24 = arith.constant 0 : index
    %c0_25 = arith.constant 0 : index
    %58 = vector.load %arg2[%c4, %c0_24, %c0_25] : memref<9x128x128xbf16, #tpu.memory_space<vmem>>, vector<1x128x128xbf16>
    %59 = vector.shape_cast %58 : vector<1x128x128xbf16> to vector<128x128xbf16>
    %cst_26 = arith.constant dense<0.000000e+00> : vector<256x128xf32>
    %60 = tpu.matmul %57, %59, %cst_26 {dimension_numbers = #tpu.dot_dimension_numbers<[1], [0], [0], [1], [0, 0, 1, 1], [], []>} : vector<256x128xbf16>, vector<128x128xbf16>, vector<256x128xf32> -> vector<256x128xf32>
    %61 = arith.addf %55, %60 : vector<256x128xf32>
    %62 = vector.extract_strided_slice %30 {offsets = [1, 2, 0], sizes = [16, 16, 128], strides = [1, 1, 1]} : vector<18x18x128xbf16> to vector<16x16x128xbf16>
    %63 = vector.shape_cast %62 : vector<16x16x128xbf16> to vector<256x128xbf16>
    %c5 = arith.constant 5 : index
    %c0_27 = arith.constant 0 : index
    %c0_28 = arith.constant 0 : index
    %64 = vector.load %arg2[%c5, %c0_27, %c0_28] : memref<9x128x128xbf16, #tpu.memory_space<vmem>>, vector<1x128x128xbf16>
    %65 = vector.shape_cast %64 : vector<1x128x128xbf16> to vector<128x128xbf16>
    %cst_29 = arith.constant dense<0.000000e+00> : vector<256x128xf32>
    %66 = tpu.matmul %63, %65, %cst_29 {dimension_numbers = #tpu.dot_dimension_numbers<[1], [0], [0], [1], [0, 0, 1, 1], [], []>} : vector<256x128xbf16>, vector<128x128xbf16>, vector<256x128xf32> -> vector<256x128xf32>
    %67 = arith.addf %61, %66 : vector<256x128xf32>
    %68 = vector.extract_strided_slice %30 {offsets = [2, 0, 0], sizes = [16, 16, 128], strides = [1, 1, 1]} : vector<18x18x128xbf16> to vector<16x16x128xbf16>
    %69 = vector.shape_cast %68 : vector<16x16x128xbf16> to vector<256x128xbf16>
    %c6 = arith.constant 6 : index
    %c0_30 = arith.constant 0 : index
    %c0_31 = arith.constant 0 : index
    %70 = vector.load %arg2[%c6, %c0_30, %c0_31] : memref<9x128x128xbf16, #tpu.memory_space<vmem>>, vector<1x128x128xbf16>
    %71 = vector.shape_cast %70 : vector<1x128x128xbf16> to vector<128x128xbf16>
    %cst_32 = arith.constant dense<0.000000e+00> : vector<256x128xf32>
    %72 = tpu.matmul %69, %71, %cst_32 {dimension_numbers = #tpu.dot_dimension_numbers<[1], [0], [0], [1], [0, 0, 1, 1], [], []>} : vector<256x128xbf16>, vector<128x128xbf16>, vector<256x128xf32> -> vector<256x128xf32>
    %73 = arith.addf %67, %72 : vector<256x128xf32>
    %74 = vector.extract_strided_slice %30 {offsets = [2, 1, 0], sizes = [16, 16, 128], strides = [1, 1, 1]} : vector<18x18x128xbf16> to vector<16x16x128xbf16>
    %75 = vector.shape_cast %74 : vector<16x16x128xbf16> to vector<256x128xbf16>
    %c7 = arith.constant 7 : index
    %c0_33 = arith.constant 0 : index
    %c0_34 = arith.constant 0 : index
    %76 = vector.load %arg2[%c7, %c0_33, %c0_34] : memref<9x128x128xbf16, #tpu.memory_space<vmem>>, vector<1x128x128xbf16>
    %77 = vector.shape_cast %76 : vector<1x128x128xbf16> to vector<128x128xbf16>
    %cst_35 = arith.constant dense<0.000000e+00> : vector<256x128xf32>
    %78 = tpu.matmul %75, %77, %cst_35 {dimension_numbers = #tpu.dot_dimension_numbers<[1], [0], [0], [1], [0, 0, 1, 1], [], []>} : vector<256x128xbf16>, vector<128x128xbf16>, vector<256x128xf32> -> vector<256x128xf32>
    %79 = arith.addf %73, %78 : vector<256x128xf32>
    %80 = vector.extract_strided_slice %30 {offsets = [2, 2, 0], sizes = [16, 16, 128], strides = [1, 1, 1]} : vector<18x18x128xbf16> to vector<16x16x128xbf16>
    %81 = vector.shape_cast %80 : vector<16x16x128xbf16> to vector<256x128xbf16>
    %c8 = arith.constant 8 : index
    %c0_36 = arith.constant 0 : index
    %c0_37 = arith.constant 0 : index
    %82 = vector.load %arg2[%c8, %c0_36, %c0_37] : memref<9x128x128xbf16, #tpu.memory_space<vmem>>, vector<1x128x128xbf16>
    %83 = vector.shape_cast %82 : vector<1x128x128xbf16> to vector<128x128xbf16>
    %cst_38 = arith.constant dense<0.000000e+00> : vector<256x128xf32>
    %84 = tpu.matmul %81, %83, %cst_38 {dimension_numbers = #tpu.dot_dimension_numbers<[1], [0], [0], [1], [0, 0, 1, 1], [], []>} : vector<256x128xbf16>, vector<128x128xbf16>, vector<256x128xf32> -> vector<256x128xf32>
    %85 = arith.addf %79, %84 : vector<256x128xf32>
    %cst_39 = arith.constant dense<0.000000e+00> : vector<128xf32>
    %86 = vector.multi_reduction <add>, %85, %cst_39 [0] : vector<256x128xf32> to vector<128xf32>
    %87 = vector.shape_cast %86 : vector<128xf32> to vector<1x128xf32>
    %88 = arith.mulf %85, %85 : vector<256x128xf32>
    %cst_40 = arith.constant dense<0.000000e+00> : vector<128xf32>
    %89 = vector.multi_reduction <add>, %88, %cst_40 [0] : vector<256x128xf32> to vector<128xf32>
    %90 = vector.shape_cast %89 : vector<128xf32> to vector<1x128xf32>
    %91 = tpu.concatenate %87, %90 in 0 : vector<1x128xf32>, vector<1x128xf32> -> vector<2x128xf32>
    %92 = vector.shape_cast %91 : vector<2x128xf32> to vector<1x2x128xf32>
    %c0_41 = arith.constant 0 : index
    %c0_42 = arith.constant 0 : index
    %c0_43 = arith.constant 0 : index
    %93 = vector.load %arg6[%c0_41, %c0_42, %c0_43] : memref<1x2x128xf32, #tpu.memory_space<vmem>>, vector<1x2x128xf32>
    tpu.vector_store %arg6[%c0_41, %c0_42, %c0_43], %92 {strides = array<i32>} : memref<1x2x128xf32, #tpu.memory_space<vmem>>, vector<1x2x128xf32>,
    %94 = vector.shape_cast %85 : vector<256x128xf32> to vector<1x16x16x128xf32>
    %c0_44 = arith.constant 0 : index
    %c0_45 = arith.constant 0 : index
    %c0_46 = arith.constant 0 : index
    %c0_47 = arith.constant 0 : index
    %95 = vector.load %arg5[%c0_44, %c0_45, %c0_46, %c0_47] : memref<1x16x16x128xf32, #tpu.memory_space<vmem>>, vector<1x16x16x128xf32>
    tpu.vector_store %arg5[%c0_44, %c0_45, %c0_46, %c0_47], %94 {strides = array<i32>} : memref<1x16x16x128xf32, #tpu.memory_space<vmem>>, vector<1x16x16x128xf32>,
    return
  }
  func.func @transform_0(%arg0: i32) -> (i32, i32, i32, i32) {
    %c0_i32 = arith.constant 0 : i32
    %c0_i32_0 = arith.constant 0 : i32
    %c0_i32_1 = arith.constant 0 : i32
    %c0_i32_2 = arith.constant 0 : i32
    return %arg0, %c0_i32, %c0_i32_0, %c0_i32_1 : i32, i32, i32, i32
  }
  func.func @transform_1(%arg0: i32) -> (i32, i32, i32) {
    %c0_i32 = arith.constant 0 : i32
    %c0_i32_0 = arith.constant 0 : i32
    %c0_i32_1 = arith.constant 0 : i32
    %c0_i32_2 = arith.constant 0 : i32
    return %c0_i32, %c0_i32_0, %c0_i32_1 : i32, i32, i32
  }
  func.func @transform_2(%arg0: i32) -> (i32, i32) {
    %c0_i32 = arith.constant 0 : i32
    %c0_i32_0 = arith.constant 0 : i32
    %c0_i32_1 = arith.constant 0 : i32
    return %c0_i32, %c0_i32_0 : i32, i32
  }
  func.func @transform_3(%arg0: i32) -> (i32, i32) {
    %c0_i32 = arith.constant 0 : i32
    %c0_i32_0 = arith.constant 0 : i32
    %c0_i32_1 = arith.constant 0 : i32
    return %c0_i32, %c0_i32_0 : i32, i32
  }
  func.func @transform_4(%arg0: i32) -> (i32, i32, i32, i32) {
    %c0_i32 = arith.constant 0 : i32
    %c0_i32_0 = arith.constant 0 : i32
    %c0_i32_1 = arith.constant 0 : i32
    %c0_i32_2 = arith.constant 0 : i32
    return %arg0, %c0_i32, %c0_i32_0, %c0_i32_1 : i32, i32, i32, i32
  }
  func.func @transform_5(%arg0: i32) -> (i32, i32, i32) {
    %c0_i32 = arith.constant 0 : i32
    %c0_i32_0 = arith.constant 0 : i32
    %c0_i32_1 = arith.constant 0 : i32
    return %arg0, %c0_i32, %c0_i32_0 : i32, i32, i32
  }
}

</mosaic_0001>

<llo_original>
// kernel: plain_block_forward.5
$region0: #{plain_block_forward.5}
  #allocation0 [shape = 'u32[]', space=smem, size = 0x4, offset = 0x4, fixed_abs, tag = 'smem constant byte address 0x4 - core index']
  #allocation1 [shape = 'u32[72,128]{1,0:T(1,128)}', space=vmem, size = 0x9000, scoped, tag = 'internal scratch']
  %s0 = inlined_call_operand.vmem [shape: f32[2,256,128], index: 0, kind: input, shape index: {}]
  %s1 = inlined_call_operand.vmem [shape: f32[1,128], index: 1, kind: input, shape index: {}]
  %s2 = inlined_call_operand.vmem [shape: f32[1,128], index: 2, kind: input, shape index: {}]
  %s3 = inlined_call_operand.vmem [shape: f32[2,256,128], index: 3, kind: output, shape index: {}]
  %s4 = sld [smem:[#allocation0]]
  $region45: #{plain_block_forward.5} parent=0
    _
  %s6 = ssub.s32 1, %s4
  %s7 = scalar_select 0, %s6, %s4
  loop: start=0, step=1, limit=4
  $region2: #{plain_block_forward.5} parent=0 // loop_pre_header
    _
  $region3: #{plain_block_forward.5} parent=0 // loop_header
    %s9 = sphi 0, %s13
    %p10 = scmp.ge.s32.totalorder %s9, 4
    %s19 = sphi 0, %s21
    %s22 = sphi 0, %s19
    %s23 = sphi 0, %s22
    %s39 = sphi 0, %s23
    %s43 = sphi 0, %s43
    %s45 = sphi 0, %s43
    %s46 = sphi 0, %s45
    %s60 = sphi 0, %s46
    %s64 = sphi 0, %s64
    %s66 = sphi 0, %s64
    %s67 = sphi 0, %s66
    %s81 = sphi 0, %s67
    %s87 = sphi 0, %s89
    %s90 = sphi 0, %s87
    %s91 = sphi 0, %s90
    %s107 = sphi 0, %s91
  $region4: #{plain_block_forward.5} parent=0 // loop_header_branch
    %12 = sbr.rel (%p10) target = $region8
  $region5: #{plain_block_forward.5} parent=0 // loop_body
    %s14 = ssub.s32 %s9, 1
    %s15 = ssub.s32 %s9, 2
    %s16 = sadd.s32 %s9, 1
    %s17 = ssub.s32 %s9, %s16
    %p18 = scmp.eq.s32.totalorder %s17, 0
    %s20 = sadd.s32 %s19, 1
    %s21 = scalar_select %p18, %s19, %s20
    %p24 = pneg %p18
    %p25 = scmp.eq.s32.totalorder %s9, 1
    %p26 = por %p24, %p25
    %p27 = scmp.ne.s32.totalorder %s19, %s22
    %p28 = scmp.eq.s32.totalorder %s9, 0
    %p29 = por %p27, %p28
    %p30 = scmp.ne.s32.totalorder %s19, %s22
    %p31 = scmp.eq.s32.totalorder %s14, 1
    %p32 = por %p30, %p31
    %p33 = scmp.ne.s32.totalorder %s22, %s23
    %p34 = scmp.eq.s32.totalorder %s14, 0
    %p35 = por %p33, %p34
    %p36 = scmp.ne.s32.totalorder %s22, %s23
    %p37 = scmp.eq.s32.totalorder %s15, 1
    %p38 = por %p36, %p37
    %p40 = scmp.ne.s32.totalorder %s23, %s39
    %p41 = scmp.eq.s32.totalorder %s15, 0
    %p42 = por %p40, %p41
    %s44 = sadd.s32 %s43, 1
    %p47 = scmp.eq.s32.totalorder %s9, 1
    %p48 = scmp.ne.s32.totalorder %s43, %s45
    %p49 = scmp.eq.s32.totalorder %s9, 0
    %p50 = por %p48, %p49
    %p51 = scmp.ne.s32.totalorder %s43, %s45
    %p52 = scmp.eq.s32.totalorder %s14, 1
    %p53 = por %p51, %p52
    %p54 = scmp.ne.s32.totalorder %s45, %s46
    %p55 = scmp.eq.s32.totalorder %s14, 0
    %p56 = por %p54, %p55
    %p57 = scmp.ne.s32.totalorder %s45, %s46
    %p58 = scmp.eq.s32.totalorder %s15, 1
    %p59 = por %p57, %p58
    %p61 = scmp.ne.s32.totalorder %s46, %s60
    %p62 = scmp.eq.s32.totalorder %s15, 0
    %p63 = por %p61, %p62
    %s65 = sadd.s32 %s64, 1
    %p68 = scmp.eq.s32.totalorder %s9, 1
    %p69 = scmp.ne.s32.totalorder %s64, %s66
    %p70 = scmp.eq.s32.totalorder %s9, 0
    %p71 = por %p69, %p70
    %p72 = scmp.ne.s32.totalorder %s64, %s66
    %p73 = scmp.eq.s32.totalorder %s14, 1
    %p74 = por %p72, %p73
    %p75 = scmp.ne.s32.totalorder %s66, %s67
    %p76 = scmp.eq.s32.totalorder %s14, 0
    %p77 = por %p75, %p76
    %p78 = scmp.ne.s32.totalorder %s66, %s67
    %p79 = scmp.eq.s32.totalorder %s15, 1
    %p80 = por %p78, %p79
    %p82 = scmp.ne.s32.totalorder %s67, %s81
    %p83 = scmp.eq.s32.totalorder %s15, 0
    %p84 = por %p82, %p83
    %s85 = ssub.s32 %s9, %s16
    %p86 = scmp.eq.s32.totalorder %s85, 0
    %s88 = sadd.s32 %s87, 1
    %s89 = scalar_select %p86, %s87, %s88
    %p92 = pneg %p86
    %p93 = scmp.eq.s32.totalorder %s9, 1
    %p94 = por %p92, %p93
    %p95 = scmp.ne.s32.totalorder %s87, %s90
    %p96 = scmp.eq.s32.totalorder %s9, 0
    %p97 = por %p95, %p96
    %p98 = scmp.ne.s32.totalorder %s87, %s90
    %p99 = scmp.eq.s32.totalorder %s14, 1
    %p100 = por %p98, %p99
    %p101 = scmp.ne.s32.totalorder %s90, %s91
    %p102 = scmp.eq.s32.totalorder %s14, 0
    %p103 = por %p101, %p102
    %p104 = scmp.ne.s32.totalorder %s90, %s91
    %p105 = scmp.eq.s32.totalorder %s15, 1
    %p106 = por %p104, %p105
    %p108 = scmp.ne.s32.totalorder %s91, %s107
    %p109 = scmp.eq.s32.totalorder %s15, 0
    %p110 = por %p108, %p109
    %p111 = scmp.le.s32.totalorder 1, %s9
    %p112 = scmp.lt.s32.totalorder %s9, 3
    %p113 = pnand %p111, %p112
    %p114 = pneg %p113
    // Predicated region
    $region9: #{plain_block_forward.5} parent=5 // pred_check
      _
    $region10: #{plain_block_forward.5} parent=5 // pred_check_branch
      %116 = sbr.rel (%p113) target = $region12
    $region11: #{plain_block_forward.5} parent=5 // pred_region
      %s117 = ssub.s32 %s9, 1
      // Predicated region
      $region13: #{plain_block_forward.5} parent=11 // pred_check
        %p118 = pneg %p56
      $region14: #{plain_block_forward.5} parent=11 // pred_check_branch
        %120 = sbr.rel (%p118) target = $region16
      $region15: #{plain_block_forward.5} parent=11 // pred_region
        _
      $region16: #{plain_block_forward.5} parent=11 // pred_fallthru
        _
      // Predicated region
      $region17: #{plain_block_forward.5} parent=11 // pred_check
        %p121 = pneg %p77
      $region18: #{plain_block_forward.5} parent=11 // pred_check_branch
        %123 = sbr.rel (%p121) target = $region20
      $region19: #{plain_block_forward.5} parent=11 // pred_region
        _
      $region20: #{plain_block_forward.5} parent=11 // pred_fallthru
        _
    $region12: #{plain_block_forward.5} parent=5 // pred_fallthru
      _
    %p124 = scmp.lt.s32.totalorder %s9, 2
    // Predicated region
    $region21: #{plain_block_forward.5} parent=5 // pred_check
      %p125 = pneg %p124
    $region22: #{plain_block_forward.5} parent=5 // pred_check_branch
      %127 = sbr.rel (%p125) target = $region24
    $region23: #{plain_block_forward.5} parent=5 // pred_region
      // Predicated region
      $region25: #{plain_block_forward.5} parent=23 // pred_check
        %p128 = pneg %p29
      $region26: #{plain_block_forward.5} parent=23 // pred_check_branch
        %130 = sbr.rel (%p128) target = $region28
      $region27: #{plain_block_forward.5} parent=23 // pred_region
        %p131 = scmp.lt.s32.totalorder %s9, 1
        %s132 = scalar_select %p131, %s9, 1
        %s133 = smul.addr %s132, 32
        %s134 = smul.addr %s133, 8
        %s135 = scalar_lea.vmem %s0, %s134
      $region28: #{plain_block_forward.5} parent=23 // pred_fallthru
        _
    $region24: #{plain_block_forward.5} parent=5 // pred_fallthru
      _
    %p136 = scmp.le.s32.totalorder 1, %s9
    %p137 = scmp.lt.s32.totalorder %s9, 3
    %p138 = pnand %p136, %p137
    %p139 = pneg %p138
    // Predicated region
    $region29: #{plain_block_forward.5} parent=5 // pred_check
      _
    $region30: #{plain_block_forward.5} parent=5 // pred_check_branch
      %141 = sbr.rel (%p138) target = $region32
    $region31: #{plain_block_forward.5} parent=5 // pred_region
      %s142 = ssub.s32 %s9, 1
      %p143 = scmp.lt.s32.totalorder %s14, 1
      %s144 = scalar_select %p143, %s14, 1
      %s145 = smul.addr %s144, 32
      %s146 = smul.addr %s145, 8
      %s147 = scalar_lea.vmem %s0, %s146
      %p148 = pneg %p35
      %p149 = pneg %p32
      %p150 = pneg %p56
      %p151 = pneg %p53
      %p152 = pneg %p77
      %p153 = pneg %p74
      %p154 = pneg %p103
      %p155 = pneg %p100
      %p156 = scmp.lt.s32.totalorder %s14, 1
      %s157 = scalar_select %p156, %s14, 1
      %s158 = smul.addr %s157, 32
      %s159 = smul.addr %s158, 8
      %s160 = scalar_lea.vmem %s3, %s159
      %p161 = scmp.lt.s32.totalorder %s14, 1
      %s162 = scalar_select %p161, %s14, 1
      %s163 = smul.addr %s162, 32
      %s164 = smul.addr %s163, 8
      %s165 = scalar_lea.vmem %s0, %s164
      %p166 = scmp.lt.s32.totalorder %s14, 1
      %s167 = scalar_select %p166, %s14, 1
      %s168 = smul.addr %s167, 32
      %s169 = smul.addr %s168, 8
      %s170 = scalar_lea.vmem %s3, %s169
      %v171 = vld [vmem:[%s165] sm:$0xff]
      %v172 = vld [vmem:[%s165 + $0x8] sm:$0xff]
      %v173 = vld [vmem:[%s165 + $0x10] sm:$0xff]
      %v174 = vld [vmem:[%s165 + $0x18] sm:$0xff]
      %v175 = vld [vmem:[%s165 + $0x20] sm:$0xff]
      %v176 = vld [vmem:[%s165 + $0x28] sm:$0xff]
      %v177 = vld [vmem:[%s165 + $0x30] sm:$0xff]
      %v178 = vld [vmem:[%s165 + $0x38] sm:$0xff]
      %v179 = vld [vmem:[%s165 + $0x40] sm:$0xff]
      %v180 = vld [vmem:[%s165 + $0x48] sm:$0xff]
      %v181 = vld [vmem:[%s165 + $0x50] sm:$0xff]
      %v182 = vld [vmem:[%s165 + $0x58] sm:$0xff]
      %v183 = vld [vmem:[%s165 + $0x60] sm:$0xff]
      %v184 = vld [vmem:[%s165 + $0x68] sm:$0xff]
      %v185 = vld [vmem:[%s165 + $0x70] sm:$0xff]
      %v186 = vld [vmem:[%s165 + $0x78] sm:$0xff]
      %v187 = vld [vmem:[%s165 + $0x80] sm:$0xff]
      %v188 = vld [vmem:[%s165 + $0x88] sm:$0xff]
      %v189 = vld [vmem:[%s165 + $0x90] sm:$0xff]
      %v190 = vld [vmem:[%s165 + $0x98] sm:$0xff]
      %v191 = vld [vmem:[%s165 + $0xa0] sm:$0xff]
      %v192 = vld [vmem:[%s165 + $0xa8] sm:$0xff]
      %v193 = vld [vmem:[%s165 + $0xb0] sm:$0xff]
      %v194 = vld [vmem:[%s165 + $0xb8] sm:$0xff]
      %v195 = vld [vmem:[%s165 + $0xc0] sm:$0xff]
      %v196 = vld [vmem:[%s165 + $0xc8] sm:$0xff]
      %v197 = vld [vmem:[%s165 + $0xd0] sm:$0xff]
      %v198 = vld [vmem:[%s165 + $0xd8] sm:$0xff]
      %v199 = vld [vmem:[%s165 + $0xe0] sm:$0xff]
      %v200 = vld [vmem:[%s165 + $0xe8] sm:$0xff]
      %v201 = vld [vmem:[%s165 + $0xf0] sm:$0xff]
      %v202 = vld [vmem:[%s165 + $0xf8] sm:$0xff]
      %v203 = vld [vmem:[%s1] sm:$0x1]
      %v205 = vperm.slane %v203, 0
      %v207 = vmul.f32 %v171, %v205
      %v208 = vmul.f32 %v172, %v205
      %v209 = vmul.f32 %v173, %v205
      %v210 = vmul.f32 %v174, %v205
      %v211 = vmul.f32 %v175, %v205
      %v212 = vmul.f32 %v176, %v205
      %v213 = vmul.f32 %v177, %v205
      %v214 = vmul.f32 %v178, %v205
      %v215 = vmul.f32 %v179, %v205
      %v216 = vmul.f32 %v180, %v205
      %v217 = vmul.f32 %v181, %v205
      %v218 = vmul.f32 %v182, %v205
      %v219 = vmul.f32 %v183, %v205
      %v220 = vmul.f32 %v184, %v205
      %v221 = vmul.f32 %v185, %v205
      %v222 = vmul.f32 %v186, %v205
      %v223 = vmul.f32 %v187, %v205
      %v224 = vmul.f32 %v188, %v205
      %v225 = vmul.f32 %v189, %v205
      %v226 = vmul.f32 %v190, %v205
      %v227 = vmul.f32 %v191, %v205
      %v228 = vmul.f32 %v192, %v205
      %v229 = vmul.f32 %v193, %v205
      %v230 = vmul.f32 %v194, %v205
      %v231 = vmul.f32 %v195, %v205
      %v232 = vmul.f32 %v196, %v205
      %v233 = vmul.f32 %v197, %v205
      %v234 = vmul.f32 %v198, %v205
      %v235 = vmul.f32 %v199, %v205
      %v236 = vmul.f32 %v200, %v205
      %v237 = vmul.f32 %v201, %v205
      %v238 = vmul.f32 %v202, %v205
      %v239 = vld [vmem:[%s2] sm:$0x1]
      %v241 = vperm.slane %v239, 0
      %v243 = vadd.f32 %v207, %v241
      %v244 = vadd.f32 %v208, %v241
      %v245 = vadd.f32 %v209, %v241
      %v246 = vadd.f32 %v210, %v241
      %v247 = vadd.f32 %v211, %v241
      %v248 = vadd.f32 %v212, %v241
      %v249 = vadd.f32 %v213, %v241
      %v250 = vadd.f32 %v214, %v241
      %v251 = vadd.f32 %v215, %v241
      %v252 = vadd.f32 %v216, %v241
      %v253 = vadd.f32 %v217, %v241
      %v254 = vadd.f32 %v218, %v241
      %v255 = vadd.f32 %v219, %v241
      %v256 = vadd.f32 %v220, %v241
      %v257 = vadd.f32 %v221, %v241
      %v258 = vadd.f32 %v222, %v241
      %v259 = vadd.f32 %v223, %v241
      %v260 = vadd.f32 %v224, %v241
      %v261 = vadd.f32 %v225, %v241
      %v262 = vadd.f32 %v226, %v241
      %v263 = vadd.f32 %v227, %v241
      %v264 = vadd.f32 %v228, %v241
      %v265 = vadd.f32 %v229, %v241
      %v266 = vadd.f32 %v230, %v241
      %v267 = vadd.f32 %v231, %v241
      %v268 = vadd.f32 %v232, %v241
      %v269 = vadd.f32 %v233, %v241
      %v270 = vadd.f32 %v234, %v241
      %v271 = vadd.f32 %v235, %v241
      %v272 = vadd.f32 %v236, %v241
      %v273 = vadd.f32 %v237, %v241
      %v274 = vadd.f32 %v238, %v241
      %v275 = vmax.f32 %v243, 0.0
      %v276 = vmax.f32 %v244, 0.0
      %v277 = vmax.f32 %v245, 0.0
      %v278 = vmax.f32 %v246, 0.0
      %v279 = vmax.f32 %v247, 0.0
      %v280 = vmax.f32 %v248, 0.0
      %v281 = vmax.f32 %v249, 0.0
      %v282 = vmax.f32 %v250, 0.0
      %v283 = vmax.f32 %v251, 0.0
      %v284 = vmax.f32 %v252, 0.0
      %v285 = vmax.f32 %v253, 0.0
      %v286 = vmax.f32 %v254, 0.0
      %v287 = vmax.f32 %v255, 0.0
      %v288 = vmax.f32 %v256, 0.0
      %v289 = vmax.f32 %v257, 0.0
      %v290 = vmax.f32 %v258, 0.0
      %v291 = vmax.f32 %v259, 0.0
      %v292 = vmax.f32 %v260, 0.0
      %v293 = vmax.f32 %v261, 0.0
      %v294 = vmax.f32 %v262, 0.0
      %v295 = vmax.f32 %v263, 0.0
      %v296 = vmax.f32 %v264, 0.0
      %v297 = vmax.f32 %v265, 0.0
      %v298 = vmax.f32 %v266, 0.0
      %v299 = vmax.f32 %v267, 0.0
      %v300 = vmax.f32 %v268, 0.0
      %v301 = vmax.f32 %v269, 0.0
      %v302 = vmax.f32 %v270, 0.0
      %v303 = vmax.f32 %v271, 0.0
      %v304 = vmax.f32 %v272, 0.0
      %v305 = vmax.f32 %v273, 0.0
      %v306 = vmax.f32 %v274, 0.0
      %307 = vst [vmem:[%s170] sm:$0xff] %v275
      %308 = vst [vmem:[%s170 + $0x8] sm:$0xff] %v276
      %309 = vst [vmem:[%s170 + $0x10] sm:$0xff] %v277
      %310 = vst [vmem:[%s170 + $0x18] sm:$0xff] %v278
      %311 = vst [vmem:[%s170 + $0x20] sm:$0xff] %v279
      %312 = vst [vmem:[%s170 + $0x28] sm:$0xff] %v280
      %313 = vst [vmem:[%s170 + $0x30] sm:$0xff] %v281
      %314 = vst [vmem:[%s170 + $0x38] sm:$0xff] %v282
      %315 = vst [vmem:[%s170 + $0x40] sm:$0xff] %v283
      %316 = vst [vmem:[%s170 + $0x48] sm:$0xff] %v284
      %317 = vst [vmem:[%s170 + $0x50] sm:$0xff] %v285
      %318 = vst [vmem:[%s170 + $0x58] sm:$0xff] %v286
      %319 = vst [vmem:[%s170 + $0x60] sm:$0xff] %v287
      %320 = vst [vmem:[%s170 + $0x68] sm:$0xff] %v288
      %321 = vst [vmem:[%s170 + $0x70] sm:$0xff] %v289
      %322 = vst [vmem:[%s170 + $0x78] sm:$0xff] %v290
      %323 = vst [vmem:[%s170 + $0x80] sm:$0xff] %v291
      %324 = vst [vmem:[%s170 + $0x88] sm:$0xff] %v292
      %325 = vst [vmem:[%s170 + $0x90] sm:$0xff] %v293
      %326 = vst [vmem:[%s170 + $0x98] sm:$0xff] %v294
      %327 = vst [vmem:[%s170 + $0xa0] sm:$0xff] %v295
      %328 = vst [vmem:[%s170 + $0xa8] sm:$0xff] %v296
      %329 = vst [vmem:[%s170 + $0xb0] sm:$0xff] %v297
      %330 = vst [vmem:[%s170 + $0xb8] sm:$0xff] %v298
      %331 = vst [vmem:[%s170 + $0xc0] sm:$0xff] %v299
      %332 = vst [vmem:[%s170 + $0xc8] sm:$0xff] %v300
      %333 = vst [vmem:[%s170 + $0xd0] sm:$0xff] %v301
      %334 = vst [vmem:[%s170 + $0xd8] sm:$0xff] %v302
      %335 = vst [vmem:[%s170 + $0xe0] sm:$0xff] %v303
      %336 = vst [vmem:[%s170 + $0xe8] sm:$0xff] %v304
      %337 = vst [vmem:[%s170 + $0xf0] sm:$0xff] %v305
      %338 = vst [vmem:[%s170 + $0xf8] sm:$0xff] %v306
      %p339 = scmp.lt.s32.totalorder %s14, 1
      %s340 = scalar_select %p339, %s14, 1
      %s341 = smul.addr %s340, 32
      %s342 = smul.addr %s341, 8
      %s343 = scalar_lea.vmem %s3, %s342
      // Predicated region
      $region33: #{plain_block_forward.5} parent=31 // pred_check
        %p344 = pneg %p100
      $region34: #{plain_block_forward.5} parent=31 // pred_check_branch
        %346 = sbr.rel (%p344) target = $region36
      $region35: #{plain_block_forward.5} parent=31 // pred_region
        _
      $region36: #{plain_block_forward.5} parent=31 // pred_fallthru
        _
    $region32: #{plain_block_forward.5} parent=5 // pred_fallthru
      _
    %p347 = scmp.le.s32.totalorder 2, %s9
    // Predicated region
    $region37: #{plain_block_forward.5} parent=5 // pred_check
      %p348 = pneg %p347
    $region38: #{plain_block_forward.5} parent=5 // pred_check_branch
      %350 = sbr.rel (%p348) target = $region40
    $region39: #{plain_block_forward.5} parent=5 // pred_region
      %s351 = ssub.s32 %s9, 2
      // Predicated region
      $region41: #{plain_block_forward.5} parent=39 // pred_check
        %p352 = pneg %p106
      $region42: #{plain_block_forward.5} parent=39 // pred_check_branch
        %354 = sbr.rel (%p352) target = $region44
      $region43: #{plain_block_forward.5} parent=39 // pred_region
        %p355 = scmp.lt.s32.totalorder %s15, 1
        %s356 = scalar_select %p355, %s15, 1
        %s357 = smul.addr %s356, 32
        %s358 = smul.addr %s357, 8
        %s359 = scalar_lea.vmem %s3, %s358
      $region44: #{plain_block_forward.5} parent=39 // pred_fallthru
        _
    $region40: #{plain_block_forward.5} parent=5 // pred_fallthru
      _
  $region6: #{plain_block_forward.5} parent=0 // loop_footer
    %s13 = sadd.s32 1, %s9
  $region7: #{plain_block_forward.5} parent=0 // loop_footer_branch
    %8 = sbr.rel target = $region3
  $region8: #{plain_block_forward.5} parent=0 // loop_exit
    _

// kernel: plain_block_forward.3
$region0: #{plain_block_forward.3}
  #allocation0 [shape = 'u32[]', space=smem, size = 0x4, offset = 0x4, fixed_abs, tag = 'smem constant byte address 0x4 - core index']
  #allocation1 [shape = 'u32[72,128]{1,0:T(1,128)}', space=vmem, size = 0x9000, scoped, tag = 'internal scratch']
  %s0 = inlined_call_operand.vmem [shape: bf16[2,18,18,16], index: 0, kind: input, shape index: {}]
  %s1 = inlined_call_operand.vmem [shape: bf16[9,16,128], index: 1, kind: input, shape index: {}]
  %s2 = inlined_call_operand.vmem [shape: bf16[2,16,16,128], index: 2, kind: output, shape index: {0}]
  %s3 = inlined_call_operand.vmem [shape: f32[2,2,128], index: 3, kind: output, shape index: {1}]
  %4 = xla_tuple %s2, %s3
  %s5 = sld [smem:[#allocation0]]
  $region49: #{plain_block_forward.3} parent=0
    _
  %s7 = ssub.s32 1, %s5
  %s8 = scalar_select 0, %s7, %s5
  loop: start=0, step=1, limit=4
  $region2: #{plain_block_forward.3} parent=0 // loop_pre_header
    _
  $region3: #{plain_block_forward.3} parent=0 // loop_header
    %s10 = sphi 0, %s14
    %p11 = scmp.ge.s32.totalorder %s10, 4
    %s20 = sphi 0, %s22
    %s23 = sphi 0, %s20
    %s24 = sphi 0, %s23
    %s40 = sphi 0, %s24
    %s44 = sphi 0, %s44
    %s46 = sphi 0, %s44
    %s47 = sphi 0, %s46
    %s61 = sphi 0, %s47
    %s67 = sphi 0, %s69
    %s70 = sphi 0, %s67
    %s71 = sphi 0, %s70
    %s87 = sphi 0, %s71
    %s93 = sphi 0, %s95
    %s96 = sphi 0, %s93
    %s97 = sphi 0, %s96
    %s113 = sphi 0, %s97
  $region4: #{plain_block_forward.3} parent=0 // loop_header_branch
    %13 = sbr.rel (%p11) target = $region8
  $region5: #{plain_block_forward.3} parent=0 // loop_body
    %s15 = ssub.s32 %s10, 1
    %s16 = ssub.s32 %s10, 2
    %s17 = sadd.s32 %s10, 1
    %s18 = ssub.s32 %s10, %s17
    %p19 = scmp.eq.s32.totalorder %s18, 0
    %s21 = sadd.s32 %s20, 1
    %s22 = scalar_select %p19, %s20, %s21
    %p25 = pneg %p19
    %p26 = scmp.eq.s32.totalorder %s10, 1
    %p27 = por %p25, %p26
    %p28 = scmp.ne.s32.totalorder %s20, %s23
    %p29 = scmp.eq.s32.totalorder %s10, 0
    %p30 = por %p28, %p29
    %p31 = scmp.ne.s32.totalorder %s20, %s23
    %p32 = scmp.eq.s32.totalorder %s15, 1
    %p33 = por %p31, %p32
    %p34 = scmp.ne.s32.totalorder %s23, %s24
    %p35 = scmp.eq.s32.totalorder %s15, 0
    %p36 = por %p34, %p35
    %p37 = scmp.ne.s32.totalorder %s23, %s24
    %p38 = scmp.eq.s32.totalorder %s16, 1
    %p39 = por %p37, %p38
    %p41 = scmp.ne.s32.totalorder %s24, %s40
    %p42 = scmp.eq.s32.totalorder %s16, 0
    %p43 = por %p41, %p42
    %s45 = sadd.s32 %s44, 1
    %p48 = scmp.eq.s32.totalorder %s10, 1
    %p49 = scmp.ne.s32.totalorder %s44, %s46
    %p50 = scmp.eq.s32.totalorder %s10, 0
    %p51 = por %p49, %p50
    %p52 = scmp.ne.s32.totalorder %s44, %s46
    %p53 = scmp.eq.s32.totalorder %s15, 1
    %p54 = por %p52, %p53
    %p55 = scmp.ne.s32.totalorder %s46, %s47
    %p56 = scmp.eq.s32.totalorder %s15, 0
    %p57 = por %p55, %p56
    %p58 = scmp.ne.s32.totalorder %s46, %s47
    %p59 = scmp.eq.s32.totalorder %s16, 1
    %p60 = por %p58, %p59
    %p62 = scmp.ne.s32.totalorder %s47, %s61
    %p63 = scmp.eq.s32.totalorder %s16, 0
    %p64 = por %p62, %p63
    %s65 = ssub.s32 %s10, %s17
    %p66 = scmp.eq.s32.totalorder %s65, 0
    %s68 = sadd.s32 %s67, 1
    %s69 = scalar_select %p66, %s67, %s68
    %p72 = pneg %p66
    %p73 = scmp.eq.s32.totalorder %s10, 1
    %p74 = por %p72, %p73
    %p75 = scmp.ne.s32.totalorder %s67, %s70
    %p76 = scmp.eq.s32.totalorder %s10, 0
    %p77 = por %p75, %p76
    %p78 = scmp.ne.s32.totalorder %s67, %s70
    %p79 = scmp.eq.s32.totalorder %s15, 1
    %p80 = por %p78, %p79
    %p81 = scmp.ne.s32.totalorder %s70, %s71
    %p82 = scmp.eq.s32.totalorder %s15, 0
    %p83 = por %p81, %p82
    %p84 = scmp.ne.s32.totalorder %s70, %s71
    %p85 = scmp.eq.s32.totalorder %s16, 1
    %p86 = por %p84, %p85
    %p88 = scmp.ne.s32.totalorder %s71, %s87
    %p89 = scmp.eq.s32.totalorder %s16, 0
    %p90 = por %p88, %p89
    %s91 = ssub.s32 %s10, %s17
    %p92 = scmp.eq.s32.totalorder %s91, 0
    %s94 = sadd.s32 %s93, 1
    %s95 = scalar_select %p92, %s93, %s94
    %p98 = pneg %p92
    %p99 = scmp.eq.s32.totalorder %s10, 1
    %p100 = por %p98, %p99
    %p101 = scmp.ne.s32.totalorder %s93, %s96
    %p102 = scmp.eq.s32.totalorder %s10, 0
    %p103 = por %p101, %p102
    %p104 = scmp.ne.s32.totalorder %s93, %s96
    %p105 = scmp.eq.s32.totalorder %s15, 1
    %p106 = por %p104, %p105
    %p107 = scmp.ne.s32.totalorder %s96, %s97
    %p108 = scmp.eq.s32.totalorder %s15, 0
    %p109 = por %p107, %p108
    %p110 = scmp.ne.s32.totalorder %s96, %s97
    %p111 = scmp.eq.s32.totalorder %s16, 1
    %p112 = por %p110, %p111
    %p114 = scmp.ne.s32.totalorder %s97, %s113
    %p115 = scmp.eq.s32.totalorder %s16, 0
    %p116 = por %p114, %p115
    %p117 = scmp.le.s32.totalorder 1, %s10
    %p118 = scmp.lt.s32.totalorder %s10, 3
    %p119 = pnand %p117, %p118
    %p120 = pneg %p119
    // Predicated region
    $region9: #{plain_block_forward.3} parent=5 // pred_check
      _
    $region10: #{plain_block_forward.3} parent=5 // pred_check_branch
      %122 = sbr.rel (%p119) target = $region12
    $region11: #{plain_block_forward.3} parent=5 // pred_region
      %s123 = ssub.s32 %s10, 1
      // Predicated region
      $region13: #{plain_block_forward.3} parent=11 // pred_check
        %p124 = pneg %p57
      $region14: #{plain_block_forward.3} parent=11 // pred_check_branch
        %126 = sbr.rel (%p124) target = $region16
      $region15: #{plain_block_forward.3} parent=11 // pred_region
        _
      $region16: #{plain_block_forward.3} parent=11 // pred_fallthru
        _
    $region12: #{plain_block_forward.3} parent=5 // pred_fallthru
      _
    %p127 = scmp.lt.s32.totalorder %s10, 2
    // Predicated region
    $region17: #{plain_block_forward.3} parent=5 // pred_check
      %p128 = pneg %p127
    $region18: #{plain_block_forward.3} parent=5 // pred_check_branch
      %130 = sbr.rel (%p128) target = $region20
    $region19: #{plain_block_forward.3} parent=5 // pred_region
      // Predicated region
      $region21: #{plain_block_forward.3} parent=19 // pred_check
        %p131 = pneg %p30
      $region22: #{plain_block_forward.3} parent=19 // pred_check_branch
        %133 = sbr.rel (%p131) target = $region24
      $region23: #{plain_block_forward.3} parent=19 // pred_region
        %p134 = scmp.lt.s32.totalorder %s10, 1
        %s135 = scalar_select %p134, %s10, 1
        %s136 = smul.addr %s135, 54
        %s137 = smul.addr %s136, 4
        %s138 = scalar_lea.vmem %s0, %s137
      $region24: #{plain_block_forward.3} parent=19 // pred_fallthru
        _
    $region20: #{plain_block_forward.3} parent=5 // pred_fallthru
      _
    %p139 = scmp.le.s32.totalorder 1, %s10
    %p140 = scmp.lt.s32.totalorder %s10, 3
    %p141 = pnand %p139, %p140
    %p142 = pneg %p141
    // Predicated region
    $region25: #{plain_block_forward.3} parent=5 // pred_check
      _
    $region26: #{plain_block_forward.3} parent=5 // pred_check_branch
      %144 = sbr.rel (%p141) target = $region28
    $region27: #{plain_block_forward.3} parent=5 // pred_region
      %s145 = ssub.s32 %s10, 1
      %p146 = scmp.lt.s32.totalorder %s15, 1
      %s147 = scalar_select %p146, %s15, 1
      %s148 = smul.addr %s147, 54
      %s149 = smul.addr %s148, 4
      %s150 = scalar_lea.vmem %s0, %s149
      %p151 = pneg %p36
      %p152 = pneg %p33
      %p153 = pneg %p57
      %p154 = pneg %p54
      %p155 = pneg %p83
      %p156 = pneg %p80
      %p157 = scmp.lt.s32.totalorder %s15, 1
      %s158 = scalar_select %p157, %s15, 1
      %s159 = smul.addr %s158, 32
      %s160 = smul.addr %s159, 4
      %s161 = scalar_lea.vmem %s2, %s160
      %p162 = pneg %p109
      %p163 = pneg %p106
      %p164 = scmp.lt.s32.totalorder %s15, 1
      %s165 = scalar_select %p164, %s15, 1
      %s166 = smul.addr %s165, 2
      %s167 = scalar_lea.vmem %s3, %s166
      %p168 = scmp.lt.s32.totalorder %s15, 1
      %s169 = scalar_select %p168, %s15, 1
      %s170 = smul.addr %s169, 54
      %s171 = smul.addr %s170, 4
      %s172 = scalar_lea.vmem %s0, %s171
      %p173 = scmp.lt.s32.totalorder %s15, 1
      %s174 = scalar_select %p173, %s15, 1
      %s175 = smul.addr %s174, 32
      %s176 = smul.addr %s175, 4
      %s177 = scalar_lea.vmem %s2, %s176
      %p178 = scmp.lt.s32.totalorder %s15, 1
      %s179 = scalar_select %p178, %s15, 1
      %s180 = smul.addr %s179, 2
      %s181 = scalar_lea.vmem %s3, %s180
      %v183 = vld [vmem:[%s172] sm:$0xf]
      %v184 = vld [vmem:[%s172 + $0x4] sm:$0xf]
      %v185 = vld [vmem:[%s172 + $0x8] sm:$0x1]
      %v186 = vld [vmem:[%s172 + $0xc] sm:$0xf]
      %v187 = vld [vmem:[%s172 + $0x10] sm:$0xf]
      %v188 = vld [vmem:[%s172 + $0x14] sm:$0x1]
      %v189 = vld [vmem:[%s172 + $0x18] sm:$0xf]
      %v190 = vld [vmem:[%s172 + $0x1c] sm:$0xf]
      %v191 = vld [vmem:[%s172 + $0x20] sm:$0x1]
      %v192 = vld [vmem:[%s172 + $0x24] sm:$0xf]
      %v193 = vld [vmem:[%s172 + $0x28] sm:$0xf]
      %v194 = vld [vmem:[%s172 + $0x2c] sm:$0x1]
      %v195 = vld [vmem:[%s172 + $0x30] sm:$0xf]
      %v196 = vld [vmem:[%s172 + $0x34] sm:$0xf]
      %v197 = vld [vmem:[%s172 + $0x38] sm:$0x1]
      %v198 = vld [vmem:[%s172 + $0x3c] sm:$0xf]
      %v199 = vld [vmem:[%s172 + $0x40] sm:$0xf]
      %v200 = vld [vmem:[%s172 + $0x44] sm:$0x1]
      %v201 = vld [vmem:[%s172 + $0x48] sm:$0xf]
      %v202 = vld [vmem:[%s172 + $0x4c] sm:$0xf]
      %v203 = vld [vmem:[%s172 + $0x50] sm:$0x1]
      %v204 = vld [vmem:[%s172 + $0x54] sm:$0xf]
      %v205 = vld [vmem:[%s172 + $0x58] sm:$0xf]
      %v206 = vld [vmem:[%s172 + $0x5c] sm:$0x1]
      %v207 = vld [vmem:[%s172 + $0x60] sm:$0xf]
      %v208 = vld [vmem:[%s172 + $0x64] sm:$0xf]
      %v209 = vld [vmem:[%s172 + $0x68] sm:$0x1]
      %v210 = vld [vmem:[%s172 + $0x6c] sm:$0xf]
      %v211 = vld [vmem:[%s172 + $0x70] sm:$0xf]
      %v212 = vld [vmem:[%s172 + $0x74] sm:$0x1]
      %v213 = vld [vmem:[%s172 + $0x78] sm:$0xf]
      %v214 = vld [vmem:[%s172 + $0x7c] sm:$0xf]
      %v215 = vld [vmem:[%s172 + $0x80] sm:$0x1]
      %v216 = vld [vmem:[%s172 + $0x84] sm:$0xf]
      %v217 = vld [vmem:[%s172 + $0x88] sm:$0xf]
      %v218 = vld [vmem:[%s172 + $0x8c] sm:$0x1]
      %v219 = vld [vmem:[%s172 + $0x90] sm:$0xf]
      %v220 = vld [vmem:[%s172 + $0x94] sm:$0xf]
      %v221 = vld [vmem:[%s172 + $0x98] sm:$0x1]
      %v222 = vld [vmem:[%s172 + $0x9c] sm:$0xf]
      %v223 = vld [vmem:[%s172 + $0xa0] sm:$0xf]
      %v224 = vld [vmem:[%s172 + $0xa4] sm:$0x1]
      %v225 = vld [vmem:[%s172 + $0xa8] sm:$0xf]
      %v226 = vld [vmem:[%s172 + $0xac] sm:$0xf]
      %v227 = vld [vmem:[%s172 + $0xb0] sm:$0x1]
      %v228 = vld [vmem:[%s172 + $0xb4] sm:$0xf]
      %v229 = vld [vmem:[%s172 + $0xb8] sm:$0xf]
      %v230 = vld [vmem:[%s172 + $0xbc] sm:$0x1]
      %v231 = vld [vmem:[%s172 + $0xc0] sm:$0xf]
      %v232 = vld [vmem:[%s172 + $0xc4] sm:$0xf]
      %v233 = vld [vmem:[%s172 + $0xc8] sm:$0x1]
      %v234 = vld [vmem:[%s172 + $0xcc] sm:$0xf]
      %v235 = vld [vmem:[%s172 + $0xd0] sm:$0xf]
      %v236 = vld [vmem:[%s172 + $0xd4] sm:$0x1]
      %v237 = vld [vmem:[%s1] sm:$0xf]
      %v238 = vld [vmem:[%s1 + $0x4] sm:$0xf]
      %vm239 = vsmask.f32 3328
      %vm240 = vsmask.f32 7440
      %vm241 = vmor %vm239, %vm240
      %v243 = vshrl.u32 %v183, 16
      %v245 = vrot.slane %v243, 4
      %v246 = vshll.u32 %v183, 16
      %v248 = vrot.slane %v246, 5
      %v249 = vor.u32 %v245, %v248
      %v250 = vrot.slane %v249, 4
      %v252 = vshll.u32 %v184, 16
      %v254 = vrot.slane %v252, 5
      %v255 = vsel %vm241, %v250, %v254
      %v256 = vshrl.u32 %v184, 16
      %v258 = vrot.slane %v256, 4
      %v259 = vor.u32 %v258, %v254
      %v260 = vrot.slane %v259, 4
      %v262 = vshll.u32 %v185, 16
      %v264 = vrot.slane %v262, 5
      %v265 = vsel %vm241, %v260, %v264
      %v267 = vshrl.u32 %v186, 16
      %v269 = vrot.slane %v267, 4
      %v270 = vshll.u32 %v186, 16
      %v272 = vrot.slane %v270, 5
      %v273 = vor.u32 %v269, %v272
      %v274 = vrot.slane %v273, 4
      %v276 = vshll.u32 %v187, 16
      %v278 = vrot.slane %v276, 5
      %v279 = vsel %vm241, %v274, %v278
      %v280 = vshrl.u32 %v187, 16
      %v282 = vrot.slane %v280, 4
      %v283 = vor.u32 %v282, %v278
      %v284 = vrot.slane %v283, 4
      %v286 = vshll.u32 %v188, 16
      %v288 = vrot.slane %v286, 5
      %v289 = vsel %vm241, %v284, %v288
      %v291 = vshrl.u32 %v189, 16
      %v293 = vrot.slane %v291, 4
      %v294 = vshll.u32 %v189, 16
      %v296 = vrot.slane %v294, 5
      %v297 = vor.u32 %v293, %v296
      %v298 = vrot.slane %v297, 4
      %v300 = vshll.u32 %v190, 16
      %v302 = vrot.slane %v300, 5
      %v303 = vsel %vm241, %v298, %v302
      %v304 = vshrl.u32 %v190, 16
      %v306 = vrot.slane %v304, 4
      %v307 = vor.u32 %v306, %v302
      %v308 = vrot.slane %v307, 4
      %v310 = vshll.u32 %v191, 16
      %v312 = vrot.slane %v310, 5
      %v313 = vsel %vm241, %v308, %v312
      %v315 = vshrl.u32 %v192, 16
      %v317 = vrot.slane %v315, 4
      %v318 = vshll.u32 %v192, 16
      %v320 = vrot.slane %v318, 5
      %v321 = vor.u32 %v317, %v320
      %v322 = vrot.slane %v321, 4
      %v324 = vshll.u32 %v193, 16
      %v326 = vrot.slane %v324, 5
      %v327 = vsel %vm241, %v322, %v326
      %v328 = vshrl.u32 %v193, 16
      %v330 = vrot.slane %v328, 4
      %v331 = vor.u32 %v330, %v326
      %v332 = vrot.slane %v331, 4
      %v334 = vshll.u32 %v194, 16
      %v336 = vrot.slane %v334, 5
      %v337 = vsel %vm241, %v332, %v336
      %v339 = vshrl.u32 %v195, 16
      %v341 = vrot.slane %v339, 4
      %v342 = vshll.u32 %v195, 16
      %v344 = vrot.slane %v342, 5
      %v345 = vor.u32 %v341, %v344
      %v346 = vrot.slane %v345, 4
      %v348 = vshll.u32 %v196, 16
      %v350 = vrot.slane %v348, 5
      %v351 = vsel %vm241, %v346, %v350
      %v352 = vshrl.u32 %v196, 16
      %v354 = vrot.slane %v352, 4
      %v355 = vor.u32 %v354, %v350
      %v356 = vrot.slane %v355, 4
      %v358 = vshll.u32 %v197, 16
      %v360 = vrot.slane %v358, 5
      %v361 = vsel %vm241, %v356, %v360
      %v363 = vshrl.u32 %v198, 16
      %v365 = vrot.slane %v363, 4
      %v366 = vshll.u32 %v198, 16
      %v368 = vrot.slane %v366, 5
      %v369 = vor.u32 %v365, %v368
      %v370 = vrot.slane %v369, 4
      %v372 = vshll.u32 %v199, 16
      %v374 = vrot.slane %v372, 5
      %v375 = vsel %vm241, %v370, %v374
      %v376 = vshrl.u32 %v199, 16
      %v378 = vrot.slane %v376, 4
      %v379 = vor.u32 %v378, %v374
      %v380 = vrot.slane %v379, 4
      %v382 = vshll.u32 %v200, 16
      %v384 = vrot.slane %v382, 5
      %v385 = vsel %vm241, %v380, %v384
      %v387 = vshrl.u32 %v201, 16
      %v389 = vrot.slane %v387, 4
      %v390 = vshll.u32 %v201, 16
      %v392 = vrot.slane %v390, 5
      %v393 = vor.u32 %v389, %v392
      %v394 = vrot.slane %v393, 4
      %v396 = vshll.u32 %v202, 16
      %v398 = vrot.slane %v396, 5
      %v399 = vsel %vm241, %v394, %v398
      %v400 = vshrl.u32 %v202, 16
      %v402 = vrot.slane %v400, 4
      %v403 = vor.u32 %v402, %v398
      %v404 = vrot.slane %v403, 4
      %v406 = vshll.u32 %v203, 16
      %v408 = vrot.slane %v406, 5
      %v409 = vsel %vm241, %v404, %v408
      %v411 = vshrl.u32 %v204, 16
      %v413 = vrot.slane %v411, 4
      %v414 = vshll.u32 %v204, 16
      %v416 = vrot.slane %v414, 5
      %v417 = vor.u32 %v413, %v416
      %v418 = vrot.slane %v417, 4
      %v420 = vshll.u32 %v205, 16
      %v422 = vrot.slane %v420, 5
      %v423 = vsel %vm241, %v418, %v422
      %v424 = vshrl.u32 %v205, 16
      %v426 = vrot.slane %v424, 4
      %v427 = vor.u32 %v426, %v422
      %v428 = vrot.slane %v427, 4
      %v430 = vshll.u32 %v206, 16
      %v432 = vrot.slane %v430, 5
      %v433 = vsel %vm241, %v428, %v432
      %v435 = vshrl.u32 %v207, 16
      %v437 = vrot.slane %v435, 4
      %v438 = vshll.u32 %v207, 16
      %v440 = vrot.slane %v438, 5
      %v441 = vor.u32 %v437, %v440
      %v442 = vrot.slane %v441, 4
      %v444 = vshll.u32 %v208, 16
      %v446 = vrot.slane %v444, 5
      %v447 = vsel %vm241, %v442, %v446
      %v448 = vshrl.u32 %v208, 16
      %v450 = vrot.slane %v448, 4
      %v451 = vor.u32 %v450, %v446
      %v452 = vrot.slane %v451, 4
      %v454 = vshll.u32 %v209, 16
      %v456 = vrot.slane %v454, 5
      %v457 = vsel %vm241, %v452, %v456
      %v459 = vshrl.u32 %v210, 16
      %v461 = vrot.slane %v459, 4
      %v462 = vshll.u32 %v210, 16
      %v464 = vrot.slane %v462, 5
      %v465 = vor.u32 %v461, %v464
      %v466 = vrot.slane %v465, 4
      %v468 = vshll.u32 %v211, 16
      %v470 = vrot.slane %v468, 5
      %v471 = vsel %vm241, %v466, %v470
      %v472 = vshrl.u32 %v211, 16
      %v474 = vrot.slane %v472, 4
      %v475 = vor.u32 %v474, %v470
      %v476 = vrot.slane %v475, 4
      %v478 = vshll.u32 %v212, 16
      %v480 = vrot.slane %v478, 5
      %v481 = vsel %vm241, %v476, %v480
      %v483 = vshrl.u32 %v213, 16
      %v485 = vrot.slane %v483, 4
      %v486 = vshll.u32 %v213, 16
      %v488 = vrot.slane %v486, 5
      %v489 = vor.u32 %v485, %v488
      %v490 = vrot.slane %v489, 4
      %v492 = vshll.u32 %v214, 16
      %v494 = vrot.slane %v492, 5
      %v495 = vsel %vm241, %v490, %v494
      %v496 = vshrl.u32 %v214, 16
      %v498 = vrot.slane %v496, 4
      %v499 = vor.u32 %v498, %v494
      %v500 = vrot.slane %v499, 4
      %v502 = vshll.u32 %v215, 16
      %v504 = vrot.slane %v502, 5
      %v505 = vsel %vm241, %v500, %v504
      %v507 = vshrl.u32 %v216, 16
      %v509 = vrot.slane %v507, 4
      %v510 = vshll.u32 %v216, 16
      %v512 = vrot.slane %v510, 5
      %v513 = vor.u32 %v509, %v512
      %v514 = vrot.slane %v513, 4
      %v516 = vshll.u32 %v217, 16
      %v518 = vrot.slane %v516, 5
      %v519 = vsel %vm241, %v514, %v518
      %v520 = vshrl.u32 %v217, 16
      %v522 = vrot.slane %v520, 4
      %v523 = vor.u32 %v522, %v518
      %v524 = vrot.slane %v523, 4
      %v526 = vshll.u32 %v218, 16
      %v528 = vrot.slane %v526, 5
      %v529 = vsel %vm241, %v524, %v528
      %v531 = vshrl.u32 %v219, 16
      %v533 = vrot.slane %v531, 4
      %v534 = vshll.u32 %v219, 16
      %v536 = vrot.slane %v534, 5
      %v537 = vor.u32 %v533, %v536
      %v538 = vrot.slane %v537, 4
      %v540 = vshll.u32 %v220, 16
      %v542 = vrot.slane %v540, 5
      %v543 = vsel %vm241, %v538, %v542
      %v544 = vshrl.u32 %v220, 16
      %v546 = vrot.slane %v544, 4
      %v547 = vor.u32 %v546, %v542
      %v548 = vrot.slane %v547, 4
      %v550 = vshll.u32 %v221, 16
      %v552 = vrot.slane %v550, 5
      %v553 = vsel %vm241, %v548, %v552
      %v555 = vshrl.u32 %v222, 16
      %v557 = vrot.slane %v555, 4
      %v558 = vshll.u32 %v222, 16
      %v560 = vrot.slane %v558, 5
      %v561 = vor.u32 %v557, %v560
      %v562 = vrot.slane %v561, 4
      %v564 = vshll.u32 %v223, 16
      %v566 = vrot.slane %v564, 5
      %v567 = vsel %vm241, %v562, %v566
      %v568 = vshrl.u32 %v223, 16
      %v570 = vrot.slane %v568, 4
      %v571 = vor.u32 %v570, %v566
      %v572 = vrot.slane %v571, 4
      %v574 = vshll.u32 %v224, 16
      %v576 = vrot.slane %v574, 5
      %v577 = vsel %vm241, %v572, %v576
      %v579 = vshrl.u32 %v225, 16
      %v581 = vrot.slane %v579, 4
      %v582 = vshll.u32 %v225, 16
      %v584 = vrot.slane %v582, 5
      %v585 = vor.u32 %v581, %v584
      %v586 = vrot.slane %v585, 4
      %v588 = vshll.u32 %v226, 16
      %v590 = vrot.slane %v588, 5
      %v591 = vsel %vm241, %v586, %v590
      %v592 = vshrl.u32 %v226, 16
      %v594 = vrot.slane %v592, 4
      %v595 = vor.u32 %v594, %v590
      %v596 = vrot.slane %v595, 4
      %v598 = vshll.u32 %v227, 16
      %v600 = vrot.slane %v598, 5
      %v601 = vsel %vm241, %v596, %v600
      %v603 = vshrl.u32 %v228, 16
      %v605 = vrot.slane %v603, 4
      %v606 = vshll.u32 %v228, 16
      %v608 = vrot.slane %v606, 5
      %v609 = vor.u32 %v605, %v608
      %v610 = vrot.slane %v609, 4
      %v612 = vshll.u32 %v229, 16
      %v614 = vrot.slane %v612, 5
      %v615 = vsel %vm241, %v610, %v614
      %v616 = vshrl.u32 %v229, 16
      %v618 = vrot.slane %v616, 4
      %v619 = vor.u32 %v618, %v614
      %v620 = vrot.slane %v619, 4
      %v622 = vshll.u32 %v230, 16
      %v624 = vrot.slane %v622, 5
      %v625 = vsel %vm241, %v620, %v624
      %s626 = scalar_lea.vmem %s1, 8
      %v627 = vld [vmem:[%s626] sm:$0xf]
      %v628 = vld [vmem:[%s626 + $0x4] sm:$0xf]
      %v629 = vunpack.c.l.b16 %v255
      %v630 = vunpack.c.l.b16 %v265
      %v631 = vunpack.c.l.b16 %v279
      %v632 = vunpack.c.l.b16 %v289
      %v633 = vunpack.c.l.b16 %v303
      %v634 = vunpack.c.l.b16 %v313
      %v635 = vunpack.c.l.b16 %v327
      %v636 = vunpack.c.l.b16 %v337
      %v637 = vunpack.c.l.b16 %v351
      %v638 = vunpack.c.l.b16 %v361
      %v639 = vunpack.c.l.b16 %v375
      %v640 = vunpack.c.l.b16 %v385
      %v641 = vunpack.c.l.b16 %v399
      %v642 = vunpack.c.l.b16 %v409
      %v643 = vunpack.c.l.b16 %v423
      %v644 = vunpack.c.l.b16 %v433
      %v645 = vunpack.c.l.b16 %v447
      %v646 = vunpack.c.l.b16 %v457
      %v647 = vunpack.c.l.b16 %v471
      %v648 = vunpack.c.l.b16 %v481
      %v649 = vunpack.c.l.b16 %v495
      %v650 = vunpack.c.l.b16 %v505
      %v651 = vunpack.c.l.b16 %v519
      %v652 = vunpack.c.l.b16 %v529
      %v653 = vunpack.c.l.b16 %v543
      %v654 = vunpack.c.l.b16 %v553
      %v655 = vunpack.c.l.b16 %v567
      %v656 = vunpack.c.l.b16 %v577
      %v657 = vunpack.c.l.b16 %v591
      %v658 = vunpack.c.l.b16 %v601
      %v659 = vunpack.c.l.b16 %v615
      %v660 = vunpack.c.l.b16 %v625
      %v661 = vpack.c.b16 %v630, %v629
      %v662 = vpack.c.b16 %v632, %v631
      %v663 = vpack.c.b16 %v634, %v633
      %v664 = vpack.c.b16 %v636, %v635
      %v665 = vpack.c.b16 %v638, %v637
      %v666 = vpack.c.b16 %v640, %v639
      %v667 = vpack.c.b16 %v642, %v641
      %v668 = vpack.c.b16 %v644, %v643
      %v669 = vpack.c.b16 %v646, %v645
      %v670 = vpack.c.b16 %v648, %v647
      %v671 = vpack.c.b16 %v650, %v649
      %v672 = vpack.c.b16 %v652, %v651
      %v673 = vpack.c.b16 %v654, %v653
      %v674 = vpack.c.b16 %v656, %v655
      %v675 = vpack.c.b16 %v658, %v657
      %v676 = vpack.c.b16 %v660, %v659
      %v679 = vunpack.c.l.b16 %v627
      %v680 = vunpack.c.l.b16 %v628
      %v681 = vpack.c.b16 %v680, %v679
      %vm683 = vcmask 130048
      %v685 = vsel %vm683, %v661, 0
      %v688 = vsel %vm683, %v662, 0
      %v691 = vsel %vm683, %v663, 0
      %v694 = vsel %vm683, %v664, 0
      %v697 = vsel %vm683, %v665, 0
      %v700 = vsel %vm683, %v666, 0
      %v703 = vsel %vm683, %v667, 0
      %v706 = vsel %vm683, %v668, 0
      %v709 = vsel %vm683, %v669, 0
      %v712 = vsel %vm683, %v670, 0
      %v715 = vsel %vm683, %v671, 0
      %v718 = vsel %vm683, %v672, 0
      %v721 = vsel %vm683, %v673, 0
      %v724 = vsel %vm683, %v674, 0
      %v727 = vsel %vm683, %v675, 0
      %v730 = vsel %vm683, %v676, 0
      %732 = vmatpush.bf16.msra.mxu0 0
      %733 = vmatpush.bf16.msra.mxu0 0
      %734 = vmatpush.bf16.msra.mxu0 0
      %735 = vmatpush.bf16.msra.mxu0 0
      %736 = vmatpush.bf16.msra.mxu0 0
      %737 = vmatpush.bf16.msra.mxu0 0
      %738 = vmatpush.bf16.msra.mxu0 0
      %739 = vmatpush.bf16.msra.mxu0 %v681
      %740 = vmatmul.bf16.gmra.mxu0 %v685
      %v741 = vpop.f32.mrf.mxu0
      %v742 = vadd.f32 0.0, %v741
      %v743 = vpop.f32.mrf.mxu0
      %v744 = vadd.f32 0.0, %v743
      %745 = vmatmul.bf16.gmra.mxu0 %v688
      %v746 = vpop.f32.mrf.mxu0
      %v747 = vadd.f32 0.0, %v746
      %v748 = vpop.f32.mrf.mxu0
      %v749 = vadd.f32 0.0, %v748
      %750 = vmatmul.bf16.gmra.mxu0 %v691
      %v751 = vpop.f32.mrf.mxu0
      %v752 = vadd.f32 0.0, %v751
      %v753 = vpop.f32.mrf.mxu0
      %v754 = vadd.f32 0.0, %v753
      %755 = vmatmul.bf16.gmra.mxu0 %v694
      %v756 = vpop.f32.mrf.mxu0
      %v757 = vadd.f32 0.0, %v756
      %v758 = vpop.f32.mrf.mxu0
      %v759 = vadd.f32 0.0, %v758
      %760 = vmatmul.bf16.gmra.mxu0 %v697
      %v761 = vpop.f32.mrf.mxu0
      %v762 = vadd.f32 0.0, %v761
      %v763 = vpop.f32.mrf.mxu0
      %v764 = vadd.f32 0.0, %v763
      %765 = vmatmul.bf16.gmra.mxu0 %v700
      %v766 = vpop.f32.mrf.mxu0
      %v767 = vadd.f32 0.0, %v766
      %v768 = vpop.f32.mrf.mxu0
      %v769 = vadd.f32 0.0, %v768
      %770 = vmatmul.bf16.gmra.mxu0 %v703
      %v771 = vpop.f32.mrf.mxu0
      %v772 = vadd.f32 0.0, %v771
      %v773 = vpop.f32.mrf.mxu0
      %v774 = vadd.f32 0.0, %v773
      %775 = vmatmul.bf16.gmra.mxu0 %v706
      %v776 = vpop.f32.mrf.mxu0
      %v777 = vadd.f32 0.0, %v776
      %v778 = vpop.f32.mrf.mxu0
      %v779 = vadd.f32 0.0, %v778
      %780 = vmatmul.bf16.gmra.mxu0 %v709
      %v781 = vpop.f32.mrf.mxu0
      %v782 = vadd.f32 0.0, %v781
      %v783 = vpop.f32.mrf.mxu0
      %v784 = vadd.f32 0.0, %v783
      %785 = vmatmul.bf16.gmra.mxu0 %v712
      %v786 = vpop.f32.mrf.mxu0
      %v787 = vadd.f32 0.0, %v786
      %v788 = vpop.f32.mrf.mxu0
      %v789 = vadd.f32 0.0, %v788
      %790 = vmatmul.bf16.gmra.mxu0 %v715
      %v791 = vpop.f32.mrf.mxu0
      %v792 = vadd.f32 0.0, %v791
      %v793 = vpop.f32.mrf.mxu0
      %v794 = vadd.f32 0.0, %v793
      %795 = vmatmul.bf16.gmra.mxu0 %v718
      %v796 = vpop.f32.mrf.mxu0
      %v797 = vadd.f32 0.0, %v796
      %v798 = vpop.f32.mrf.mxu0
      %v799 = vadd.f32 0.0, %v798
      %800 = vmatmul.bf16.gmra.mxu0 %v721
      %v801 = vpop.f32.mrf.mxu0
      %v802 = vadd.f32 0.0, %v801
      %v803 = vpop.f32.mrf.mxu0
      %v804 = vadd.f32 0.0, %v803
      %805 = vmatmul.bf16.gmra.mxu0 %v724
      %v806 = vpop.f32.mrf.mxu0
      %v807 = vadd.f32 0.0, %v806
      %v808 = vpop.f32.mrf.mxu0
      %v809 = vadd.f32 0.0, %v808
      %810 = vmatmul.bf16.gmra.mxu0 %v727
      %v811 = vpop.f32.mrf.mxu0
      %v812 = vadd.f32 0.0, %v811
      %v813 = vpop.f32.mrf.mxu0
      %v814 = vadd.f32 0.0, %v813
      %815 = vmatmul.bf16.gmra.mxu0 %v730
      %v816 = vpop.f32.mrf.mxu0
      %v817 = vadd.f32 0.0, %v816
      %v818 = vpop.f32.mrf.mxu0
      %v819 = vadd.f32 0.0, %v818
      %820 = vdwg.mxu0
      %v853 = vunpack.c.l.b16 %v183
      %v854 = vunpack.c.l.b16 %v184
      %v855 = vunpack.c.l.b16 %v186
      %v856 = vunpack.c.l.b16 %v187
      %v857 = vunpack.c.l.b16 %v189
      %v858 = vunpack.c.l.b16 %v190
      %v859 = vunpack.c.l.b16 %v192
      %v860 = vunpack.c.l.b16 %v193
      %v861 = vunpack.c.l.b16 %v195
      %v862 = vunpack.c.l.b16 %v196
      %v863 = vunpack.c.l.b16 %v198
      %v864 = vunpack.c.l.b16 %v199
      %v865 = vunpack.c.l.b16 %v201
      %v866 = vunpack.c.l.b16 %v202
      %v867 = vunpack.c.l.b16 %v204
      %v868 = vunpack.c.l.b16 %v205
      %v869 = vunpack.c.l.b16 %v207
      %v870 = vunpack.c.l.b16 %v208
      %v871 = vunpack.c.l.b16 %v210
      %v872 = vunpack.c.l.b16 %v211
      %v873 = vunpack.c.l.b16 %v213
      %v874 = vunpack.c.l.b16 %v214
      %v875 = vunpack.c.l.b16 %v216
      %v876 = vunpack.c.l.b16 %v217
      %v877 = vunpack.c.l.b16 %v219
      %v878 = vunpack.c.l.b16 %v220
      %v879 = vunpack.c.l.b16 %v222
      %v880 = vunpack.c.l.b16 %v223
      %v881 = vunpack.c.l.b16 %v225
      %v882 = vunpack.c.l.b16 %v226
      %v883 = vunpack.c.l.b16 %v228
      %v884 = vunpack.c.l.b16 %v229
      %v885 = vpack.c.b16 %v854, %v853
      %v886 = vpack.c.b16 %v856, %v855
      %v887 = vpack.c.b16 %v858, %v857
      %v888 = vpack.c.b16 %v860, %v859
      %v889 = vpack.c.b16 %v862, %v861
      %v890 = vpack.c.b16 %v864, %v863
      %v891 = vpack.c.b16 %v866, %v865
      %v892 = vpack.c.b16 %v868, %v867
      %v893 = vpack.c.b16 %v870, %v869
      %v894 = vpack.c.b16 %v872, %v871
      %v895 = vpack.c.b16 %v874, %v873
      %v896 = vpack.c.b16 %v876, %v875
      %v897 = vpack.c.b16 %v878, %v877
      %v898 = vpack.c.b16 %v880, %v879
      %v899 = vpack.c.b16 %v882, %v881
      %v900 = vpack.c.b16 %v884, %v883
      %v903 = vunpack.c.l.b16 %v237
      %v904 = vunpack.c.l.b16 %v238
      %v905 = vpack.c.b16 %v904, %v903
      %v908 = vsel %vm683, %v885, 0
      %v911 = vsel %vm683, %v886, 0
      %v914 = vsel %vm683, %v887, 0
      %v917 = vsel %vm683, %v888, 0
      %v920 = vsel %vm683, %v889, 0
      %v923 = vsel %vm683, %v890, 0
      %v926 = vsel %vm683, %v891, 0
      %v929 = vsel %vm683, %v892, 0
      %v932 = vsel %vm683, %v893, 0
      %v935 = vsel %vm683, %v894, 0
      %v938 = vsel %vm683, %v895, 0
      %v941 = vsel %vm683, %v896, 0
      %v944 = vsel %vm683, %v897, 0
      %v947 = vsel %vm683, %v898, 0
      %v950 = vsel %vm683, %v899, 0
      %v953 = vsel %vm683, %v900, 0
      %955 = vmatpush.bf16.msra.mxu0 0
      %956 = vmatpush.bf16.msra.mxu0 0
      %957 = vmatpush.bf16.msra.mxu0 0
      %958 = vmatpush.bf16.msra.mxu0 0
      %959 = vmatpush.bf16.msra.mxu0 0
      %960 = vmatpush.bf16.msra.mxu0 0
      %961 = vmatpush.bf16.msra.mxu0 0
      %962 = vmatpush.bf16.msra.mxu0 %v905
      %963 = vmatmul.bf16.gmra.mxu0 %v908
      %v964 = vpop.f32.mrf.mxu0
      %v965 = vadd.f32 %v742, %v964
      %v966 = vpop.f32.mrf.mxu0
      %v967 = vadd.f32 %v744, %v966
      %968 = vmatmul.bf16.gmra.mxu0 %v911
      %v969 = vpop.f32.mrf.mxu0
      %v970 = vadd.f32 %v747, %v969
      %v971 = vpop.f32.mrf.mxu0
      %v972 = vadd.f32 %v749, %v971
      %973 = vmatmul.bf16.gmra.mxu0 %v914
      %v974 = vpop.f32.mrf.mxu0
      %v975 = vadd.f32 %v752, %v974
      %v976 = vpop.f32.mrf.mxu0
      %v977 = vadd.f32 %v754, %v976
      %978 = vmatmul.bf16.gmra.mxu0 %v917
      %v979 = vpop.f32.mrf.mxu0
      %v980 = vadd.f32 %v757, %v979
      %v981 = vpop.f32.mrf.mxu0
      %v982 = vadd.f32 %v759, %v981
      %983 = vmatmul.bf16.gmra.mxu0 %v920
      %v984 = vpop.f32.mrf.mxu0
      %v985 = vadd.f32 %v762, %v984
      %v986 = vpop.f32.mrf.mxu0
      %v987 = vadd.f32 %v764, %v986
      %988 = vmatmul.bf16.gmra.mxu0 %v923
      %v989 = vpop.f32.mrf.mxu0
      %v990 = vadd.f32 %v767, %v989
      %v991 = vpop.f32.mrf.mxu0
      %v992 = vadd.f32 %v769, %v991
      %993 = vmatmul.bf16.gmra.mxu0 %v926
      %v994 = vpop.f32.mrf.mxu0
      %v995 = vadd.f32 %v772, %v994
      %v996 = vpop.f32.mrf.mxu0
      %v997 = vadd.f32 %v774, %v996
      %998 = vmatmul.bf16.gmra.mxu0 %v929
      %v999 = vpop.f32.mrf.mxu0
      %v1000 = vadd.f32 %v777, %v999
      %v1001 = vpop.f32.mrf.mxu0
      %v1002 = vadd.f32 %v779, %v1001
      %1003 = vmatmul.bf16.gmra.mxu0 %v932
      %v1004 = vpop.f32.mrf.mxu0
      %v1005 = vadd.f32 %v782, %v1004
      %v1006 = vpop.f32.mrf.mxu0
      %v1007 = vadd.f32 %v784, %v1006
      %1008 = vmatmul.bf16.gmra.mxu0 %v935
      %v1009 = vpop.f32.mrf.mxu0
      %v1010 = vadd.f32 %v787, %v1009
      %v1011 = vpop.f32.mrf.mxu0
      %v1012 = vadd.f32 %v789, %v1011
      %1013 = vmatmul.bf16.gmra.mxu0 %v938
      %v1014 = vpop.f32.mrf.mxu0
      %v1015 = vadd.f32 %v792, %v1014
      %v1016 = vpop.f32.mrf.mxu0
      %v1017 = vadd.f32 %v794, %v1016
      %1018 = vmatmul.bf16.gmra.mxu0 %v941
      %v1019 = vpop.f32.mrf.mxu0
      %v1020 = vadd.f32 %v797, %v1019
      %v1021 = vpop.f32.mrf.mxu0
      %v1022 = vadd.f32 %v799, %v1021
      %1023 = vmatmul.bf16.gmra.mxu0 %v944
      %v1024 = vpop.f32.mrf.mxu0
      %v1025 = vadd.f32 %v802, %v1024
      %v1026 = vpop.f32.mrf.mxu0
      %v1027 = vadd.f32 %v804, %v1026
      %1028 = vmatmul.bf16.gmra.mxu0 %v947
      %v1029 = vpop.f32.mrf.mxu0
      %v1030 = vadd.f32 %v807, %v1029
      %v1031 = vpop.f32.mrf.mxu0
      %v1032 = vadd.f32 %v809, %v1031
      %1033 = vmatmul.bf16.gmra.mxu0 %v950
      %v1034 = vpop.f32.mrf.mxu0
      %v1035 = vadd.f32 %v812, %v1034
      %v1036 = vpop.f32.mrf.mxu0
      %v1037 = vadd.f32 %v814, %v1036
      %1038 = vmatmul.bf16.gmra.mxu0 %v953
      %v1039 = vpop.f32.mrf.mxu0
      %v1040 = vadd.f32 %v817, %v1039
      %v1041 = vpop.f32.mrf.mxu0
      %v1042 = vadd.f32 %v819, %v1041
      %1043 = vdwg.mxu0
      %vm1060 = vcmask 1042432
      %vm1061 = vcmask 1046532
      %vm1062 = vmor %vm1060, %vm1061
      %v1063 = vrot.slane %v183, 5
      %v1064 = vrot.slane %v1063, 4
      %v1065 = vrot.slane %v184, 5
      %v1066 = vsel %vm1062, %v1064, %v1065
      %v1067 = vrot.slane %v1065, 4
      %v1068 = vrot.slane %v185, 5
      %v1069 = vsel %vm1062, %v1067, %v1068
      %v1070 = vrot.slane %v186, 5
      %v1071 = vrot.slane %v1070, 4
      %v1072 = vrot.slane %v187, 5
      %v1073 = vsel %vm1062, %v1071, %v1072
      %v1074 = vrot.slane %v1072, 4
      %v1075 = vrot.slane %v188, 5
      %v1076 = vsel %vm1062, %v1074, %v1075
      %v1077 = vrot.slane %v189, 5
      %v1078 = vrot.slane %v1077, 4
      %v1079 = vrot.slane %v190, 5
      %v1080 = vsel %vm1062, %v1078, %v1079
      %v1081 = vrot.slane %v1079, 4
      %v1082 = vrot.slane %v191, 5
      %v1083 = vsel %vm1062, %v1081, %v1082
      %v1084 = vrot.slane %v192, 5
      %v1085 = vrot.slane %v1084, 4
      %v1086 = vrot.slane %v193, 5
      %v1087 = vsel %vm1062, %v1085, %v1086
      %v1088 = vrot.slane %v1086, 4
      %v1089 = vrot.slane %v194, 5
      %v1090 = vsel %vm1062, %v1088, %v1089
      %v1091 = vrot.slane %v195, 5
      %v1092 = vrot.slane %v1091, 4
      %v1093 = vrot.slane %v196, 5
      %v1094 = vsel %vm1062, %v1092, %v1093
      %v1095 = vrot.slane %v1093, 4
      %v1096 = vrot.slane %v197, 5
      %v1097 = vsel %vm1062, %v1095, %v1096
      %v1098 = vrot.slane %v198, 5
      %v1099 = vrot.slane %v1098, 4
      %v1100 = vrot.slane %v199, 5
      %v1101 = vsel %vm1062, %v1099, %v1100
      %v1102 = vrot.slane %v1100, 4
      %v1103 = vrot.slane %v200, 5
      %v1104 = vsel %vm1062, %v1102, %v1103
      %v1105 = vrot.slane %v201, 5
      %v1106 = vrot.slane %v1105, 4
      %v1107 = vrot.slane %v202, 5
      %v1108 = vsel %vm1062, %v1106, %v1107
      %v1109 = vrot.slane %v1107, 4
      %v1110 = vrot.slane %v203, 5
      %v1111 = vsel %vm1062, %v1109, %v1110
      %v1112 = vrot.slane %v204, 5
      %v1113 = vrot.slane %v1112, 4
      %v1114 = vrot.slane %v205, 5
      %v1115 = vsel %vm1062, %v1113, %v1114
      %v1116 = vrot.slane %v1114, 4
      %v1117 = vrot.slane %v206, 5
      %v1118 = vsel %vm1062, %v1116, %v1117
      %v1119 = vrot.slane %v207, 5
      %v1120 = vrot.slane %v1119, 4
      %v1121 = vrot.slane %v208, 5
      %v1122 = vsel %vm1062, %v1120, %v1121
      %v1123 = vrot.slane %v1121, 4
      %v1124 = vrot.slane %v209, 5
      %v1125 = vsel %vm1062, %v1123, %v1124
      %v1126 = vrot.slane %v210, 5
      %v1127 = vrot.slane %v1126, 4
      %v1128 = vrot.slane %v211, 5
      %v1129 = vsel %vm1062, %v1127, %v1128
      %v1130 = vrot.slane %v1128, 4
      %v1131 = vrot.slane %v212, 5
      %v1132 = vsel %vm1062, %v1130, %v1131
      %v1133 = vrot.slane %v213, 5
      %v1134 = vrot.slane %v1133, 4
      %v1135 = vrot.slane %v214, 5
      %v1136 = vsel %vm1062, %v1134, %v1135
      %v1137 = vrot.slane %v1135, 4
      %v1138 = vrot.slane %v215, 5
      %v1139 = vsel %vm1062, %v1137, %v1138
      %v1140 = vrot.slane %v216, 5
      %v1141 = vrot.slane %v1140, 4
      %v1142 = vrot.slane %v217, 5
      %v1143 = vsel %vm1062, %v1141, %v1142
      %v1144 = vrot.slane %v1142, 4
      %v1145 = vrot.slane %v218, 5
      %v1146 = vsel %vm1062, %v1144, %v1145
      %v1147 = vrot.slane %v219, 5
      %v1148 = vrot.slane %v1147, 4
      %v1149 = vrot.slane %v220, 5
      %v1150 = vsel %vm1062, %v1148, %v1149
      %v1151 = vrot.slane %v1149, 4
      %v1152 = vrot.slane %v221, 5
      %v1153 = vsel %vm1062, %v1151, %v1152
      %v1154 = vrot.slane %v222, 5
      %v1155 = vrot.slane %v1154, 4
      %v1156 = vrot.slane %v223, 5
      %v1157 = vsel %vm1062, %v1155, %v1156
      %v1158 = vrot.slane %v1156, 4
      %v1159 = vrot.slane %v224, 5
      %v1160 = vsel %vm1062, %v1158, %v1159
      %v1161 = vrot.slane %v225, 5
      %v1162 = vrot.slane %v1161, 4
      %v1163 = vrot.slane %v226, 5
      %v1164 = vsel %vm1062, %v1162, %v1163
      %v1165 = vrot.slane %v1163, 4
      %v1166 = vrot.slane %v227, 5
      %v1167 = vsel %vm1062, %v1165, %v1166
      %v1168 = vrot.slane %v228, 5
      %v1169 = vrot.slane %v1168, 4
      %v1170 = vrot.slane %v229, 5
      %v1171 = vsel %vm1062, %v1169, %v1170
      %v1172 = vrot.slane %v1170, 4
      %v1173 = vrot.slane %v230, 5
      %v1174 = vsel %vm1062, %v1172, %v1173
      %s1175 = scalar_lea.vmem %s1, 16
      %v1176 = vld [vmem:[%s1175] sm:$0xf]
      %v1177 = vld [vmem:[%s1175 + $0x4] sm:$0xf]
      %v1178 = vunpack.c.l.b16 %v1066
      %v1179 = vunpack.c.l.b16 %v1069
      %v1180 = vunpack.c.l.b16 %v1073
      %v1181 = vunpack.c.l.b16 %v1076
      %v1182 = vunpack.c.l.b16 %v1080
      %v1183 = vunpack.c.l.b16 %v1083
      %v1184 = vunpack.c.l.b16 %v1087
      %v1185 = vunpack.c.l.b16 %v1090
      %v1186 = vunpack.c.l.b16 %v1094
      %v1187 = vunpack.c.l.b16 %v1097
      %v1188 = vunpack.c.l.b16 %v1101
      %v1189 = vunpack.c.l.b16 %v1104
      %v1190 = vunpack.c.l.b16 %v1108
      %v1191 = vunpack.c.l.b16 %v1111
      %v1192 = vunpack.c.l.b16 %v1115
      %v1193 = vunpack.c.l.b16 %v1118
      %v1194 = vunpack.c.l.b16 %v1122
      %v1195 = vunpack.c.l.b16 %v1125
      %v1196 = vunpack.c.l.b16 %v1129
      %v1197 = vunpack.c.l.b16 %v1132
      %v1198 = vunpack.c.l.b16 %v1136
      %v1199 = vunpack.c.l.b16 %v1139
      %v1200 = vunpack.c.l.b16 %v1143
      %v1201 = vunpack.c.l.b16 %v1146
      %v1202 = vunpack.c.l.b16 %v1150
      %v1203 = vunpack.c.l.b16 %v1153
      %v1204 = vunpack.c.l.b16 %v1157
      %v1205 = vunpack.c.l.b16 %v1160
      %v1206 = vunpack.c.l.b16 %v1164
      %v1207 = vunpack.c.l.b16 %v1167
      %v1208 = vunpack.c.l.b16 %v1171
      %v1209 = vunpack.c.l.b16 %v1174
      %v1210 = vpack.c.b16 %v1179, %v1178
      %v1211 = vpack.c.b16 %v1181, %v1180
      %v1212 = vpack.c.b16 %v1183, %v1182
      %v1213 = vpack.c.b16 %v1185, %v1184
      %v1214 = vpack.c.b16 %v1187, %v1186
      %v1215 = vpack.c.b16 %v1189, %v1188
      %v1216 = vpack.c.b16 %v1191, %v1190
      %v1217 = vpack.c.b16 %v1193, %v1192
      %v1218 = vpack.c.b16 %v1195, %v1194
      %v1219 = vpack.c.b16 %v1197, %v1196
      %v1220 = vpack.c.b16 %v1199, %v1198
      %v1221 = vpack.c.b16 %v1201, %v1200
      %v1222 = vpack.c.b16 %v1203, %v1202
      %v1223 = vpack.c.b16 %v1205, %v1204
      %v1224 = vpack.c.b16 %v1207, %v1206
      %v1225 = vpack.c.b16 %v1209, %v1208
      %v1228 = vunpack.c.l.b16 %v1176
      %v1229 = vunpack.c.l.b16 %v1177
      %v1230 = vpack.c.b16 %v1229, %v1228
      %v1233 = vsel %vm683, %v1210, 0
      %v1236 = vsel %vm683, %v1211, 0
      %v1239 = vsel %vm683, %v1212, 0
      %v1242 = vsel %vm683, %v1213, 0
      %v1245 = vsel %vm683, %v1214, 0
      %v1248 = vsel %vm683, %v1215, 0
      %v1251 = vsel %vm683, %v1216, 0
      %v1254 = vsel %vm683, %v1217, 0
      %v1257 = vsel %vm683, %v1218, 0
      %v1260 = vsel %vm683, %v1219, 0
      %v1263 = vsel %vm683, %v1220, 0
      %v1266 = vsel %vm683, %v1221, 0
      %v1269 = vsel %vm683, %v1222, 0
      %v1272 = vsel %vm683, %v1223, 0
      %v1275 = vsel %vm683, %v1224, 0
      %v1278 = vsel %vm683, %v1225, 0
      %1280 = vmatpush.bf16.msra.mxu0 0
      %1281 = vmatpush.bf16.msra.mxu0 0
      %1282 = vmatpush.bf16.msra.mxu0 0
      %1283 = vmatpush.bf16.msra.mxu0 0
      %1284 = vmatpush.bf16.msra.mxu0 0
      %1285 = vmatpush.bf16.msra.mxu0 0
      %1286 = vmatpush.bf16.msra.mxu0 0
      %1287 = vmatpush.bf16.msra.mxu0 %v1230
      %1288 = vmatmul.bf16.gmra.mxu0 %v1233
      %v1289 = vpop.f32.mrf.mxu0
      %v1290 = vadd.f32 0.0, %v1289
      %v1291 = vpop.f32.mrf.mxu0
      %v1292 = vadd.f32 0.0, %v1291
      %1293 = vmatmul.bf16.gmra.mxu0 %v1236
      %v1294 = vpop.f32.mrf.mxu0
      %v1295 = vadd.f32 0.0, %v1294
      %v1296 = vpop.f32.mrf.mxu0
      %v1297 = vadd.f32 0.0, %v1296
      %1298 = vmatmul.bf16.gmra.mxu0 %v1239
      %v1299 = vpop.f32.mrf.mxu0
      %v1300 = vadd.f32 0.0, %v1299
      %v1301 = vpop.f32.mrf.mxu0
      %v1302 = vadd.f32 0.0, %v1301
      %1303 = vmatmul.bf16.gmra.mxu0 %v1242
      %v1304 = vpop.f32.mrf.mxu0
      %v1305 = vadd.f32 0.0, %v1304
      %v1306 = vpop.f32.mrf.mxu0
      %v1307 = vadd.f32 0.0, %v1306
      %1308 = vmatmul.bf16.gmra.mxu0 %v1245
      %v1309 = vpop.f32.mrf.mxu0
      %v1310 = vadd.f32 0.0, %v1309
      %v1311 = vpop.f32.mrf.mxu0
      %v1312 = vadd.f32 0.0, %v1311
      %1313 = vmatmul.bf16.gmra.mxu0 %v1248
      %v1314 = vpop.f32.mrf.mxu0
      %v1315 = vadd.f32 0.0, %v1314
      %v1316 = vpop.f32.mrf.mxu0
      %v1317 = vadd.f32 0.0, %v1316
      %1318 = vmatmul.bf16.gmra.mxu0 %v1251
      %v1319 = vpop.f32.mrf.mxu0
      %v1320 = vadd.f32 0.0, %v1319
      %v1321 = vpop.f32.mrf.mxu0
      %v1322 = vadd.f32 0.0, %v1321
      %1323 = vmatmul.bf16.gmra.mxu0 %v1254
      %v1324 = vpop.f32.mrf.mxu0
      %v1325 = vadd.f32 0.0, %v1324
      %v1326 = vpop.f32.mrf.mxu0
      %v1327 = vadd.f32 0.0, %v1326
      %1328 = vmatmul.bf16.gmra.mxu0 %v1257
      %v1329 = vpop.f32.mrf.mxu0
      %v1330 = vadd.f32 0.0, %v1329
      %v1331 = vpop.f32.mrf.mxu0
      %v1332 = vadd.f32 0.0, %v1331
      %1333 = vmatmul.bf16.gmra.mxu0 %v1260
      %v1334 = vpop.f32.mrf.mxu0
      %v1335 = vadd.f32 0.0, %v1334
      %v1336 = vpop.f32.mrf.mxu0
      %v1337 = vadd.f32 0.0, %v1336
      %1338 = vmatmul.bf16.gmra.mxu0 %v1263
      %v1339 = vpop.f32.mrf.mxu0
      %v1340 = vadd.f32 0.0, %v1339
      %v1341 = vpop.f32.mrf.mxu0
      %v1342 = vadd.f32 0.0, %v1341
      %1343 = vmatmul.bf16.gmra.mxu0 %v1266
      %v1344 = vpop.f32.mrf.mxu0
      %v1345 = vadd.f32 0.0, %v1344
      %v1346 = vpop.f32.mrf.mxu0
      %v1347 = vadd.f32 0.0, %v1346
      %1348 = vmatmul.bf16.gmra.mxu0 %v1269
      %v1349 = vpop.f32.mrf.mxu0
      %v1350 = vadd.f32 0.0, %v1349
      %v1351 = vpop.f32.mrf.mxu0
      %v1352 = vadd.f32 0.0, %v1351
      %1353 = vmatmul.bf16.gmra.mxu0 %v1272
      %v1354 = vpop.f32.mrf.mxu0
      %v1355 = vadd.f32 0.0, %v1354
      %v1356 = vpop.f32.mrf.mxu0
      %v1357 = vadd.f32 0.0, %v1356
      %1358 = vmatmul.bf16.gmra.mxu0 %v1275
      %v1359 = vpop.f32.mrf.mxu0
      %v1360 = vadd.f32 0.0, %v1359
      %v1361 = vpop.f32.mrf.mxu0
      %v1362 = vadd.f32 0.0, %v1361
      %1363 = vmatmul.bf16.gmra.mxu0 %v1278
      %v1364 = vpop.f32.mrf.mxu0
      %v1365 = vadd.f32 0.0, %v1364
      %v1366 = vpop.f32.mrf.mxu0
      %v1367 = vadd.f32 0.0, %v1366
      %1368 = vdwg.mxu0
      %v1369 = vadd.f32 %v965, %v1290
      %v1370 = vadd.f32 %v967, %v1292
      %v1371 = vadd.f32 %v970, %v1295
      %v1372 = vadd.f32 %v972, %v1297
      %v1373 = vadd.f32 %v975, %v1300
      %v1374 = vadd.f32 %v977, %v1302
      %v1375 = vadd.f32 %v980, %v1305
      %v1376 = vadd.f32 %v982, %v1307
      %v1377 = vadd.f32 %v985, %v1310
      %v1378 = vadd.f32 %v987, %v1312
      %v1379 = vadd.f32 %v990, %v1315
      %v1380 = vadd.f32 %v992, %v1317
      %v1381 = vadd.f32 %v995, %v1320
      %v1382 = vadd.f32 %v997, %v1322
      %v1383 = vadd.f32 %v1000, %v1325
      %v1384 = vadd.f32 %v1002, %v1327
      %v1385 = vadd.f32 %v1005, %v1330
      %v1386 = vadd.f32 %v1007, %v1332
      %v1387 = vadd.f32 %v1010, %v1335
      %v1388 = vadd.f32 %v1012, %v1337
      %v1389 = vadd.f32 %v1015, %v1340
      %v1390 = vadd.f32 %v1017, %v1342
      %v1391 = vadd.f32 %v1020, %v1345
      %v1392 = vadd.f32 %v1022, %v1347
      %v1393 = vadd.f32 %v1025, %v1350
      %v1394 = vadd.f32 %v1027, %v1352
      %v1395 = vadd.f32 %v1030, %v1355
      %v1396 = vadd.f32 %v1032, %v1357
      %v1397 = vadd.f32 %v1035, %v1360
      %v1398 = vadd.f32 %v1037, %v1362
      %v1399 = vadd.f32 %v1040, %v1365
      %v1400 = vadd.f32 %v1042, %v1367
      %s1401 = scalar_lea.vmem %s1, 24
      %v1402 = vld [vmem:[%s1401] sm:$0xf]
      %v1403 = vld [vmem:[%s1401 + $0x4] sm:$0xf]
      %v1406 = vunpack.c.l.b16 %v231
      %v1407 = vunpack.c.l.b16 %v232
      %v1408 = vpack.c.b16 %v1407, %v1406
      %v1411 = vunpack.c.l.b16 %v1402
      %v1412 = vunpack.c.l.b16 %v1403
      %v1413 = vpack.c.b16 %v1412, %v1411
      %v1416 = vsel %vm683, %v1408, 0
      %1418 = vmatpush.bf16.msra.mxu0 0
      %1419 = vmatpush.bf16.msra.mxu0 0
      %1420 = vmatpush.bf16.msra.mxu0 0
      %1421 = vmatpush.bf16.msra.mxu0 0
      %1422 = vmatpush.bf16.msra.mxu0 0
      %1423 = vmatpush.bf16.msra.mxu0 0
      %1424 = vmatpush.bf16.msra.mxu0 0
      %1425 = vmatpush.bf16.msra.mxu0 %v1413
      %1426 = vmatmul.bf16.gmra.mxu0 %v911
      %v1427 = vpop.f32.mrf.mxu0
      %v1428 = vadd.f32 0.0, %v1427
      %v1429 = vpop.f32.mrf.mxu0
      %v1430 = vadd.f32 0.0, %v1429
      %1431 = vmatmul.bf16.gmra.mxu0 %v914
      %v1432 = vpop.f32.mrf.mxu0
      %v1433 = vadd.f32 0.0, %v1432
      %v1434 = vpop.f32.mrf.mxu0
      %v1435 = vadd.f32 0.0, %v1434
      %1436 = vmatmul.bf16.gmra.mxu0 %v917
      %v1437 = vpop.f32.mrf.mxu0
      %v1438 = vadd.f32 0.0, %v1437
      %v1439 = vpop.f32.mrf.mxu0
      %v1440 = vadd.f32 0.0, %v1439
      %1441 = vmatmul.bf16.gmra.mxu0 %v920
      %v1442 = vpop.f32.mrf.mxu0
      %v1443 = vadd.f32 0.0, %v1442
      %v1444 = vpop.f32.mrf.mxu0
      %v1445 = vadd.f32 0.0, %v1444
      %1446 = vmatmul.bf16.gmra.mxu0 %v923
      %v1447 = vpop.f32.mrf.mxu0
      %v1448 = vadd.f32 0.0, %v1447
      %v1449 = vpop.f32.mrf.mxu0
      %v1450 = vadd.f32 0.0, %v1449
      %1451 = vmatmul.bf16.gmra.mxu0 %v926
      %v1452 = vpop.f32.mrf.mxu0
      %v1453 = vadd.f32 0.0, %v1452
      %v1454 = vpop.f32.mrf.mxu0
      %v1455 = vadd.f32 0.0, %v1454
      %1456 = vmatmul.bf16.gmra.mxu0 %v929
      %v1457 = vpop.f32.mrf.mxu0
      %v1458 = vadd.f32 0.0, %v1457
      %v1459 = vpop.f32.mrf.mxu0
      %v1460 = vadd.f32 0.0, %v1459
      %1461 = vmatmul.bf16.gmra.mxu0 %v932
      %v1462 = vpop.f32.mrf.mxu0
      %v1463 = vadd.f32 0.0, %v1462
      %v1464 = vpop.f32.mrf.mxu0
      %v1465 = vadd.f32 0.0, %v1464
      %1466 = vmatmul.bf16.gmra.mxu0 %v935
      %v1467 = vpop.f32.mrf.mxu0
      %v1468 = vadd.f32 0.0, %v1467
      %v1469 = vpop.f32.mrf.mxu0
      %v1470 = vadd.f32 0.0, %v1469
      %1471 = vmatmul.bf16.gmra.mxu0 %v938
      %v1472 = vpop.f32.mrf.mxu0
      %v1473 = vadd.f32 0.0, %v1472
      %v1474 = vpop.f32.mrf.mxu0
      %v1475 = vadd.f32 0.0, %v1474
      %1476 = vmatmul.bf16.gmra.mxu0 %v941
      %v1477 = vpop.f32.mrf.mxu0
      %v1478 = vadd.f32 0.0, %v1477
      %v1479 = vpop.f32.mrf.mxu0
      %v1480 = vadd.f32 0.0, %v1479
      %1481 = vmatmul.bf16.gmra.mxu0 %v944
      %v1482 = vpop.f32.mrf.mxu0
      %v1483 = vadd.f32 0.0, %v1482
      %v1484 = vpop.f32.mrf.mxu0
      %v1485 = vadd.f32 0.0, %v1484
      %1486 = vmatmul.bf16.gmra.mxu0 %v947
      %v1487 = vpop.f32.mrf.mxu0
      %v1488 = vadd.f32 0.0, %v1487
      %v1489 = vpop.f32.mrf.mxu0
      %v1490 = vadd.f32 0.0, %v1489
      %1491 = vmatmul.bf16.gmra.mxu0 %v950
      %v1492 = vpop.f32.mrf.mxu0
      %v1493 = vadd.f32 0.0, %v1492
      %v1494 = vpop.f32.mrf.mxu0
      %v1495 = vadd.f32 0.0, %v1494
      %1496 = vmatmul.bf16.gmra.mxu0 %v953
      %v1497 = vpop.f32.mrf.mxu0
      %v1498 = vadd.f32 0.0, %v1497
      %v1499 = vpop.f32.mrf.mxu0
      %v1500 = vadd.f32 0.0, %v1499
      %1501 = vmatmul.bf16.gmra.mxu0 %v1416
      %v1502 = vpop.f32.mrf.mxu0
      %v1503 = vadd.f32 0.0, %v1502
      %v1504 = vpop.f32.mrf.mxu0
      %v1505 = vadd.f32 0.0, %v1504
      %1506 = vdwg.mxu0
      %v1507 = vadd.f32 %v1369, %v1428
      %v1508 = vadd.f32 %v1370, %v1430
      %v1509 = vadd.f32 %v1371, %v1433
      %v1510 = vadd.f32 %v1372, %v1435
      %v1511 = vadd.f32 %v1373, %v1438
      %v1512 = vadd.f32 %v1374, %v1440
      %v1513 = vadd.f32 %v1375, %v1443
      %v1514 = vadd.f32 %v1376, %v1445
      %v1515 = vadd.f32 %v1377, %v1448
      %v1516 = vadd.f32 %v1378, %v1450
      %v1517 = vadd.f32 %v1379, %v1453
      %v1518 = vadd.f32 %v1380, %v1455
      %v1519 = vadd.f32 %v1381, %v1458
      %v1520 = vadd.f32 %v1382, %v1460
      %v1521 = vadd.f32 %v1383, %v1463
      %v1522 = vadd.f32 %v1384, %v1465
      %v1523 = vadd.f32 %v1385, %v1468
      %v1524 = vadd.f32 %v1386, %v1470
      %v1525 = vadd.f32 %v1387, %v1473
      %v1526 = vadd.f32 %v1388, %v1475
      %v1527 = vadd.f32 %v1389, %v1478
      %v1528 = vadd.f32 %v1390, %v1480
      %v1529 = vadd.f32 %v1391, %v1483
      %v1530 = vadd.f32 %v1392, %v1485
      %v1531 = vadd.f32 %v1393, %v1488
      %v1532 = vadd.f32 %v1394, %v1490
      %v1533 = vadd.f32 %v1395, %v1493
      %v1534 = vadd.f32 %v1396, %v1495
      %v1535 = vadd.f32 %v1397, %v1498
      %v1536 = vadd.f32 %v1398, %v1500
      %v1537 = vadd.f32 %v1399, %v1503
      %v1538 = vadd.f32 %v1400, %v1505
      %v1540 = vshrl.u32 %v231, 16
      %v1542 = vrot.slane %v1540, 4
      %v1543 = vshll.u32 %v231, 16
      %v1545 = vrot.slane %v1543, 5
      %v1546 = vor.u32 %v1542, %v1545
      %v1547 = vrot.slane %v1546, 4
      %v1549 = vshll.u32 %v232, 16
      %v1551 = vrot.slane %v1549, 5
      %v1552 = vsel %vm241, %v1547, %v1551
      %v1553 = vshrl.u32 %v232, 16
      %v1555 = vrot.slane %v1553, 4
      %v1556 = vor.u32 %v1555, %v1551
      %v1557 = vrot.slane %v1556, 4
      %v1559 = vshll.u32 %v233, 16
      %v1561 = vrot.slane %v1559, 5
      %v1562 = vsel %vm241, %v1557, %v1561
      %s1563 = scalar_lea.vmem %s1, 32
      %v1564 = vld [vmem:[%s1563] sm:$0xf]
      %v1565 = vld [vmem:[%s1563 + $0x4] sm:$0xf]
      %v1566 = vunpack.c.l.b16 %v1552
      %v1567 = vunpack.c.l.b16 %v1562
      %v1568 = vpack.c.b16 %v1567, %v1566
      %v1571 = vunpack.c.l.b16 %v1564
      %v1572 = vunpack.c.l.b16 %v1565
      %v1573 = vpack.c.b16 %v1572, %v1571
      %v1576 = vsel %vm683, %v1568, 0
      %1578 = vmatpush.bf16.msra.mxu0 0
      %1579 = vmatpush.bf16.msra.mxu0 0
      %1580 = vmatpush.bf16.msra.mxu0 0
      %1581 = vmatpush.bf16.msra.mxu0 0
      %1582 = vmatpush.bf16.msra.mxu0 0
      %1583 = vmatpush.bf16.msra.mxu0 0
      %1584 = vmatpush.bf16.msra.mxu0 0
      %1585 = vmatpush.bf16.msra.mxu0 %v1573
      %1586 = vmatmul.bf16.gmra.mxu0 %v688
      %v1587 = vpop.f32.mrf.mxu0
      %v1588 = vadd.f32 0.0, %v1587
      %v1589 = vpop.f32.mrf.mxu0
      %v1590 = vadd.f32 0.0, %v1589
      %1591 = vmatmul.bf16.gmra.mxu0 %v691
      %v1592 = vpop.f32.mrf.mxu0
      %v1593 = vadd.f32 0.0, %v1592
      %v1594 = vpop.f32.mrf.mxu0
      %v1595 = vadd.f32 0.0, %v1594
      %1596 = vmatmul.bf16.gmra.mxu0 %v694
      %v1597 = vpop.f32.mrf.mxu0
      %v1598 = vadd.f32 0.0, %v1597
      %v1599 = vpop.f32.mrf.mxu0
      %v1600 = vadd.f32 0.0, %v1599
      %1601 = vmatmul.bf16.gmra.mxu0 %v697
      %v1602 = vpop.f32.mrf.mxu0
      %v1603 = vadd.f32 0.0, %v1602
      %v1604 = vpop.f32.mrf.mxu0
      %v1605 = vadd.f32 0.0, %v1604
      %1606 = vmatmul.bf16.gmra.mxu0 %v700
      %v1607 = vpop.f32.mrf.mxu0
      %v1608 = vadd.f32 0.0, %v1607
      %v1609 = vpop.f32.mrf.mxu0
      %v1610 = vadd.f32 0.0, %v1609
      %1611 = vmatmul.bf16.gmra.mxu0 %v703
      %v1612 = vpop.f32.mrf.mxu0
      %v1613 = vadd.f32 0.0, %v1612
      %v1614 = vpop.f32.mrf.mxu0
      %v1615 = vadd.f32 0.0, %v1614
      %1616 = vmatmul.bf16.gmra.mxu0 %v706
      %v1617 = vpop.f32.mrf.mxu0
      %v1618 = vadd.f32 0.0, %v1617
      %v1619 = vpop.f32.mrf.mxu0
      %v1620 = vadd.f32 0.0, %v1619
      %1621 = vmatmul.bf16.gmra.mxu0 %v709
      %v1622 = vpop.f32.mrf.mxu0
      %v1623 = vadd.f32 0.0, %v1622
      %v1624 = vpop.f32.mrf.mxu0
      %v1625 = vadd.f32 0.0, %v1624
      %1626 = vmatmul.bf16.gmra.mxu0 %v712
      %v1627 = vpop.f32.mrf.mxu0
      %v1628 = vadd.f32 0.0, %v1627
      %v1629 = vpop.f32.mrf.mxu0
      %v1630 = vadd.f32 0.0, %v1629
      %1631 = vmatmul.bf16.gmra.mxu0 %v715
      %v1632 = vpop.f32.mrf.mxu0
      %v1633 = vadd.f32 0.0, %v1632
      %v1634 = vpop.f32.mrf.mxu0
      %v1635 = vadd.f32 0.0, %v1634
      %1636 = vmatmul.bf16.gmra.mxu0 %v718
      %v1637 = vpop.f32.mrf.mxu0
      %v1638 = vadd.f32 0.0, %v1637
      %v1639 = vpop.f32.mrf.mxu0
      %v1640 = vadd.f32 0.0, %v1639
      %1641 = vmatmul.bf16.gmra.mxu0 %v721
      %v1642 = vpop.f32.mrf.mxu0
      %v1643 = vadd.f32 0.0, %v1642
      %v1644 = vpop.f32.mrf.mxu0
      %v1645 = vadd.f32 0.0, %v1644
      %1646 = vmatmul.bf16.gmra.mxu0 %v724
      %v1647 = vpop.f32.mrf.mxu0
      %v1648 = vadd.f32 0.0, %v1647
      %v1649 = vpop.f32.mrf.mxu0
      %v1650 = vadd.f32 0.0, %v1649
      %1651 = vmatmul.bf16.gmra.mxu0 %v727
      %v1652 = vpop.f32.mrf.mxu0
      %v1653 = vadd.f32 0.0, %v1652
      %v1654 = vpop.f32.mrf.mxu0
      %v1655 = vadd.f32 0.0, %v1654
      %1656 = vmatmul.bf16.gmra.mxu0 %v730
      %v1657 = vpop.f32.mrf.mxu0
      %v1658 = vadd.f32 0.0, %v1657
      %v1659 = vpop.f32.mrf.mxu0
      %v1660 = vadd.f32 0.0, %v1659
      %1661 = vmatmul.bf16.gmra.mxu0 %v1576
      %v1662 = vpop.f32.mrf.mxu0
      %v1663 = vadd.f32 0.0, %v1662
      %v1664 = vpop.f32.mrf.mxu0
      %v1665 = vadd.f32 0.0, %v1664
      %1666 = vdwg.mxu0
      %v1667 = vadd.f32 %v1507, %v1588
      %v1668 = vadd.f32 %v1508, %v1590
      %v1669 = vadd.f32 %v1509, %v1593
      %v1670 = vadd.f32 %v1510, %v1595
      %v1671 = vadd.f32 %v1511, %v1598
      %v1672 = vadd.f32 %v1512, %v1600
      %v1673 = vadd.f32 %v1513, %v1603
      %v1674 = vadd.f32 %v1514, %v1605
      %v1675 = vadd.f32 %v1515, %v1608
      %v1676 = vadd.f32 %v1516, %v1610
      %v1677 = vadd.f32 %v1517, %v1613
      %v1678 = vadd.f32 %v1518, %v1615
      %v1679 = vadd.f32 %v1519, %v1618
      %v1680 = vadd.f32 %v1520, %v1620
      %v1681 = vadd.f32 %v1521, %v1623
      %v1682 = vadd.f32 %v1522, %v1625
      %v1683 = vadd.f32 %v1523, %v1628
      %v1684 = vadd.f32 %v1524, %v1630
      %v1685 = vadd.f32 %v1525, %v1633
      %v1686 = vadd.f32 %v1526, %v1635
      %v1687 = vadd.f32 %v1527, %v1638
      %v1688 = vadd.f32 %v1528, %v1640
      %v1689 = vadd.f32 %v1529, %v1643
      %v1690 = vadd.f32 %v1530, %v1645
      %v1691 = vadd.f32 %v1531, %v1648
      %v1692 = vadd.f32 %v1532, %v1650
      %v1693 = vadd.f32 %v1533, %v1653
      %v1694 = vadd.f32 %v1534, %v1655
      %v1695 = vadd.f32 %v1535, %v1658
      %v1696 = vadd.f32 %v1536, %v1660
      %v1697 = vadd.f32 %v1537, %v1663
      %v1698 = vadd.f32 %v1538, %v1665
      %v1700 = vrot.slane %v231, 5
      %v1701 = vrot.slane %v1700, 4
      %v1702 = vrot.slane %v232, 5
      %v1703 = vsel %vm1062, %v1701, %v1702
      %v1704 = vrot.slane %v1702, 4
      %v1705 = vrot.slane %v233, 5
      %v1706 = vsel %vm1062, %v1704, %v1705
      %s1707 = scalar_lea.vmem %s1, 40
      %v1708 = vld [vmem:[%s1707] sm:$0xf]
      %v1709 = vld [vmem:[%s1707 + $0x4] sm:$0xf]
      %v1710 = vunpack.c.l.b16 %v1703
      %v1711 = vunpack.c.l.b16 %v1706
      %v1712 = vpack.c.b16 %v1711, %v1710
      %v1715 = vunpack.c.l.b16 %v1708
      %v1716 = vunpack.c.l.b16 %v1709
      %v1717 = vpack.c.b16 %v1716, %v1715
      %v1720 = vsel %vm683, %v1712, 0
      %1722 = vmatpush.bf16.msra.mxu0 0
      %1723 = vmatpush.bf16.msra.mxu0 0
      %1724 = vmatpush.bf16.msra.mxu0 0
      %1725 = vmatpush.bf16.msra.mxu0 0
      %1726 = vmatpush.bf16.msra.mxu0 0
      %1727 = vmatpush.bf16.msra.mxu0 0
      %1728 = vmatpush.bf16.msra.mxu0 0
      %1729 = vmatpush.bf16.msra.mxu0 %v1717
      %1730 = vmatmul.bf16.gmra.mxu0 %v1236
      %v1731 = vpop.f32.mrf.mxu0
      %v1732 = vadd.f32 0.0, %v1731
      %v1733 = vpop.f32.mrf.mxu0
      %v1734 = vadd.f32 0.0, %v1733
      %1735 = vmatmul.bf16.gmra.mxu0 %v1239
      %v1736 = vpop.f32.mrf.mxu0
      %v1737 = vadd.f32 0.0, %v1736
      %v1738 = vpop.f32.mrf.mxu0
      %v1739 = vadd.f32 0.0, %v1738
      %1740 = vmatmul.bf16.gmra.mxu0 %v1242
      %v1741 = vpop.f32.mrf.mxu0
      %v1742 = vadd.f32 0.0, %v1741
      %v1743 = vpop.f32.mrf.mxu0
      %v1744 = vadd.f32 0.0, %v1743
      %1745 = vmatmul.bf16.gmra.mxu0 %v1245
      %v1746 = vpop.f32.mrf.mxu0
      %v1747 = vadd.f32 0.0, %v1746
      %v1748 = vpop.f32.mrf.mxu0
      %v1749 = vadd.f32 0.0, %v1748
      %1750 = vmatmul.bf16.gmra.mxu0 %v1248
      %v1751 = vpop.f32.mrf.mxu0
      %v1752 = vadd.f32 0.0, %v1751
      %v1753 = vpop.f32.mrf.mxu0
      %v1754 = vadd.f32 0.0, %v1753
      %1755 = vmatmul.bf16.gmra.mxu0 %v1251
      %v1756 = vpop.f32.mrf.mxu0
      %v1757 = vadd.f32 0.0, %v1756
      %v1758 = vpop.f32.mrf.mxu0
      %v1759 = vadd.f32 0.0, %v1758
      %1760 = vmatmul.bf16.gmra.mxu0 %v1254
      %v1761 = vpop.f32.mrf.mxu0
      %v1762 = vadd.f32 0.0, %v1761
      %v1763 = vpop.f32.mrf.mxu0
      %v1764 = vadd.f32 0.0, %v1763
      %1765 = vmatmul.bf16.gmra.mxu0 %v1257
      %v1766 = vpop.f32.mrf.mxu0
      %v1767 = vadd.f32 0.0, %v1766
      %v1768 = vpop.f32.mrf.mxu0
      %v1769 = vadd.f32 0.0, %v1768
      %1770 = vmatmul.bf16.gmra.mxu0 %v1260
      %v1771 = vpop.f32.mrf.mxu0
      %v1772 = vadd.f32 0.0, %v1771
      %v1773 = vpop.f32.mrf.mxu0
      %v1774 = vadd.f32 0.0, %v1773
      %1775 = vmatmul.bf16.gmra.mxu0 %v1263
      %v1776 = vpop.f32.mrf.mxu0
      %v1777 = vadd.f32 0.0, %v1776
      %v1778 = vpop.f32.mrf.mxu0
      %v1779 = vadd.f32 0.0, %v1778
      %1780 = vmatmul.bf16.gmra.mxu0 %v1266
      %v1781 = vpop.f32.mrf.mxu0
      %v1782 = vadd.f32 0.0, %v1781
      %v1783 = vpop.f32.mrf.mxu0
      %v1784 = vadd.f32 0.0, %v1783
      %1785 = vmatmul.bf16.gmra.mxu0 %v1269
      %v1786 = vpop.f32.mrf.mxu0
      %v1787 = vadd.f32 0.0, %v1786
      %v1788 = vpop.f32.mrf.mxu0
      %v1789 = vadd.f32 0.0, %v1788
      %1790 = vmatmul.bf16.gmra.mxu0 %v1272
      %v1791 = vpop.f32.mrf.mxu0
      %v1792 = vadd.f32 0.0, %v1791
      %v1793 = vpop.f32.mrf.mxu0
      %v1794 = vadd.f32 0.0, %v1793
      %1795 = vmatmul.bf16.gmra.mxu0 %v1275
      %v1796 = vpop.f32.mrf.mxu0
      %v1797 = vadd.f32 0.0, %v1796
      %v1798 = vpop.f32.mrf.mxu0
      %v1799 = vadd.f32 0.0, %v1798
      %1800 = vmatmul.bf16.gmra.mxu0 %v1278
      %v1801 = vpop.f32.mrf.mxu0
      %v1802 = vadd.f32 0.0, %v1801
      %v1803 = vpop.f32.mrf.mxu0
      %v1804 = vadd.f32 0.0, %v1803
      %1805 = vmatmul.bf16.gmra.mxu0 %v1720
      %v1806 = vpop.f32.mrf.mxu0
      %v1807 = vadd.f32 0.0, %v1806
      %v1808 = vpop.f32.mrf.mxu0
      %v1809 = vadd.f32 0.0, %v1808
      %1810 = vdwg.mxu0
      %v1811 = vadd.f32 %v1667, %v1732
      %v1812 = vadd.f32 %v1668, %v1734
      %v1813 = vadd.f32 %v1669, %v1737
      %v1814 = vadd.f32 %v1670, %v1739
      %v1815 = vadd.f32 %v1671, %v1742
      %v1816 = vadd.f32 %v1672, %v1744
      %v1817 = vadd.f32 %v1673, %v1747
      %v1818 = vadd.f32 %v1674, %v1749
      %v1819 = vadd.f32 %v1675, %v1752
      %v1820 = vadd.f32 %v1676, %v1754
      %v1821 = vadd.f32 %v1677, %v1757
      %v1822 = vadd.f32 %v1678, %v1759
      %v1823 = vadd.f32 %v1679, %v1762
      %v1824 = vadd.f32 %v1680, %v1764
      %v1825 = vadd.f32 %v1681, %v1767
      %v1826 = vadd.f32 %v1682, %v1769
      %v1827 = vadd.f32 %v1683, %v1772
      %v1828 = vadd.f32 %v1684, %v1774
      %v1829 = vadd.f32 %v1685, %v1777
      %v1830 = vadd.f32 %v1686, %v1779
      %v1831 = vadd.f32 %v1687, %v1782
      %v1832 = vadd.f32 %v1688, %v1784
      %v1833 = vadd.f32 %v1689, %v1787
      %v1834 = vadd.f32 %v1690, %v1789
      %v1835 = vadd.f32 %v1691, %v1792
      %v1836 = vadd.f32 %v1692, %v1794
      %v1837 = vadd.f32 %v1693, %v1797
      %v1838 = vadd.f32 %v1694, %v1799
      %v1839 = vadd.f32 %v1695, %v1802
      %v1840 = vadd.f32 %v1696, %v1804
      %v1841 = vadd.f32 %v1697, %v1807
      %v1842 = vadd.f32 %v1698, %v1809
      %s1843 = scalar_lea.vmem %s1, 48
      %v1844 = vld [vmem:[%s1843] sm:$0xf]
      %v1845 = vld [vmem:[%s1843 + $0x4] sm:$0xf]
      %v1848 = vunpack.c.l.b16 %v234
      %v1849 = vunpack.c.l.b16 %v235
      %v1850 = vpack.c.b16 %v1849, %v1848
      %v1853 = vunpack.c.l.b16 %v1844
      %v1854 = vunpack.c.l.b16 %v1845
      %v1855 = vpack.c.b16 %v1854, %v1853
      %v1858 = vsel %vm683, %v1850, 0
      %1860 = vmatpush.bf16.msra.mxu0 0
      %1861 = vmatpush.bf16.msra.mxu0 0
      %1862 = vmatpush.bf16.msra.mxu0 0
      %1863 = vmatpush.bf16.msra.mxu0 0
      %1864 = vmatpush.bf16.msra.mxu0 0
      %1865 = vmatpush.bf16.msra.mxu0 0
      %1866 = vmatpush.bf16.msra.mxu0 0
      %1867 = vmatpush.bf16.msra.mxu0 %v1855
      %1868 = vmatmul.bf16.gmra.mxu0 %v914
      %v1869 = vpop.f32.mrf.mxu0
      %v1870 = vadd.f32 0.0, %v1869
      %v1871 = vpop.f32.mrf.mxu0
      %v1872 = vadd.f32 0.0, %v1871
      %1873 = vmatmul.bf16.gmra.mxu0 %v917
      %v1874 = vpop.f32.mrf.mxu0
      %v1875 = vadd.f32 0.0, %v1874
      %v1876 = vpop.f32.mrf.mxu0
      %v1877 = vadd.f32 0.0, %v1876
      %1878 = vmatmul.bf16.gmra.mxu0 %v920
      %v1879 = vpop.f32.mrf.mxu0
      %v1880 = vadd.f32 0.0, %v1879
      %v1881 = vpop.f32.mrf.mxu0
      %v1882 = vadd.f32 0.0, %v1881
      %1883 = vmatmul.bf16.gmra.mxu0 %v923
      %v1884 = vpop.f32.mrf.mxu0
      %v1885 = vadd.f32 0.0, %v1884
      %v1886 = vpop.f32.mrf.mxu0
      %v1887 = vadd.f32 0.0, %v1886
      %1888 = vmatmul.bf16.gmra.mxu0 %v926
      %v1889 = vpop.f32.mrf.mxu0
      %v1890 = vadd.f32 0.0, %v1889
      %v1891 = vpop.f32.mrf.mxu0
      %v1892 = vadd.f32 0.0, %v1891
      %1893 = vmatmul.bf16.gmra.mxu0 %v929
      %v1894 = vpop.f32.mrf.mxu0
      %v1895 = vadd.f32 0.0, %v1894
      %v1896 = vpop.f32.mrf.mxu0
      %v1897 = vadd.f32 0.0, %v1896
      %1898 = vmatmul.bf16.gmra.mxu0 %v932
      %v1899 = vpop.f32.mrf.mxu0
      %v1900 = vadd.f32 0.0, %v1899
      %v1901 = vpop.f32.mrf.mxu0
      %v1902 = vadd.f32 0.0, %v1901
      %1903 = vmatmul.bf16.gmra.mxu0 %v935
      %v1904 = vpop.f32.mrf.mxu0
      %v1905 = vadd.f32 0.0, %v1904
      %v1906 = vpop.f32.mrf.mxu0
      %v1907 = vadd.f32 0.0, %v1906
      %1908 = vmatmul.bf16.gmra.mxu0 %v938
      %v1909 = vpop.f32.mrf.mxu0
      %v1910 = vadd.f32 0.0, %v1909
      %v1911 = vpop.f32.mrf.mxu0
      %v1912 = vadd.f32 0.0, %v1911
      %1913 = vmatmul.bf16.gmra.mxu0 %v941
      %v1914 = vpop.f32.mrf.mxu0
      %v1915 = vadd.f32 0.0, %v1914
      %v1916 = vpop.f32.mrf.mxu0
      %v1917 = vadd.f32 0.0, %v1916
      %1918 = vmatmul.bf16.gmra.mxu0 %v944
      %v1919 = vpop.f32.mrf.mxu0
      %v1920 = vadd.f32 0.0, %v1919
      %v1921 = vpop.f32.mrf.mxu0
      %v1922 = vadd.f32 0.0, %v1921
      %1923 = vmatmul.bf16.gmra.mxu0 %v947
      %v1924 = vpop.f32.mrf.mxu0
      %v1925 = vadd.f32 0.0, %v1924
      %v1926 = vpop.f32.mrf.mxu0
      %v1927 = vadd.f32 0.0, %v1926
      %1928 = vmatmul.bf16.gmra.mxu0 %v950
      %v1929 = vpop.f32.mrf.mxu0
      %v1930 = vadd.f32 0.0, %v1929
      %v1931 = vpop.f32.mrf.mxu0
      %v1932 = vadd.f32 0.0, %v1931
      %1933 = vmatmul.bf16.gmra.mxu0 %v953
      %v1934 = vpop.f32.mrf.mxu0
      %v1935 = vadd.f32 0.0, %v1934
      %v1936 = vpop.f32.mrf.mxu0
      %v1937 = vadd.f32 0.0, %v1936
      %1938 = vmatmul.bf16.gmra.mxu0 %v1416
      %v1939 = vpop.f32.mrf.mxu0
      %v1940 = vadd.f32 0.0, %v1939
      %v1941 = vpop.f32.mrf.mxu0
      %v1942 = vadd.f32 0.0, %v1941
      %1943 = vmatmul.bf16.gmra.mxu0 %v1858
      %v1944 = vpop.f32.mrf.mxu0
      %v1945 = vadd.f32 0.0, %v1944
      %v1946 = vpop.f32.mrf.mxu0
      %v1947 = vadd.f32 0.0, %v1946
      %1948 = vdwg.mxu0
      %v1949 = vadd.f32 %v1811, %v1870
      %v1950 = vadd.f32 %v1812, %v1872
      %v1951 = vadd.f32 %v1813, %v1875
      %v1952 = vadd.f32 %v1814, %v1877
      %v1953 = vadd.f32 %v1815, %v1880
      %v1954 = vadd.f32 %v1816, %v1882
      %v1955 = vadd.f32 %v1817, %v1885
      %v1956 = vadd.f32 %v1818, %v1887
      %v1957 = vadd.f32 %v1819, %v1890
      %v1958 = vadd.f32 %v1820, %v1892
      %v1959 = vadd.f32 %v1821, %v1895
      %v1960 = vadd.f32 %v1822, %v1897
      %v1961 = vadd.f32 %v1823, %v1900
      %v1962 = vadd.f32 %v1824, %v1902
      %v1963 = vadd.f32 %v1825, %v1905
      %v1964 = vadd.f32 %v1826, %v1907
      %v1965 = vadd.f32 %v1827, %v1910
      %v1966 = vadd.f32 %v1828, %v1912
      %v1967 = vadd.f32 %v1829, %v1915
      %v1968 = vadd.f32 %v1830, %v1917
      %v1969 = vadd.f32 %v1831, %v1920
      %v1970 = vadd.f32 %v1832, %v1922
      %v1971 = vadd.f32 %v1833, %v1925
      %v1972 = vadd.f32 %v1834, %v1927
      %v1973 = vadd.f32 %v1835, %v1930
      %v1974 = vadd.f32 %v1836, %v1932
      %v1975 = vadd.f32 %v1837, %v1935
      %v1976 = vadd.f32 %v1838, %v1937
      %v1977 = vadd.f32 %v1839, %v1940
      %v1978 = vadd.f32 %v1840, %v1942
      %v1979 = vadd.f32 %v1841, %v1945
      %v1980 = vadd.f32 %v1842, %v1947
      %v1982 = vshrl.u32 %v234, 16
      %v1984 = vrot.slane %v1982, 4
      %v1985 = vshll.u32 %v234, 16
      %v1987 = vrot.slane %v1985, 5
      %v1988 = vor.u32 %v1984, %v1987
      %v1989 = vrot.slane %v1988, 4
      %v1991 = vshll.u32 %v235, 16
      %v1993 = vrot.slane %v1991, 5
      %v1994 = vsel %vm241, %v1989, %v1993
      %v1995 = vshrl.u32 %v235, 16
      %v1997 = vrot.slane %v1995, 4
      %v1998 = vor.u32 %v1997, %v1993
      %v1999 = vrot.slane %v1998, 4
      %v2001 = vshll.u32 %v236, 16
      %v2003 = vrot.slane %v2001, 5
      %v2004 = vsel %vm241, %v1999, %v2003
      %s2005 = scalar_lea.vmem %s1, 56
      %v2006 = vld [vmem:[%s2005] sm:$0xf]
      %v2007 = vld [vmem:[%s2005 + $0x4] sm:$0xf]
      %v2008 = vunpack.c.l.b16 %v1994
      %v2009 = vunpack.c.l.b16 %v2004
      %v2010 = vpack.c.b16 %v2009, %v2008
      %v2013 = vunpack.c.l.b16 %v2006
      %v2014 = vunpack.c.l.b16 %v2007
      %v2015 = vpack.c.b16 %v2014, %v2013
      %v2018 = vsel %vm683, %v2010, 0
      %2020 = vmatpush.bf16.msra.mxu0 0
      %2021 = vmatpush.bf16.msra.mxu0 0
      %2022 = vmatpush.bf16.msra.mxu0 0
      %2023 = vmatpush.bf16.msra.mxu0 0
      %2024 = vmatpush.bf16.msra.mxu0 0
      %2025 = vmatpush.bf16.msra.mxu0 0
      %2026 = vmatpush.bf16.msra.mxu0 0
      %2027 = vmatpush.bf16.msra.mxu0 %v2015
      %2028 = vmatmul.bf16.gmra.mxu0 %v691
      %v2029 = vpop.f32.mrf.mxu0
      %v2030 = vadd.f32 0.0, %v2029
      %v2031 = vpop.f32.mrf.mxu0
      %v2032 = vadd.f32 0.0, %v2031
      %2033 = vmatmul.bf16.gmra.mxu0 %v694
      %v2034 = vpop.f32.mrf.mxu0
      %v2035 = vadd.f32 0.0, %v2034
      %v2036 = vpop.f32.mrf.mxu0
      %v2037 = vadd.f32 0.0, %v2036
      %2038 = vmatmul.bf16.gmra.mxu0 %v697
      %v2039 = vpop.f32.mrf.mxu0
      %v2040 = vadd.f32 0.0, %v2039
      %v2041 = vpop.f32.mrf.mxu0
      %v2042 = vadd.f32 0.0, %v2041
      %2043 = vmatmul.bf16.gmra.mxu0 %v700
      %v2044 = vpop.f32.mrf.mxu0
      %v2045 = vadd.f32 0.0, %v2044
      %v2046 = vpop.f32.mrf.mxu0
      %v2047 = vadd.f32 0.0, %v2046
      %2048 = vmatmul.bf16.gmra.mxu0 %v703
      %v2049 = vpop.f32.mrf.mxu0
      %v2050 = vadd.f32 0.0, %v2049
      %v2051 = vpop.f32.mrf.mxu0
      %v2052 = vadd.f32 0.0, %v2051
      %2053 = vmatmul.bf16.gmra.mxu0 %v706
      %v2054 = vpop.f32.mrf.mxu0
      %v2055 = vadd.f32 0.0, %v2054
      %v2056 = vpop.f32.mrf.mxu0
      %v2057 = vadd.f32 0.0, %v2056
      %2058 = vmatmul.bf16.gmra.mxu0 %v709
      %v2059 = vpop.f32.mrf.mxu0
      %v2060 = vadd.f32 0.0, %v2059
      %v2061 = vpop.f32.mrf.mxu0
      %v2062 = vadd.f32 0.0, %v2061
      %2063 = vmatmul.bf16.gmra.mxu0 %v712
      %v2064 = vpop.f32.mrf.mxu0
      %v2065 = vadd.f32 0.0, %v2064
      %v2066 = vpop.f32.mrf.mxu0
      %v2067 = vadd.f32 0.0, %v2066
      %2068 = vmatmul.bf16.gmra.mxu0 %v715
      %v2069 = vpop.f32.mrf.mxu0
      %v2070 = vadd.f32 0.0, %v2069
      %v2071 = vpop.f32.mrf.mxu0
      %v2072 = vadd.f32 0.0, %v2071
      %2073 = vmatmul.bf16.gmra.mxu0 %v718
      %v2074 = vpop.f32.mrf.mxu0
      %v2075 = vadd.f32 0.0, %v2074
      %v2076 = vpop.f32.mrf.mxu0
      %v2077 = vadd.f32 0.0, %v2076
      %2078 = vmatmul.bf16.gmra.mxu0 %v721
      %v2079 = vpop.f32.mrf.mxu0
      %v2080 = vadd.f32 0.0, %v2079
      %v2081 = vpop.f32.mrf.mxu0
      %v2082 = vadd.f32 0.0, %v2081
      %2083 = vmatmul.bf16.gmra.mxu0 %v724
      %v2084 = vpop.f32.mrf.mxu0
      %v2085 = vadd.f32 0.0, %v2084
      %v2086 = vpop.f32.mrf.mxu0
      %v2087 = vadd.f32 0.0, %v2086
      %2088 = vmatmul.bf16.gmra.mxu0 %v727
      %v2089 = vpop.f32.mrf.mxu0
      %v2090 = vadd.f32 0.0, %v2089
      %v2091 = vpop.f32.mrf.mxu0
      %v2092 = vadd.f32 0.0, %v2091
      %2093 = vmatmul.bf16.gmra.mxu0 %v730
      %v2094 = vpop.f32.mrf.mxu0
      %v2095 = vadd.f32 0.0, %v2094
      %v2096 = vpop.f32.mrf.mxu0
      %v2097 = vadd.f32 0.0, %v2096
      %2098 = vmatmul.bf16.gmra.mxu0 %v1576
      %v2099 = vpop.f32.mrf.mxu0
      %v2100 = vadd.f32 0.0, %v2099
      %v2101 = vpop.f32.mrf.mxu0
      %v2102 = vadd.f32 0.0, %v2101
      %2103 = vmatmul.bf16.gmra.mxu0 %v2018
      %v2104 = vpop.f32.mrf.mxu0
      %v2105 = vadd.f32 0.0, %v2104
      %v2106 = vpop.f32.mrf.mxu0
      %v2107 = vadd.f32 0.0, %v2106
      %2108 = vdwg.mxu0
      %v2109 = vadd.f32 %v1949, %v2030
      %v2110 = vadd.f32 %v1950, %v2032
      %v2111 = vadd.f32 %v1951, %v2035
      %v2112 = vadd.f32 %v1952, %v2037
      %v2113 = vadd.f32 %v1953, %v2040
      %v2114 = vadd.f32 %v1954, %v2042
      %v2115 = vadd.f32 %v1955, %v2045
      %v2116 = vadd.f32 %v1956, %v2047
      %v2117 = vadd.f32 %v1957, %v2050
      %v2118 = vadd.f32 %v1958, %v2052
      %v2119 = vadd.f32 %v1959, %v2055
      %v2120 = vadd.f32 %v1960, %v2057
      %v2121 = vadd.f32 %v1961, %v2060
      %v2122 = vadd.f32 %v1962, %v2062
      %v2123 = vadd.f32 %v1963, %v2065
      %v2124 = vadd.f32 %v1964, %v2067
      %v2125 = vadd.f32 %v1965, %v2070
      %v2126 = vadd.f32 %v1966, %v2072
      %v2127 = vadd.f32 %v1967, %v2075
      %v2128 = vadd.f32 %v1968, %v2077
      %v2129 = vadd.f32 %v1969, %v2080
      %v2130 = vadd.f32 %v1970, %v2082
      %v2131 = vadd.f32 %v1971, %v2085
      %v2132 = vadd.f32 %v1972, %v2087
      %v2133 = vadd.f32 %v1973, %v2090
      %v2134 = vadd.f32 %v1974, %v2092
      %v2135 = vadd.f32 %v1975, %v2095
      %v2136 = vadd.f32 %v1976, %v2097
      %v2137 = vadd.f32 %v1977, %v2100
      %v2138 = vadd.f32 %v1978, %v2102
      %v2139 = vadd.f32 %v1979, %v2105
      %v2140 = vadd.f32 %v1980, %v2107
      %v2142 = vrot.slane %v234, 5
      %v2143 = vrot.slane %v2142, 4
      %v2144 = vrot.slane %v235, 5
      %v2145 = vsel %vm1062, %v2143, %v2144
      %v2146 = vrot.slane %v2144, 4
      %v2147 = vrot.slane %v236, 5
      %v2148 = vsel %vm1062, %v2146, %v2147
      %s2149 = scalar_lea.vmem %s1, 64
      %v2150 = vld [vmem:[%s2149] sm:$0xf]
      %v2151 = vld [vmem:[%s2149 + $0x4] sm:$0xf]
      %v2152 = vunpack.c.l.b16 %v2145
      %v2153 = vunpack.c.l.b16 %v2148
      %v2154 = vpack.c.b16 %v2153, %v2152
      %v2157 = vunpack.c.l.b16 %v2150
      %v2158 = vunpack.c.l.b16 %v2151
      %v2159 = vpack.c.b16 %v2158, %v2157
      %v2162 = vsel %vm683, %v2154, 0
      %2164 = vmatpush.bf16.msra.mxu0 0
      %2165 = vmatpush.bf16.msra.mxu0 0
      %2166 = vmatpush.bf16.msra.mxu0 0
      %2167 = vmatpush.bf16.msra.mxu0 0
      %2168 = vmatpush.bf16.msra.mxu0 0
      %2169 = vmatpush.bf16.msra.mxu0 0
      %2170 = vmatpush.bf16.msra.mxu0 0
      %2171 = vmatpush.bf16.msra.mxu0 %v2159
      %2172 = vmatmul.bf16.gmra.mxu0 %v1239
      %v2173 = vpop.f32.mrf.mxu0
      %v2174 = vadd.f32 0.0, %v2173
      %v2175 = vpop.f32.mrf.mxu0
      %v2176 = vadd.f32 0.0, %v2175
      %2177 = vmatmul.bf16.gmra.mxu0 %v1242
      %v2178 = vpop.f32.mrf.mxu0
      %v2179 = vadd.f32 0.0, %v2178
      %v2180 = vpop.f32.mrf.mxu0
      %v2181 = vadd.f32 0.0, %v2180
      %2182 = vmatmul.bf16.gmra.mxu0 %v1245
      %v2183 = vpop.f32.mrf.mxu0
      %v2184 = vadd.f32 0.0, %v2183
      %v2185 = vpop.f32.mrf.mxu0
      %v2186 = vadd.f32 0.0, %v2185
      %2187 = vmatmul.bf16.gmra.mxu0 %v1248
      %v2188 = vpop.f32.mrf.mxu0
      %v2189 = vadd.f32 0.0, %v2188
      %v2190 = vpop.f32.mrf.mxu0
      %v2191 = vadd.f32 0.0, %v2190
      %2192 = vmatmul.bf16.gmra.mxu0 %v1251
      %v2193 = vpop.f32.mrf.mxu0
      %v2194 = vadd.f32 0.0, %v2193
      %v2195 = vpop.f32.mrf.mxu0
      %v2196 = vadd.f32 0.0, %v2195
      %2197 = vmatmul.bf16.gmra.mxu0 %v1254
      %v2198 = vpop.f32.mrf.mxu0
      %v2199 = vadd.f32 0.0, %v2198
      %v2200 = vpop.f32.mrf.mxu0
      %v2201 = vadd.f32 0.0, %v2200
      %2202 = vmatmul.bf16.gmra.mxu0 %v1257
      %v2203 = vpop.f32.mrf.mxu0
      %v2204 = vadd.f32 0.0, %v2203
      %v2205 = vpop.f32.mrf.mxu0
      %v2206 = vadd.f32 0.0, %v2205
      %2207 = vmatmul.bf16.gmra.mxu0 %v1260
      %v2208 = vpop.f32.mrf.mxu0
      %v2209 = vadd.f32 0.0, %v2208
      %v2210 = vpop.f32.mrf.mxu0
      %v2211 = vadd.f32 0.0, %v2210
      %2212 = vmatmul.bf16.gmra.mxu0 %v1263
      %v2213 = vpop.f32.mrf.mxu0
      %v2214 = vadd.f32 0.0, %v2213
      %v2215 = vpop.f32.mrf.mxu0
      %v2216 = vadd.f32 0.0, %v2215
      %2217 = vmatmul.bf16.gmra.mxu0 %v1266
      %v2218 = vpop.f32.mrf.mxu0
      %v2219 = vadd.f32 0.0, %v2218
      %v2220 = vpop.f32.mrf.mxu0
      %v2221 = vadd.f32 0.0, %v2220
      %2222 = vmatmul.bf16.gmra.mxu0 %v1269
      %v2223 = vpop.f32.mrf.mxu0
      %v2224 = vadd.f32 0.0, %v2223
      %v2225 = vpop.f32.mrf.mxu0
      %v2226 = vadd.f32 0.0, %v2225
      %2227 = vmatmul.bf16.gmra.mxu0 %v1272
      %v2228 = vpop.f32.mrf.mxu0
      %v2229 = vadd.f32 0.0, %v2228
      %v2230 = vpop.f32.mrf.mxu0
      %v2231 = vadd.f32 0.0, %v2230
      %2232 = vmatmul.bf16.gmra.mxu0 %v1275
      %v2233 = vpop.f32.mrf.mxu0
      %v2234 = vadd.f32 0.0, %v2233
      %v2235 = vpop.f32.mrf.mxu0
      %v2236 = vadd.f32 0.0, %v2235
      %2237 = vmatmul.bf16.gmra.mxu0 %v1278
      %v2238 = vpop.f32.mrf.mxu0
      %v2239 = vadd.f32 0.0, %v2238
      %v2240 = vpop.f32.mrf.mxu0
      %v2241 = vadd.f32 0.0, %v2240
      %2242 = vmatmul.bf16.gmra.mxu0 %v1720
      %v2243 = vpop.f32.mrf.mxu0
      %v2244 = vadd.f32 0.0, %v2243
      %v2245 = vpop.f32.mrf.mxu0
      %v2246 = vadd.f32 0.0, %v2245
      %2247 = vmatmul.bf16.gmra.mxu0 %v2162
      %v2248 = vpop.f32.mrf.mxu0
      %v2249 = vadd.f32 0.0, %v2248
      %v2250 = vpop.f32.mrf.mxu0
      %v2251 = vadd.f32 0.0, %v2250
      %2252 = vdwg.mxu0
      %v2253 = vadd.f32 %v2109, %v2174
      %v2254 = vadd.f32 %v2110, %v2176
      %v2255 = vadd.f32 %v2111, %v2179
      %v2256 = vadd.f32 %v2112, %v2181
      %v2257 = vadd.f32 %v2113, %v2184
      %v2258 = vadd.f32 %v2114, %v2186
      %v2259 = vadd.f32 %v2115, %v2189
      %v2260 = vadd.f32 %v2116, %v2191
      %v2261 = vadd.f32 %v2117, %v2194
      %v2262 = vadd.f32 %v2118, %v2196
      %v2263 = vadd.f32 %v2119, %v2199
      %v2264 = vadd.f32 %v2120, %v2201
      %v2265 = vadd.f32 %v2121, %v2204
      %v2266 = vadd.f32 %v2122, %v2206
      %v2267 = vadd.f32 %v2123, %v2209
      %v2268 = vadd.f32 %v2124, %v2211
      %v2269 = vadd.f32 %v2125, %v2214
      %v2270 = vadd.f32 %v2126, %v2216
      %v2271 = vadd.f32 %v2127, %v2219
      %v2272 = vadd.f32 %v2128, %v2221
      %v2273 = vadd.f32 %v2129, %v2224
      %v2274 = vadd.f32 %v2130, %v2226
      %v2275 = vadd.f32 %v2131, %v2229
      %v2276 = vadd.f32 %v2132, %v2231
      %v2277 = vadd.f32 %v2133, %v2234
      %v2278 = vadd.f32 %v2134, %v2236
      %v2279 = vadd.f32 %v2135, %v2239
      %v2280 = vadd.f32 %v2136, %v2241
      %v2281 = vadd.f32 %v2137, %v2244
      %v2282 = vadd.f32 %v2138, %v2246
      %v2283 = vadd.f32 %v2139, %v2249
      %v2284 = vadd.f32 %v2140, %v2251
      %v2285 = vadd.f32 %v2253, %v2254
      %v2286 = vadd.f32 %v2285, %v2255
      %v2287 = vadd.f32 %v2286, %v2256
      %v2288 = vadd.f32 %v2287, %v2257
      %v2289 = vadd.f32 %v2288, %v2258
      %v2290 = vadd.f32 %v2289, %v2259
      %v2291 = vadd.f32 %v2290, %v2260
      %v2292 = vadd.f32 %v2291, %v2261
      %v2293 = vadd.f32 %v2292, %v2262
      %v2294 = vadd.f32 %v2293, %v2263
      %v2295 = vadd.f32 %v2294, %v2264
      %v2296 = vadd.f32 %v2295, %v2265
      %v2297 = vadd.f32 %v2296, %v2266
      %v2298 = vadd.f32 %v2297, %v2267
      %v2299 = vadd.f32 %v2298, %v2268
      %v2300 = vadd.f32 %v2299, %v2269
      %v2301 = vadd.f32 %v2300, %v2270
      %v2302 = vadd.f32 %v2301, %v2271
      %v2303 = vadd.f32 %v2302, %v2272
      %v2304 = vadd.f32 %v2303, %v2273
      %v2305 = vadd.f32 %v2304, %v2274
      %v2306 = vadd.f32 %v2305, %v2275
      %v2307 = vadd.f32 %v2306, %v2276
      %v2308 = vadd.f32 %v2307, %v2277
      %v2309 = vadd.f32 %v2308, %v2278
      %v2310 = vadd.f32 %v2309, %v2279
      %v2311 = vadd.f32 %v2310, %v2280
      %v2312 = vadd.f32 %v2311, %v2281
      %v2313 = vadd.f32 %v2312, %v2282
      %v2314 = vadd.f32 %v2313, %v2283
      %v2315 = vadd.f32 %v2314, %v2284
      %v2316 = vrot.slane %v2315, 4
      %v2317 = vadd.f32 %v2315, %v2316
      %v2318 = vrot.slane %v2317, 2
      %v2319 = vadd.f32 %v2317, %v2318
      %v2320 = vrot.slane %v2319, 1
      %v2321 = vadd.f32 %v2319, %v2320
      %v2322 = vmul.f32 %v2253, %v2253
      %v2323 = vmul.f32 %v2254, %v2254
      %v2324 = vmul.f32 %v2255, %v2255
      %v2325 = vmul.f32 %v2256, %v2256
      %v2326 = vmul.f32 %v2257, %v2257
      %v2327 = vmul.f32 %v2258, %v2258
      %v2328 = vmul.f32 %v2259, %v2259
      %v2329 = vmul.f32 %v2260, %v2260
      %v2330 = vmul.f32 %v2261, %v2261
      %v2331 = vmul.f32 %v2262, %v2262
      %v2332 = vmul.f32 %v2263, %v2263
      %v2333 = vmul.f32 %v2264, %v2264
      %v2334 = vmul.f32 %v2265, %v2265
      %v2335 = vmul.f32 %v2266, %v2266
      %v2336 = vmul.f32 %v2267, %v2267
      %v2337 = vmul.f32 %v2268, %v2268
      %v2338 = vmul.f32 %v2269, %v2269
      %v2339 = vmul.f32 %v2270, %v2270
      %v2340 = vmul.f32 %v2271, %v2271
      %v2341 = vmul.f32 %v2272, %v2272
      %v2342 = vmul.f32 %v2273, %v2273
      %v2343 = vmul.f32 %v2274, %v2274
      %v2344 = vmul.f32 %v2275, %v2275
      %v2345 = vmul.f32 %v2276, %v2276
      %v2346 = vmul.f32 %v2277, %v2277
      %v2347 = vmul.f32 %v2278, %v2278
      %v2348 = vmul.f32 %v2279, %v2279
      %v2349 = vmul.f32 %v2280, %v2280
      %v2350 = vmul.f32 %v2281, %v2281
      %v2351 = vmul.f32 %v2282, %v2282
      %v2352 = vmul.f32 %v2283, %v2283
      %v2353 = vmul.f32 %v2284, %v2284
      %v2354 = vadd.f32 %v2322, %v2323
      %v2355 = vadd.f32 %v2354, %v2324
      %v2356 = vadd.f32 %v2355, %v2325
      %v2357 = vadd.f32 %v2356, %v2326
      %v2358 = vadd.f32 %v2357, %v2327
      %v2359 = vadd.f32 %v2358, %v2328
      %v2360 = vadd.f32 %v2359, %v2329
      %v2361 = vadd.f32 %v2360, %v2330
      %v2362 = vadd.f32 %v2361, %v2331
      %v2363 = vadd.f32 %v2362, %v2332
      %v2364 = vadd.f32 %v2363, %v2333
      %v2365 = vadd.f32 %v2364, %v2334
      %v2366 = vadd.f32 %v2365, %v2335
      %v2367 = vadd.f32 %v2366, %v2336
      %v2368 = vadd.f32 %v2367, %v2337
      %v2369 = vadd.f32 %v2368, %v2338
      %v2370 = vadd.f32 %v2369, %v2339
      %v2371 = vadd.f32 %v2370, %v2340
      %v2372 = vadd.f32 %v2371, %v2341
      %v2373 = vadd.f32 %v2372, %v2342
      %v2374 = vadd.f32 %v2373, %v2343
      %v2375 = vadd.f32 %v2374, %v2344
      %v2376 = vadd.f32 %v2375, %v2345
      %v2377 = vadd.f32 %v2376, %v2346
      %v2378 = vadd.f32 %v2377, %v2347
      %v2379 = vadd.f32 %v2378, %v2348
      %v2380 = vadd.f32 %v2379, %v2349
      %v2381 = vadd.f32 %v2380, %v2350
      %v2382 = vadd.f32 %v2381, %v2351
      %v2383 = vadd.f32 %v2382, %v2352
      %v2384 = vadd.f32 %v2383, %v2353
      %v2385 = vrot.slane %v2384, 4
      %v2386 = vadd.f32 %v2384, %v2385
      %v2387 = vrot.slane %v2386, 2
      %v2388 = vadd.f32 %v2386, %v2387
      %v2389 = vrot.slane %v2388, 1
      %v2390 = vadd.f32 %v2388, %v2389
      %vm2391 = vcmask 1040384
      %v2392 = vsel %vm2391, %v2321, %v2390
      %2393 = vst [vmem:[%s181] sm:$0x3] %v2392
      %v2394 = vpack.c.bf16 %v2253, %v2253
      %v2395 = vpack.c.bf16 %v2254, %v2254
      %v2396 = vpack.c.bf16 %v2255, %v2255
      %v2397 = vpack.c.bf16 %v2256, %v2256
      %v2398 = vpack.c.bf16 %v2257, %v2257
      %v2399 = vpack.c.bf16 %v2258, %v2258
      %v2400 = vpack.c.bf16 %v2259, %v2259
      %v2401 = vpack.c.bf16 %v2260, %v2260
      %v2402 = vpack.c.bf16 %v2261, %v2261
      %v2403 = vpack.c.bf16 %v2262, %v2262
      %v2404 = vpack.c.bf16 %v2263, %v2263
      %v2405 = vpack.c.bf16 %v2264, %v2264
      %v2406 = vpack.c.bf16 %v2265, %v2265
      %v2407 = vpack.c.bf16 %v2266, %v2266
      %v2408 = vpack.c.bf16 %v2267, %v2267
      %v2409 = vpack.c.bf16 %v2268, %v2268
      %v2410 = vpack.c.bf16 %v2269, %v2269
      %v2411 = vpack.c.bf16 %v2270, %v2270
      %v2412 = vpack.c.bf16 %v2271, %v2271
      %v2413 = vpack.c.bf16 %v2272, %v2272
      %v2414 = vpack.c.bf16 %v2273, %v2273
      %v2415 = vpack.c.bf16 %v2274, %v2274
      %v2416 = vpack.c.bf16 %v2275, %v2275
      %v2417 = vpack.c.bf16 %v2276, %v2276
      %v2418 = vpack.c.bf16 %v2277, %v2277
      %v2419 = vpack.c.bf16 %v2278, %v2278
      %v2420 = vpack.c.bf16 %v2279, %v2279
      %v2421 = vpack.c.bf16 %v2280, %v2280
      %v2422 = vpack.c.bf16 %v2281, %v2281
      %v2423 = vpack.c.bf16 %v2282, %v2282
      %v2424 = vpack.c.bf16 %v2283, %v2283
      %v2425 = vpack.c.bf16 %v2284, %v2284
      %2426 = vst [vmem:[%s177] sm:$0xf] %v2394
      %2427 = vst [vmem:[%s177 + $0x4] sm:$0xf] %v2395
      %2428 = vst [vmem:[%s177 + $0x8] sm:$0xf] %v2396
      %2429 = vst [vmem:[%s177 + $0xc] sm:$0xf] %v2397
      %2430 = vst [vmem:[%s177 + $0x10] sm:$0xf] %v2398
      %2431 = vst [vmem:[%s177 + $0x14] sm:$0xf] %v2399
      %2432 = vst [vmem:[%s177 + $0x18] sm:$0xf] %v2400
      %2433 = vst [vmem:[%s177 + $0x1c] sm:$0xf] %v2401
      %2434 = vst [vmem:[%s177 + $0x20] sm:$0xf] %v2402
      %2435 = vst [vmem:[%s177 + $0x24] sm:$0xf] %v2403
      %2436 = vst [vmem:[%s177 + $0x28] sm:$0xf] %v2404
      %2437 = vst [vmem:[%s177 + $0x2c] sm:$0xf] %v2405
      %2438 = vst [vmem:[%s177 + $0x30] sm:$0xf] %v2406
      %2439 = vst [vmem:[%s177 + $0x34] sm:$0xf] %v2407
      %2440 = vst [vmem:[%s177 + $0x38] sm:$0xf] %v2408
      %2441 = vst [vmem:[%s177 + $0x3c] sm:$0xf] %v2409
      %2442 = vst [vmem:[%s177 + $0x40] sm:$0xf] %v2410
      %2443 = vst [vmem:[%s177 + $0x44] sm:$0xf] %v2411
      %2444 = vst [vmem:[%s177 + $0x48] sm:$0xf] %v2412
      %2445 = vst [vmem:[%s177 + $0x4c] sm:$0xf] %v2413
      %2446 = vst [vmem:[%s177 + $0x50] sm:$0xf] %v2414
      %2447 = vst [vmem:[%s177 + $0x54] sm:$0xf] %v2415
      %2448 = vst [vmem:[%s177 + $0x58] sm:$0xf] %v2416
      %2449 = vst [vmem:[%s177 + $0x5c] sm:$0xf] %v2417
      %2450 = vst [vmem:[%s177 + $0x60] sm:$0xf] %v2418
      %2451 = vst [vmem:[%s177 + $0x64] sm:$0xf] %v2419
      %2452 = vst [vmem:[%s177 + $0x68] sm:$0xf] %v2420
      %2453 = vst [vmem:[%s177 + $0x6c] sm:$0xf] %v2421
      %2454 = vst [vmem:[%s177 + $0x70] sm:$0xf] %v2422
      %2455 = vst [vmem:[%s177 + $0x74] sm:$0xf] %v2423
      %2456 = vst [vmem:[%s177 + $0x78] sm:$0xf] %v2424
      %2457 = vst [vmem:[%s177 + $0x7c] sm:$0xf] %v2425
      %p2458 = scmp.lt.s32.totalorder %s15, 1
      %s2459 = scalar_select %p2458, %s15, 1
      %s2460 = smul.addr %s2459, 32
      %s2461 = smul.addr %s2460, 4
      %s2462 = scalar_lea.vmem %s2, %s2461
      %p2463 = scmp.lt.s32.totalorder %s15, 1
      %s2464 = scalar_select %p2463, %s15, 1
      %s2465 = smul.addr %s2464, 2
      %s2466 = scalar_lea.vmem %s3, %s2465
      // Predicated region
      $region29: #{plain_block_forward.3} parent=27 // pred_check
        %p2467 = pneg %p80
      $region30: #{plain_block_forward.3} parent=27 // pred_check_branch
        %2469 = sbr.rel (%p2467) target = $region32
      $region31: #{plain_block_forward.3} parent=27 // pred_region
        _
      $region32: #{plain_block_forward.3} parent=27 // pred_fallthru
        _
      // Predicated region
      $region33: #{plain_block_forward.3} parent=27 // pred_check
        %p2470 = pneg %p106
      $region34: #{plain_block_forward.3} parent=27 // pred_check_branch
        %2472 = sbr.rel (%p2470) target = $region36
      $region35: #{plain_block_forward.3} parent=27 // pred_region
        _
      $region36: #{plain_block_forward.3} parent=27 // pred_fallthru
        _
    $region28: #{plain_block_forward.3} parent=5 // pred_fallthru
      _
    %p2473 = scmp.le.s32.totalorder 2, %s10
    // Predicated region
    $region37: #{plain_block_forward.3} parent=5 // pred_check
      %p2474 = pneg %p2473
    $region38: #{plain_block_forward.3} parent=5 // pred_check_branch
      %2476 = sbr.rel (%p2474) target = $region40
    $region39: #{plain_block_forward.3} parent=5 // pred_region
      %s2477 = ssub.s32 %s10, 2
      // Predicated region
      $region41: #{plain_block_forward.3} parent=39 // pred_check
        %p2478 = pneg %p86
      $region42: #{plain_block_forward.3} parent=39 // pred_check_branch
        %2480 = sbr.rel (%p2478) target = $region44
      $region43: #{plain_block_forward.3} parent=39 // pred_region
        %p2481 = scmp.lt.s32.totalorder %s16, 1
        %s2482 = scalar_select %p2481, %s16, 1
        %s2483 = smul.addr %s2482, 32
        %s2484 = smul.addr %s2483, 4
        %s2485 = scalar_lea.vmem %s2, %s2484
      $region44: #{plain_block_forward.3} parent=39 // pred_fallthru
        _
      // Predicated region
      $region45: #{plain_block_forward.3} parent=39 // pred_check
        %p2486 = pneg %p112
      $region46: #{plain_block_forward.3} parent=39 // pred_check_branch
        %2488 = sbr.rel (%p2486) target = $region48
      $region47: #{plain_block_forward.3} parent=39 // pred_region
        %p2489 = scmp.lt.s32.totalorder %s16, 1
        %s2490 = scalar_select %p2489, %s16, 1
        %s2491 = smul.addr %s2490, 2
        %s2492 = scalar_lea.vmem %s3, %s2491
      $region48: #{plain_block_forward.3} parent=39 // pred_fallthru
        _
    $region40: #{plain_block_forward.3} parent=5 // pred_fallthru
      _
  $region6: #{plain_block_forward.3} parent=0 // loop_footer
    %s14 = sadd.s32 1, %s10
  $region7: #{plain_block_forward.3} parent=0 // loop_footer_branch
    %9 = sbr.rel target = $region3
  $region8: #{plain_block_forward.3} parent=0 // loop_exit
    _

// kernel: plain_block_forward.4
$region0: #{plain_block_forward.4}
  #allocation0 [shape = 'u32[]', space=smem, size = 0x4, offset = 0x4, fixed_abs, tag = 'smem constant byte address 0x4 - core index']
  #allocation1 [shape = 'u32[72,128]{1,0:T(1,128)}', space=vmem, size = 0x9000, scoped, tag = 'internal scratch']
  %s0 = inlined_call_operand.vmem [shape: bf16[2,18,18,128], index: 0, kind: input, shape index: {}]
  %s1 = inlined_call_operand.vmem [shape: bf16[9,128,128], index: 1, kind: input, shape index: {}]
  %s2 = inlined_call_operand.vmem [shape: f32[1,128], index: 2, kind: input, shape index: {}]
  %s3 = inlined_call_operand.vmem [shape: f32[1,128], index: 3, kind: input, shape index: {}]
  %s4 = inlined_call_operand.vmem [shape: f32[2,16,16,128], index: 4, kind: output, shape index: {0}]
  %s5 = inlined_call_operand.vmem [shape: f32[2,2,128], index: 5, kind: output, shape index: {1}]
  %6 = xla_tuple %s4, %s5
  %s7 = sld [smem:[#allocation0]]
  $region57: #{plain_block_forward.4} parent=0
    _
  %s9 = ssub.s32 1, %s7
  %s10 = scalar_select 0, %s9, %s7
  loop: start=0, step=1, limit=4
  $region2: #{plain_block_forward.4} parent=0 // loop_pre_header
    _
  $region3: #{plain_block_forward.4} parent=0 // loop_header
    %s12 = sphi 0, %s16
    %p13 = scmp.ge.s32.totalorder %s12, 4
    %s22 = sphi 0, %s24
    %s25 = sphi 0, %s22
    %s26 = sphi 0, %s25
    %s42 = sphi 0, %s26
    %s46 = sphi 0, %s46
    %s48 = sphi 0, %s46
    %s49 = sphi 0, %s48
    %s63 = sphi 0, %s49
    %s67 = sphi 0, %s67
    %s69 = sphi 0, %s67
    %s70 = sphi 0, %s69
    %s84 = sphi 0, %s70
    %s88 = sphi 0, %s88
    %s90 = sphi 0, %s88
    %s91 = sphi 0, %s90
    %s105 = sphi 0, %s91
    %s111 = sphi 0, %s113
    %s114 = sphi 0, %s111
    %s115 = sphi 0, %s114
    %s131 = sphi 0, %s115
    %s137 = sphi 0, %s139
    %s140 = sphi 0, %s137
    %s141 = sphi 0, %s140
    %s157 = sphi 0, %s141
  $region4: #{plain_block_forward.4} parent=0 // loop_header_branch
    %15 = sbr.rel (%p13) target = $region8
  $region5: #{plain_block_forward.4} parent=0 // loop_body
    %s17 = ssub.s32 %s12, 1
    %s18 = ssub.s32 %s12, 2
    %s19 = sadd.s32 %s12, 1
    %s20 = ssub.s32 %s12, %s19
    %p21 = scmp.eq.s32.totalorder %s20, 0
    %s23 = sadd.s32 %s22, 1
    %s24 = scalar_select %p21, %s22, %s23
    %p27 = pneg %p21
    %p28 = scmp.eq.s32.totalorder %s12, 1
    %p29 = por %p27, %p28
    %p30 = scmp.ne.s32.totalorder %s22, %s25
    %p31 = scmp.eq.s32.totalorder %s12, 0
    %p32 = por %p30, %p31
    %p33 = scmp.ne.s32.totalorder %s22, %s25
    %p34 = scmp.eq.s32.totalorder %s17, 1
    %p35 = por %p33, %p34
    %p36 = scmp.ne.s32.totalorder %s25, %s26
    %p37 = scmp.eq.s32.totalorder %s17, 0
    %p38 = por %p36, %p37
    %p39 = scmp.ne.s32.totalorder %s25, %s26
    %p40 = scmp.eq.s32.totalorder %s18, 1
    %p41 = por %p39, %p40
    %p43 = scmp.ne.s32.totalorder %s26, %s42
    %p44 = scmp.eq.s32.totalorder %s18, 0
    %p45 = por %p43, %p44
    %s47 = sadd.s32 %s46, 1
    %p50 = scmp.eq.s32.totalorder %s12, 1
    %p51 = scmp.ne.s32.totalorder %s46, %s48
    %p52 = scmp.eq.s32.totalorder %s12, 0
    %p53 = por %p51, %p52
    %p54 = scmp.ne.s32.totalorder %s46, %s48
    %p55 = scmp.eq.s32.totalorder %s17, 1
    %p56 = por %p54, %p55
    %p57 = scmp.ne.s32.totalorder %s48, %s49
    %p58 = scmp.eq.s32.totalorder %s17, 0
    %p59 = por %p57, %p58
    %p60 = scmp.ne.s32.totalorder %s48, %s49
    %p61 = scmp.eq.s32.totalorder %s18, 1
    %p62 = por %p60, %p61
    %p64 = scmp.ne.s32.totalorder %s49, %s63
    %p65 = scmp.eq.s32.totalorder %s18, 0
    %p66 = por %p64, %p65
    %s68 = sadd.s32 %s67, 1
    %p71 = scmp.eq.s32.totalorder %s12, 1
    %p72 = scmp.ne.s32.totalorder %s67, %s69
    %p73 = scmp.eq.s32.totalorder %s12, 0
    %p74 = por %p72, %p73
    %p75 = scmp.ne.s32.totalorder %s67, %s69
    %p76 = scmp.eq.s32.totalorder %s17, 1
    %p77 = por %p75, %p76
    %p78 = scmp.ne.s32.totalorder %s69, %s70
    %p79 = scmp.eq.s32.totalorder %s17, 0
    %p80 = por %p78, %p79
    %p81 = scmp.ne.s32.totalorder %s69, %s70
    %p82 = scmp.eq.s32.totalorder %s18, 1
    %p83 = por %p81, %p82
    %p85 = scmp.ne.s32.totalorder %s70, %s84
    %p86 = scmp.eq.s32.totalorder %s18, 0
    %p87 = por %p85, %p86
    %s89 = sadd.s32 %s88, 1
    %p92 = scmp.eq.s32.totalorder %s12, 1
    %p93 = scmp.ne.s32.totalorder %s88, %s90
    %p94 = scmp.eq.s32.totalorder %s12, 0
    %p95 = por %p93, %p94
    %p96 = scmp.ne.s32.totalorder %s88, %s90
    %p97 = scmp.eq.s32.totalorder %s17, 1
    %p98 = por %p96, %p97
    %p99 = scmp.ne.s32.totalorder %s90, %s91
    %p100 = scmp.eq.s32.totalorder %s17, 0
    %p101 = por %p99, %p100
    %p102 = scmp.ne.s32.totalorder %s90, %s91
    %p103 = scmp.eq.s32.totalorder %s18, 1
    %p104 = por %p102, %p103
    %p106 = scmp.ne.s32.totalorder %s91, %s105
    %p107 = scmp.eq.s32.totalorder %s18, 0
    %p108 = por %p106, %p107
    %s109 = ssub.s32 %s12, %s19
    %p110 = scmp.eq.s32.totalorder %s109, 0
    %s112 = sadd.s32 %s111, 1
    %s113 = scalar_select %p110, %s111, %s112
    %p116 = pneg %p110
    %p117 = scmp.eq.s32.totalorder %s12, 1
    %p118 = por %p116, %p117
    %p119 = scmp.ne.s32.totalorder %s111, %s114
    %p120 = scmp.eq.s32.totalorder %s12, 0
    %p121 = por %p119, %p120
    %p122 = scmp.ne.s32.totalorder %s111, %s114
    %p123 = scmp.eq.s32.totalorder %s17, 1
    %p124 = por %p122, %p123
    %p125 = scmp.ne.s32.totalorder %s114, %s115
    %p126 = scmp.eq.s32.totalorder %s17, 0
    %p127 = por %p125, %p126
    %p128 = scmp.ne.s32.totalorder %s114, %s115
    %p129 = scmp.eq.s32.totalorder %s18, 1
    %p130 = por %p128, %p129
    %p132 = scmp.ne.s32.totalorder %s115, %s131
    %p133 = scmp.eq.s32.totalorder %s18, 0
    %p134 = por %p132, %p133
    %s135 = ssub.s32 %s12, %s19
    %p136 = scmp.eq.s32.totalorder %s135, 0
    %s138 = sadd.s32 %s137, 1
    %s139 = scalar_select %p136, %s137, %s138
    %p142 = pneg %p136
    %p143 = scmp.eq.s32.totalorder %s12, 1
    %p144 = por %p142, %p143
    %p145 = scmp.ne.s32.totalorder %s137, %s140
    %p146 = scmp.eq.s32.totalorder %s12, 0
    %p147 = por %p145, %p146
    %p148 = scmp.ne.s32.totalorder %s137, %s140
    %p149 = scmp.eq.s32.totalorder %s17, 1
    %p150 = por %p148, %p149
    %p151 = scmp.ne.s32.totalorder %s140, %s141
    %p152 = scmp.eq.s32.totalorder %s17, 0
    %p153 = por %p151, %p152
    %p154 = scmp.ne.s32.totalorder %s140, %s141
    %p155 = scmp.eq.s32.totalorder %s18, 1
    %p156 = por %p154, %p155
    %p158 = scmp.ne.s32.totalorder %s141, %s157
    %p159 = scmp.eq.s32.totalorder %s18, 0
    %p160 = por %p158, %p159
    %p161 = scmp.le.s32.totalorder 1, %s12
    %p162 = scmp.lt.s32.totalorder %s12, 3
    %p163 = pnand %p161, %p162
    %p164 = pneg %p163
    // Predicated region
    $region9: #{plain_block_forward.4} parent=5 // pred_check
      _
    $region10: #{plain_block_forward.4} parent=5 // pred_check_branch
      %166 = sbr.rel (%p163) target = $region12
    $region11: #{plain_block_forward.4} parent=5 // pred_region
      %s167 = ssub.s32 %s12, 1
      // Predicated region
      $region13: #{plain_block_forward.4} parent=11 // pred_check
        %p168 = pneg %p59
      $region14: #{plain_block_forward.4} parent=11 // pred_check_branch
        %170 = sbr.rel (%p168) target = $region16
      $region15: #{plain_block_forward.4} parent=11 // pred_region
        _
      $region16: #{plain_block_forward.4} parent=11 // pred_fallthru
        _
      // Predicated region
      $region17: #{plain_block_forward.4} parent=11 // pred_check
        %p171 = pneg %p80
      $region18: #{plain_block_forward.4} parent=11 // pred_check_branch
        %173 = sbr.rel (%p171) target = $region20
      $region19: #{plain_block_forward.4} parent=11 // pred_region
        _
      $region20: #{plain_block_forward.4} parent=11 // pred_fallthru
        _
      // Predicated region
      $region21: #{plain_block_forward.4} parent=11 // pred_check
        %p174 = pneg %p101
      $region22: #{plain_block_forward.4} parent=11 // pred_check_branch
        %176 = sbr.rel (%p174) target = $region24
      $region23: #{plain_block_forward.4} parent=11 // pred_region
        _
      $region24: #{plain_block_forward.4} parent=11 // pred_fallthru
        _
    $region12: #{plain_block_forward.4} parent=5 // pred_fallthru
      _
    %p177 = scmp.lt.s32.totalorder %s12, 2
    // Predicated region
    $region25: #{plain_block_forward.4} parent=5 // pred_check
      %p178 = pneg %p177
    $region26: #{plain_block_forward.4} parent=5 // pred_check_branch
      %180 = sbr.rel (%p178) target = $region28
    $region27: #{plain_block_forward.4} parent=5 // pred_region
      // Predicated region
      $region29: #{plain_block_forward.4} parent=27 // pred_check
        %p181 = pneg %p32
      $region30: #{plain_block_forward.4} parent=27 // pred_check_branch
        %183 = sbr.rel (%p181) target = $region32
      $region31: #{plain_block_forward.4} parent=27 // pred_region
        %p184 = scmp.lt.s32.totalorder %s12, 1
        %s185 = scalar_select %p184, %s12, 1
        %s186 = smul.addr %s185, 54
        %s187 = smul.addr %s186, 4
        %s188 = scalar_lea.vmem %s0, %s187
      $region32: #{plain_block_forward.4} parent=27 // pred_fallthru
        _
    $region28: #{plain_block_forward.4} parent=5 // pred_fallthru
      _
    %p189 = scmp.le.s32.totalorder 1, %s12
    %p190 = scmp.lt.s32.totalorder %s12, 3
    %p191 = pnand %p189, %p190
    %p192 = pneg %p191
    // Predicated region
    $region33: #{plain_block_forward.4} parent=5 // pred_check
      _
    $region34: #{plain_block_forward.4} parent=5 // pred_check_branch
      %194 = sbr.rel (%p191) target = $region36
    $region35: #{plain_block_forward.4} parent=5 // pred_region
      %s195 = ssub.s32 %s12, 1
      %p196 = scmp.lt.s32.totalorder %s17, 1
      %s197 = scalar_select %p196, %s17, 1
      %s198 = smul.addr %s197, 54
      %s199 = smul.addr %s198, 4
      %s200 = scalar_lea.vmem %s0, %s199
      %p201 = pneg %p38
      %p202 = pneg %p35
      %p203 = pneg %p59
      %p204 = pneg %p56
      %p205 = pneg %p80
      %p206 = pneg %p77
      %p207 = pneg %p101
      %p208 = pneg %p98
      %p209 = pneg %p127
      %p210 = pneg %p124
      %p211 = scmp.lt.s32.totalorder %s17, 1
      %s212 = scalar_select %p211, %s17, 1
      %s213 = smul.addr %s212, 32
      %s214 = smul.addr %s213, 8
      %s215 = scalar_lea.vmem %s4, %s214
      %p216 = pneg %p153
      %p217 = pneg %p150
      %p218 = scmp.lt.s32.totalorder %s17, 1
      %s219 = scalar_select %p218, %s17, 1
      %s220 = smul.addr %s219, 2
      %s221 = scalar_lea.vmem %s5, %s220
      %p222 = scmp.lt.s32.totalorder %s17, 1
      %s223 = scalar_select %p222, %s17, 1
      %s224 = smul.addr %s223, 54
      %s225 = smul.addr %s224, 4
      %s226 = scalar_lea.vmem %s0, %s225
      %p227 = scmp.lt.s32.totalorder %s17, 1
      %s228 = scalar_select %p227, %s17, 1
      %s229 = smul.addr %s228, 32
      %s230 = smul.addr %s229, 8
      %s231 = scalar_lea.vmem %s4, %s230
      %p232 = scmp.lt.s32.totalorder %s17, 1
      %s233 = scalar_select %p232, %s17, 1
      %s234 = smul.addr %s233, 2
      %s235 = scalar_lea.vmem %s5, %s234
      %v236 = vld [vmem:[%s226] sm:$0xf]
      %v237 = vld [vmem:[%s226 + $0x4] sm:$0xf]
      %v238 = vld [vmem:[%s226 + $0x8] sm:$0x1]
      %v239 = vld [vmem:[%s226 + $0xc] sm:$0xf]
      %v240 = vld [vmem:[%s226 + $0x10] sm:$0xf]
      %v241 = vld [vmem:[%s226 + $0x14] sm:$0x1]
      %v242 = vld [vmem:[%s226 + $0x18] sm:$0xf]
      %v243 = vld [vmem:[%s226 + $0x1c] sm:$0xf]
      %v244 = vld [vmem:[%s226 + $0x20] sm:$0x1]
      %v245 = vld [vmem:[%s226 + $0x24] sm:$0xf]
      %v246 = vld [vmem:[%s226 + $0x28] sm:$0xf]
      %v247 = vld [vmem:[%s226 + $0x2c] sm:$0x1]
      %v248 = vld [vmem:[%s226 + $0x30] sm:$0xf]
      %v249 = vld [vmem:[%s226 + $0x34] sm:$0xf]
      %v250 = vld [vmem:[%s226 + $0x38] sm:$0x1]
      %v251 = vld [vmem:[%s226 + $0x3c] sm:$0xf]
      %v252 = vld [vmem:[%s226 + $0x40] sm:$0xf]
      %v253 = vld [vmem:[%s226 + $0x44] sm:$0x1]
      %v254 = vld [vmem:[%s226 + $0x48] sm:$0xf]
      %v255 = vld [vmem:[%s226 + $0x4c] sm:$0xf]
      %v256 = vld [vmem:[%s226 + $0x50] sm:$0x1]
      %v257 = vld [vmem:[%s226 + $0x54] sm:$0xf]
      %v258 = vld [vmem:[%s226 + $0x58] sm:$0xf]
      %v259 = vld [vmem:[%s226 + $0x5c] sm:$0x1]
      %v260 = vld [vmem:[%s226 + $0x60] sm:$0xf]
      %v261 = vld [vmem:[%s226 + $0x64] sm:$0xf]
      %v262 = vld [vmem:[%s226 + $0x68] sm:$0x1]
      %v263 = vld [vmem:[%s226 + $0x6c] sm:$0xf]
      %v264 = vld [vmem:[%s226 + $0x70] sm:$0xf]
      %v265 = vld [vmem:[%s226 + $0x74] sm:$0x1]
      %v266 = vld [vmem:[%s226 + $0x78] sm:$0xf]
      %v267 = vld [vmem:[%s226 + $0x7c] sm:$0xf]
      %v268 = vld [vmem:[%s226 + $0x80] sm:$0x1]
      %v269 = vld [vmem:[%s226 + $0x84] sm:$0xf]
      %v270 = vld [vmem:[%s226 + $0x88] sm:$0xf]
      %v271 = vld [vmem:[%s226 + $0x8c] sm:$0x1]
      %v272 = vld [vmem:[%s226 + $0x90] sm:$0xf]
      %v273 = vld [vmem:[%s226 + $0x94] sm:$0xf]
      %v274 = vld [vmem:[%s226 + $0x98] sm:$0x1]
      %v275 = vld [vmem:[%s226 + $0x9c] sm:$0xf]
      %v276 = vld [vmem:[%s226 + $0xa0] sm:$0xf]
      %v277 = vld [vmem:[%s226 + $0xa4] sm:$0x1]
      %v278 = vld [vmem:[%s226 + $0xa8] sm:$0xf]
      %v279 = vld [vmem:[%s226 + $0xac] sm:$0xf]
      %v280 = vld [vmem:[%s226 + $0xb0] sm:$0x1]
      %v281 = vld [vmem:[%s226 + $0xb4] sm:$0xf]
      %v282 = vld [vmem:[%s226 + $0xb8] sm:$0xf]
      %v283 = vld [vmem:[%s226 + $0xbc] sm:$0x1]
      %v284 = vld [vmem:[%s226 + $0xc0] sm:$0xf]
      %v285 = vld [vmem:[%s226 + $0xc4] sm:$0xf]
      %v286 = vld [vmem:[%s226 + $0xc8] sm:$0x1]
      %v287 = vld [vmem:[%s226 + $0xcc] sm:$0xf]
      %v288 = vld [vmem:[%s226 + $0xd0] sm:$0xf]
      %v289 = vld [vmem:[%s226 + $0xd4] sm:$0x1]
      %v290 = vunpack.c.l.bf16 %v236
      %v291 = vunpack.c.l.bf16 %v237
      %v292 = vunpack.c.l.bf16 %v238
      %v293 = vunpack.c.l.bf16 %v239
      %v294 = vunpack.c.l.bf16 %v240
      %v295 = vunpack.c.l.bf16 %v241
      %v296 = vunpack.c.l.bf16 %v242
      %v297 = vunpack.c.l.bf16 %v243
      %v298 = vunpack.c.l.bf16 %v244
      %v299 = vunpack.c.l.bf16 %v245
      %v300 = vunpack.c.l.bf16 %v246
      %v301 = vunpack.c.l.bf16 %v247
      %v302 = vunpack.c.l.bf16 %v248
      %v303 = vunpack.c.l.bf16 %v249
      %v304 = vunpack.c.l.bf16 %v250
      %v305 = vunpack.c.l.bf16 %v251
      %v306 = vunpack.c.l.bf16 %v252
      %v307 = vunpack.c.l.bf16 %v253
      %v308 = vunpack.c.l.bf16 %v254
      %v309 = vunpack.c.l.bf16 %v255
      %v310 = vunpack.c.l.bf16 %v256
      %v311 = vunpack.c.l.bf16 %v257
      %v312 = vunpack.c.l.bf16 %v258
      %v313 = vunpack.c.l.bf16 %v259
      %v314 = vunpack.c.l.bf16 %v260
      %v315 = vunpack.c.l.bf16 %v261
      %v316 = vunpack.c.l.bf16 %v262
      %v317 = vunpack.c.l.bf16 %v263
      %v318 = vunpack.c.l.bf16 %v264
      %v319 = vunpack.c.l.bf16 %v265
      %v320 = vunpack.c.l.bf16 %v266
      %v321 = vunpack.c.l.bf16 %v267
      %v322 = vunpack.c.l.bf16 %v268
      %v323 = vunpack.c.l.bf16 %v269
      %v324 = vunpack.c.l.bf16 %v270
      %v325 = vunpack.c.l.bf16 %v271
      %v326 = vunpack.c.l.bf16 %v272
      %v327 = vunpack.c.l.bf16 %v273
      %v328 = vunpack.c.l.bf16 %v274
      %v329 = vunpack.c.l.bf16 %v275
      %v330 = vunpack.c.l.bf16 %v276
      %v331 = vunpack.c.l.bf16 %v277
      %v332 = vunpack.c.l.bf16 %v278
      %v333 = vunpack.c.l.bf16 %v279
      %v334 = vunpack.c.l.bf16 %v280
      %v335 = vunpack.c.l.bf16 %v281
      %v336 = vunpack.c.l.bf16 %v282
      %v337 = vunpack.c.l.bf16 %v283
      %v338 = vunpack.c.l.bf16 %v284
      %v339 = vunpack.c.l.bf16 %v285
      %v340 = vunpack.c.l.bf16 %v286
      %v341 = vunpack.c.l.bf16 %v287
      %v342 = vunpack.c.l.bf16 %v288
      %v343 = vunpack.c.l.bf16 %v289
      %v344 = vld [vmem:[%s2] sm:$0x1]
      %v346 = vperm.slane %v344, 0
      %v348 = vmul.f32 %v290, %v346
      %v349 = vmul.f32 %v291, %v346
      %v350 = vmul.f32 %v292, %v346
      %v351 = vmul.f32 %v293, %v346
      %v352 = vmul.f32 %v294, %v346
      %v353 = vmul.f32 %v295, %v346
      %v354 = vmul.f32 %v296, %v346
      %v355 = vmul.f32 %v297, %v346
      %v356 = vmul.f32 %v298, %v346
      %v357 = vmul.f32 %v299, %v346
      %v358 = vmul.f32 %v300, %v346
      %v359 = vmul.f32 %v301, %v346
      %v360 = vmul.f32 %v302, %v346
      %v361 = vmul.f32 %v303, %v346
      %v362 = vmul.f32 %v304, %v346
      %v363 = vmul.f32 %v305, %v346
      %v364 = vmul.f32 %v306, %v346
      %v365 = vmul.f32 %v307, %v346
      %v366 = vmul.f32 %v308, %v346
      %v367 = vmul.f32 %v309, %v346
      %v368 = vmul.f32 %v310, %v346
      %v369 = vmul.f32 %v311, %v346
      %v370 = vmul.f32 %v312, %v346
      %v371 = vmul.f32 %v313, %v346
      %v372 = vmul.f32 %v314, %v346
      %v373 = vmul.f32 %v315, %v346
      %v374 = vmul.f32 %v316, %v346
      %v375 = vmul.f32 %v317, %v346
      %v376 = vmul.f32 %v318, %v346
      %v377 = vmul.f32 %v319, %v346
      %v378 = vmul.f32 %v320, %v346
      %v379 = vmul.f32 %v321, %v346
      %v380 = vmul.f32 %v322, %v346
      %v381 = vmul.f32 %v323, %v346
      %v382 = vmul.f32 %v324, %v346
      %v383 = vmul.f32 %v325, %v346
      %v384 = vmul.f32 %v326, %v346
      %v385 = vmul.f32 %v327, %v346
      %v386 = vmul.f32 %v328, %v346
      %v387 = vmul.f32 %v329, %v346
      %v388 = vmul.f32 %v330, %v346
      %v389 = vmul.f32 %v331, %v346
      %v390 = vmul.f32 %v332, %v346
      %v391 = vmul.f32 %v333, %v346
      %v392 = vmul.f32 %v334, %v346
      %v393 = vmul.f32 %v335, %v346
      %v394 = vmul.f32 %v336, %v346
      %v395 = vmul.f32 %v337, %v346
      %v396 = vmul.f32 %v338, %v346
      %v397 = vmul.f32 %v339, %v346
      %v398 = vmul.f32 %v340, %v346
      %v399 = vmul.f32 %v341, %v346
      %v400 = vmul.f32 %v342, %v346
      %v401 = vmul.f32 %v343, %v346
      %v402 = vld [vmem:[%s3] sm:$0x1]
      %v404 = vperm.slane %v402, 0
      %v406 = vadd.f32 %v348, %v404
      %v407 = vadd.f32 %v349, %v404
      %v408 = vadd.f32 %v350, %v404
      %v409 = vadd.f32 %v351, %v404
      %v410 = vadd.f32 %v352, %v404
      %v411 = vadd.f32 %v353, %v404
      %v412 = vadd.f32 %v354, %v404
      %v413 = vadd.f32 %v355, %v404
      %v414 = vadd.f32 %v356, %v404
      %v415 = vadd.f32 %v357, %v404
      %v416 = vadd.f32 %v358, %v404
      %v417 = vadd.f32 %v359, %v404
      %v418 = vadd.f32 %v360, %v404
      %v419 = vadd.f32 %v361, %v404
      %v420 = vadd.f32 %v362, %v404
      %v421 = vadd.f32 %v363, %v404
      %v422 = vadd.f32 %v364, %v404
      %v423 = vadd.f32 %v365, %v404
      %v424 = vadd.f32 %v366, %v404
      %v425 = vadd.f32 %v367, %v404
      %v426 = vadd.f32 %v368, %v404
      %v427 = vadd.f32 %v369, %v404
      %v428 = vadd.f32 %v370, %v404
      %v429 = vadd.f32 %v371, %v404
      %v430 = vadd.f32 %v372, %v404
      %v431 = vadd.f32 %v373, %v404
      %v432 = vadd.f32 %v374, %v404
      %v433 = vadd.f32 %v375, %v404
      %v434 = vadd.f32 %v376, %v404
      %v435 = vadd.f32 %v377, %v404
      %v436 = vadd.f32 %v378, %v404
      %v437 = vadd.f32 %v379, %v404
      %v438 = vadd.f32 %v380, %v404
      %v439 = vadd.f32 %v381, %v404
      %v440 = vadd.f32 %v382, %v404
      %v441 = vadd.f32 %v383, %v404
      %v442 = vadd.f32 %v384, %v404
      %v443 = vadd.f32 %v385, %v404
      %v444 = vadd.f32 %v386, %v404
      %v445 = vadd.f32 %v387, %v404
      %v446 = vadd.f32 %v388, %v404
      %v447 = vadd.f32 %v389, %v404
      %v448 = vadd.f32 %v390, %v404
      %v449 = vadd.f32 %v391, %v404
      %v450 = vadd.f32 %v392, %v404
      %v451 = vadd.f32 %v393, %v404
      %v452 = vadd.f32 %v394, %v404
      %v453 = vadd.f32 %v395, %v404
      %v454 = vadd.f32 %v396, %v404
      %v455 = vadd.f32 %v397, %v404
      %v456 = vadd.f32 %v398, %v404
      %v457 = vadd.f32 %v399, %v404
      %v458 = vadd.f32 %v400, %v404
      %v459 = vadd.f32 %v401, %v404
      %v460 = vmax.f32 %v406, 0.0
      %v461 = vmax.f32 %v407, 0.0
      %v462 = vmax.f32 %v408, 0.0
      %v463 = vmax.f32 %v409, 0.0
      %v464 = vmax.f32 %v410, 0.0
      %v465 = vmax.f32 %v411, 0.0
      %v466 = vmax.f32 %v412, 0.0
      %v467 = vmax.f32 %v413, 0.0
      %v468 = vmax.f32 %v414, 0.0
      %v469 = vmax.f32 %v415, 0.0
      %v470 = vmax.f32 %v416, 0.0
      %v471 = vmax.f32 %v417, 0.0
      %v472 = vmax.f32 %v418, 0.0
      %v473 = vmax.f32 %v419, 0.0
      %v474 = vmax.f32 %v420, 0.0
      %v475 = vmax.f32 %v421, 0.0
      %v476 = vmax.f32 %v422, 0.0
      %v477 = vmax.f32 %v423, 0.0
      %v478 = vmax.f32 %v424, 0.0
      %v479 = vmax.f32 %v425, 0.0
      %v480 = vmax.f32 %v426, 0.0
      %v481 = vmax.f32 %v427, 0.0
      %v482 = vmax.f32 %v428, 0.0
      %v483 = vmax.f32 %v429, 0.0
      %v484 = vmax.f32 %v430, 0.0
      %v485 = vmax.f32 %v431, 0.0
      %v486 = vmax.f32 %v432, 0.0
      %v487 = vmax.f32 %v433, 0.0
      %v488 = vmax.f32 %v434, 0.0
      %v489 = vmax.f32 %v435, 0.0
      %v490 = vmax.f32 %v436, 0.0
      %v491 = vmax.f32 %v437, 0.0
      %v492 = vmax.f32 %v438, 0.0
      %v493 = vmax.f32 %v439, 0.0
      %v494 = vmax.f32 %v440, 0.0
      %v495 = vmax.f32 %v441, 0.0
      %v496 = vmax.f32 %v442, 0.0
      %v497 = vmax.f32 %v443, 0.0
      %v498 = vmax.f32 %v444, 0.0
      %v499 = vmax.f32 %v445, 0.0
      %v500 = vmax.f32 %v446, 0.0
      %v501 = vmax.f32 %v447, 0.0
      %v502 = vmax.f32 %v448, 0.0
      %v503 = vmax.f32 %v449, 0.0
      %v504 = vmax.f32 %v450, 0.0
      %v505 = vmax.f32 %v451, 0.0
      %v506 = vmax.f32 %v452, 0.0
      %v507 = vmax.f32 %v453, 0.0
      %v508 = vmax.f32 %v454, 0.0
      %v509 = vmax.f32 %v455, 0.0
      %v510 = vmax.f32 %v456, 0.0
      %v511 = vmax.f32 %v457, 0.0
      %v512 = vmax.f32 %v458, 0.0
      %v513 = vmax.f32 %v459, 0.0
      %v514 = vlaneseq
      %v515 = vshrl.u32 %v514, 7
      %v516 = vadd.s32 %v515, 8
      %v517 = vadd.s32 %v515, 16
      %vm518 = vcmp.ge.s32.totalorder %v515, 1
      %vm519 = vcmp.ge.s32.totalorder %v516, 1
      %vm520 = vcmp.ge.s32.totalorder %v517, 1
      %vm521 = vmand 0, %vm518
      %vm522 = vmand 0, %vm519
      %vm523 = vmand 0, %vm520
      %vm524 = vmand 1, %vm518
      %vm525 = vmand 1, %vm519
      %vm526 = vmand 1, %vm520
      %vm527 = vcmp.le.s32.totalorder %v515, 16
      %vm528 = vcmp.le.s32.totalorder %v516, 16
      %vm529 = vcmp.le.s32.totalorder %v517, 16
      %vm530 = vmand %vm521, %vm527
      %vm531 = vmand %vm522, %vm528
      %vm532 = vmand %vm523, %vm529
      %vm533 = vmand %vm524, %vm527
      %vm534 = vmand %vm525, %vm528
      %vm535 = vmand %vm526, %vm529
      %v536 = vsel %vm530, 1, 0
      %v537 = vsel %vm531, 1, 0
      %v538 = vsel %vm532, 1, 0
      %v539 = vsel %vm533, 1, 0
      %v540 = vsel %vm534, 1, 0
      %v541 = vsel %vm535, 1, 0
      %vm542 = vcmp.eq.s32.totalorder %v536, 1
      %vm543 = vcmp.eq.s32.totalorder %v537, 1
      %vm544 = vcmp.eq.s32.totalorder %v538, 1
      %vm545 = vcmp.eq.s32.totalorder %v539, 1
      %vm546 = vcmp.eq.s32.totalorder %v540, 1
      %vm547 = vcmp.eq.s32.totalorder %v541, 1
      %v548 = vsel %vm542, %v460, 0.0
      %v549 = vsel %vm543, %v461, 0.0
      %v550 = vsel %vm544, %v462, 0.0
      %v551 = vsel %vm545, %v463, 0.0
      %v552 = vsel %vm546, %v464, 0.0
      %v553 = vsel %vm547, %v465, 0.0
      %v554 = vsel %vm545, %v466, 0.0
      %v555 = vsel %vm546, %v467, 0.0
      %v556 = vsel %vm547, %v468, 0.0
      %v557 = vsel %vm545, %v469, 0.0
      %v558 = vsel %vm546, %v470, 0.0
      %v559 = vsel %vm547, %v471, 0.0
      %v560 = vsel %vm545, %v472, 0.0
      %v561 = vsel %vm546, %v473, 0.0
      %v562 = vsel %vm547, %v474, 0.0
      %v563 = vsel %vm545, %v475, 0.0
      %v564 = vsel %vm546, %v476, 0.0
      %v565 = vsel %vm547, %v477, 0.0
      %v566 = vsel %vm545, %v478, 0.0
      %v567 = vsel %vm546, %v479, 0.0
      %v568 = vsel %vm547, %v480, 0.0
      %v569 = vsel %vm545, %v481, 0.0
      %v570 = vsel %vm546, %v482, 0.0
      %v571 = vsel %vm547, %v483, 0.0
      %v572 = vsel %vm545, %v484, 0.0
      %v573 = vsel %vm546, %v485, 0.0
      %v574 = vsel %vm547, %v486, 0.0
      %v575 = vsel %vm545, %v487, 0.0
      %v576 = vsel %vm546, %v488, 0.0
      %v577 = vsel %vm547, %v489, 0.0
      %v578 = vsel %vm545, %v490, 0.0
      %v579 = vsel %vm546, %v491, 0.0
      %v580 = vsel %vm547, %v492, 0.0
      %v581 = vsel %vm545, %v493, 0.0
      %v582 = vsel %vm546, %v494, 0.0
      %v583 = vsel %vm547, %v495, 0.0
      %v584 = vsel %vm545, %v496, 0.0
      %v585 = vsel %vm546, %v497, 0.0
      %v586 = vsel %vm547, %v498, 0.0
      %v587 = vsel %vm545, %v499, 0.0
      %v588 = vsel %vm546, %v500, 0.0
      %v589 = vsel %vm547, %v501, 0.0
      %v590 = vsel %vm545, %v502, 0.0
      %v591 = vsel %vm546, %v503, 0.0
      %v592 = vsel %vm547, %v504, 0.0
      %v593 = vsel %vm545, %v505, 0.0
      %v594 = vsel %vm546, %v506, 0.0
      %v595 = vsel %vm547, %v507, 0.0
      %v596 = vsel %vm545, %v508, 0.0
      %v597 = vsel %vm546, %v509, 0.0
      %v598 = vsel %vm547, %v510, 0.0
      %v599 = vsel %vm542, %v511, 0.0
      %v600 = vsel %vm543, %v512, 0.0
      %v601 = vsel %vm544, %v513, 0.0
      %v602 = vpack.c.bf16 %v548, %v548
      %v603 = vpack.c.bf16 %v549, %v549
      %v604 = vpack.c.bf16 %v550, %v550
      %v605 = vpack.c.bf16 %v551, %v551
      %v606 = vpack.c.bf16 %v552, %v552
      %v607 = vpack.c.bf16 %v553, %v553
      %v608 = vpack.c.bf16 %v554, %v554
      %v609 = vpack.c.bf16 %v555, %v555
      %v610 = vpack.c.bf16 %v556, %v556
      %v611 = vpack.c.bf16 %v557, %v557
      %v612 = vpack.c.bf16 %v558, %v558
      %v613 = vpack.c.bf16 %v559, %v559
      %v614 = vpack.c.bf16 %v560, %v560
      %v615 = vpack.c.bf16 %v561, %v561
      %v616 = vpack.c.bf16 %v562, %v562
      %v617 = vpack.c.bf16 %v563, %v563
      %v618 = vpack.c.bf16 %v564, %v564
      %v619 = vpack.c.bf16 %v565, %v565
      %v620 = vpack.c.bf16 %v566, %v566
      %v621 = vpack.c.bf16 %v567, %v567
      %v622 = vpack.c.bf16 %v568, %v568
      %v623 = vpack.c.bf16 %v569, %v569
      %v624 = vpack.c.bf16 %v570, %v570
      %v625 = vpack.c.bf16 %v571, %v571
      %v626 = vpack.c.bf16 %v572, %v572
      %v627 = vpack.c.bf16 %v573, %v573
      %v628 = vpack.c.bf16 %v574, %v574
      %v629 = vpack.c.bf16 %v575, %v575
      %v630 = vpack.c.bf16 %v576, %v576
      %v631 = vpack.c.bf16 %v577, %v577
      %v632 = vpack.c.bf16 %v578, %v578
      %v633 = vpack.c.bf16 %v579, %v579
      %v634 = vpack.c.bf16 %v580, %v580
      %v635 = vpack.c.bf16 %v581, %v581
      %v636 = vpack.c.bf16 %v582, %v582
      %v637 = vpack.c.bf16 %v583, %v583
      %v638 = vpack.c.bf16 %v584, %v584
      %v639 = vpack.c.bf16 %v585, %v585
      %v640 = vpack.c.bf16 %v586, %v586
      %v641 = vpack.c.bf16 %v587, %v587
      %v642 = vpack.c.bf16 %v588, %v588
      %v643 = vpack.c.bf16 %v589, %v589
      %v644 = vpack.c.bf16 %v590, %v590
      %v645 = vpack.c.bf16 %v591, %v591
      %v646 = vpack.c.bf16 %v592, %v592
      %v647 = vpack.c.bf16 %v593, %v593
      %v648 = vpack.c.bf16 %v594, %v594
      %v649 = vpack.c.bf16 %v595, %v595
      %v650 = vpack.c.bf16 %v596, %v596
      %v651 = vpack.c.bf16 %v597, %v597
      %v652 = vpack.c.bf16 %v598, %v598
      %v653 = vpack.c.bf16 %v599, %v599
      %v654 = vpack.c.bf16 %v600, %v600
      %v655 = vpack.c.bf16 %v601, %v601
      %v656 = vld [vmem:[%s1] sm:$0xf]
      %v657 = vld [vmem:[%s1 + $0x4] sm:$0xf]
      %v658 = vld [vmem:[%s1 + $0x8] sm:$0xf]
      %v659 = vld [vmem:[%s1 + $0xc] sm:$0xf]
      %v660 = vld [vmem:[%s1 + $0x10] sm:$0xf]
      %v661 = vld [vmem:[%s1 + $0x14] sm:$0xf]
      %v662 = vld [vmem:[%s1 + $0x18] sm:$0xf]
      %v663 = vld [vmem:[%s1 + $0x1c] sm:$0xf]
      %v664 = vld [vmem:[%s1 + $0x20] sm:$0xf]
      %v665 = vld [vmem:[%s1 + $0x24] sm:$0xf]
      %v666 = vld [vmem:[%s1 + $0x28] sm:$0xf]
      %v667 = vld [vmem:[%s1 + $0x2c] sm:$0xf]
      %v668 = vld [vmem:[%s1 + $0x30] sm:$0xf]
      %v669 = vld [vmem:[%s1 + $0x34] sm:$0xf]
      %v670 = vld [vmem:[%s1 + $0x38] sm:$0xf]
      %v671 = vld [vmem:[%s1 + $0x3c] sm:$0xf]
      %vm672 = vsmask.f32 3328
      %vm673 = vsmask.f32 7440
      %vm674 = vmor %vm672, %vm673
      %v676 = vshrl.u32 %v602, 16
      %v678 = vrot.slane %v676, 4
      %v679 = vshll.u32 %v602, 16
      %v681 = vrot.slane %v679, 5
      %v682 = vor.u32 %v678, %v681
      %v683 = vrot.slane %v682, 4
      %v685 = vshll.u32 %v603, 16
      %v687 = vrot.slane %v685, 5
      %v688 = vsel %vm674, %v683, %v687
      %v689 = vshrl.u32 %v603, 16
      %v691 = vrot.slane %v689, 4
      %v692 = vor.u32 %v691, %v687
      %v693 = vrot.slane %v692, 4
      %v695 = vshll.u32 %v604, 16
      %v697 = vrot.slane %v695, 5
      %v698 = vsel %vm674, %v693, %v697
      %v700 = vshrl.u32 %v605, 16
      %v702 = vrot.slane %v700, 4
      %v703 = vshll.u32 %v605, 16
      %v705 = vrot.slane %v703, 5
      %v706 = vor.u32 %v702, %v705
      %v707 = vrot.slane %v706, 4
      %v709 = vshll.u32 %v606, 16
      %v711 = vrot.slane %v709, 5
      %v712 = vsel %vm674, %v707, %v711
      %v713 = vshrl.u32 %v606, 16
      %v715 = vrot.slane %v713, 4
      %v716 = vor.u32 %v715, %v711
      %v717 = vrot.slane %v716, 4
      %v719 = vshll.u32 %v607, 16
      %v721 = vrot.slane %v719, 5
      %v722 = vsel %vm674, %v717, %v721
      %v724 = vshrl.u32 %v608, 16
      %v726 = vrot.slane %v724, 4
      %v727 = vshll.u32 %v608, 16
      %v729 = vrot.slane %v727, 5
      %v730 = vor.u32 %v726, %v729
      %v731 = vrot.slane %v730, 4
      %v733 = vshll.u32 %v609, 16
      %v735 = vrot.slane %v733, 5
      %v736 = vsel %vm674, %v731, %v735
      %v737 = vshrl.u32 %v609, 16
      %v739 = vrot.slane %v737, 4
      %v740 = vor.u32 %v739, %v735
      %v741 = vrot.slane %v740, 4
      %v743 = vshll.u32 %v610, 16
      %v745 = vrot.slane %v743, 5
      %v746 = vsel %vm674, %v741, %v745
      %v748 = vshrl.u32 %v611, 16
      %v750 = vrot.slane %v748, 4
      %v751 = vshll.u32 %v611, 16
      %v753 = vrot.slane %v751, 5
      %v754 = vor.u32 %v750, %v753
      %v755 = vrot.slane %v754, 4
      %v757 = vshll.u32 %v612, 16
      %v759 = vrot.slane %v757, 5
      %v760 = vsel %vm674, %v755, %v759
      %v761 = vshrl.u32 %v612, 16
      %v763 = vrot.slane %v761, 4
      %v764 = vor.u32 %v763, %v759
      %v765 = vrot.slane %v764, 4
      %v767 = vshll.u32 %v613, 16
      %v769 = vrot.slane %v767, 5
      %v770 = vsel %vm674, %v765, %v769
      %v772 = vshrl.u32 %v614, 16
      %v774 = vrot.slane %v772, 4
      %v775 = vshll.u32 %v614, 16
      %v777 = vrot.slane %v775, 5
      %v778 = vor.u32 %v774, %v777
      %v779 = vrot.slane %v778, 4
      %v781 = vshll.u32 %v615, 16
      %v783 = vrot.slane %v781, 5
      %v784 = vsel %vm674, %v779, %v783
      %v785 = vshrl.u32 %v615, 16
      %v787 = vrot.slane %v785, 4
      %v788 = vor.u32 %v787, %v783
      %v789 = vrot.slane %v788, 4
      %v791 = vshll.u32 %v616, 16
      %v793 = vrot.slane %v791, 5
      %v794 = vsel %vm674, %v789, %v793
      %v796 = vshrl.u32 %v617, 16
      %v798 = vrot.slane %v796, 4
      %v799 = vshll.u32 %v617, 16
      %v801 = vrot.slane %v799, 5
      %v802 = vor.u32 %v798, %v801
      %v803 = vrot.slane %v802, 4
      %v805 = vshll.u32 %v618, 16
      %v807 = vrot.slane %v805, 5
      %v808 = vsel %vm674, %v803, %v807
      %v809 = vshrl.u32 %v618, 16
      %v811 = vrot.slane %v809, 4
      %v812 = vor.u32 %v811, %v807
      %v813 = vrot.slane %v812, 4
      %v815 = vshll.u32 %v619, 16
      %v817 = vrot.slane %v815, 5
      %v818 = vsel %vm674, %v813, %v817
      %v820 = vshrl.u32 %v620, 16
      %v822 = vrot.slane %v820, 4
      %v823 = vshll.u32 %v620, 16
      %v825 = vrot.slane %v823, 5
      %v826 = vor.u32 %v822, %v825
      %v827 = vrot.slane %v826, 4
      %v829 = vshll.u32 %v621, 16
      %v831 = vrot.slane %v829, 5
      %v832 = vsel %vm674, %v827, %v831
      %v833 = vshrl.u32 %v621, 16
      %v835 = vrot.slane %v833, 4
      %v836 = vor.u32 %v835, %v831
      %v837 = vrot.slane %v836, 4
      %v839 = vshll.u32 %v622, 16
      %v841 = vrot.slane %v839, 5
      %v842 = vsel %vm674, %v837, %v841
      %v844 = vshrl.u32 %v623, 16
      %v846 = vrot.slane %v844, 4
      %v847 = vshll.u32 %v623, 16
      %v849 = vrot.slane %v847, 5
      %v850 = vor.u32 %v846, %v849
      %v851 = vrot.slane %v850, 4
      %v853 = vshll.u32 %v624, 16
      %v855 = vrot.slane %v853, 5
      %v856 = vsel %vm674, %v851, %v855
      %v857 = vshrl.u32 %v624, 16
      %v859 = vrot.slane %v857, 4
      %v860 = vor.u32 %v859, %v855
      %v861 = vrot.slane %v860, 4
      %v863 = vshll.u32 %v625, 16
      %v865 = vrot.slane %v863, 5
      %v866 = vsel %vm674, %v861, %v865
      %v868 = vshrl.u32 %v626, 16
      %v870 = vrot.slane %v868, 4
      %v871 = vshll.u32 %v626, 16
      %v873 = vrot.slane %v871, 5
      %v874 = vor.u32 %v870, %v873
      %v875 = vrot.slane %v874, 4
      %v877 = vshll.u32 %v627, 16
      %v879 = vrot.slane %v877, 5
      %v880 = vsel %vm674, %v875, %v879
      %v881 = vshrl.u32 %v627, 16
      %v883 = vrot.slane %v881, 4
      %v884 = vor.u32 %v883, %v879
      %v885 = vrot.slane %v884, 4
      %v887 = vshll.u32 %v628, 16
      %v889 = vrot.slane %v887, 5
      %v890 = vsel %vm674, %v885, %v889
      %v892 = vshrl.u32 %v629, 16
      %v894 = vrot.slane %v892, 4
      %v895 = vshll.u32 %v629, 16
      %v897 = vrot.slane %v895, 5
      %v898 = vor.u32 %v894, %v897
      %v899 = vrot.slane %v898, 4
      %v901 = vshll.u32 %v630, 16
      %v903 = vrot.slane %v901, 5
      %v904 = vsel %vm674, %v899, %v903
      %v905 = vshrl.u32 %v630, 16
      %v907 = vrot.slane %v905, 4
      %v908 = vor.u32 %v907, %v903
      %v909 = vrot.slane %v908, 4
      %v911 = vshll.u32 %v631, 16
      %v913 = vrot.slane %v911, 5
      %v914 = vsel %vm674, %v909, %v913
      %v916 = vshrl.u32 %v632, 16
      %v918 = vrot.slane %v916, 4
      %v919 = vshll.u32 %v632, 16
      %v921 = vrot.slane %v919, 5
      %v922 = vor.u32 %v918, %v921
      %v923 = vrot.slane %v922, 4
      %v925 = vshll.u32 %v633, 16
      %v927 = vrot.slane %v925, 5
      %v928 = vsel %vm674, %v923, %v927
      %v929 = vshrl.u32 %v633, 16
      %v931 = vrot.slane %v929, 4
      %v932 = vor.u32 %v931, %v927
      %v933 = vrot.slane %v932, 4
      %v935 = vshll.u32 %v634, 16
      %v937 = vrot.slane %v935, 5
      %v938 = vsel %vm674, %v933, %v937
      %v940 = vshrl.u32 %v635, 16
      %v942 = vrot.slane %v940, 4
      %v943 = vshll.u32 %v635, 16
      %v945 = vrot.slane %v943, 5
      %v946 = vor.u32 %v942, %v945
      %v947 = vrot.slane %v946, 4
      %v949 = vshll.u32 %v636, 16
      %v951 = vrot.slane %v949, 5
      %v952 = vsel %vm674, %v947, %v951
      %v953 = vshrl.u32 %v636, 16
      %v955 = vrot.slane %v953, 4
      %v956 = vor.u32 %v955, %v951
      %v957 = vrot.slane %v956, 4
      %v959 = vshll.u32 %v637, 16
      %v961 = vrot.slane %v959, 5
      %v962 = vsel %vm674, %v957, %v961
      %v964 = vshrl.u32 %v638, 16
      %v966 = vrot.slane %v964, 4
      %v967 = vshll.u32 %v638, 16
      %v969 = vrot.slane %v967, 5
      %v970 = vor.u32 %v966, %v969
      %v971 = vrot.slane %v970, 4
      %v973 = vshll.u32 %v639, 16
      %v975 = vrot.slane %v973, 5
      %v976 = vsel %vm674, %v971, %v975
      %v977 = vshrl.u32 %v639, 16
      %v979 = vrot.slane %v977, 4
      %v980 = vor.u32 %v979, %v975
      %v981 = vrot.slane %v980, 4
      %v983 = vshll.u32 %v640, 16
      %v985 = vrot.slane %v983, 5
      %v986 = vsel %vm674, %v981, %v985
      %v988 = vshrl.u32 %v641, 16
      %v990 = vrot.slane %v988, 4
      %v991 = vshll.u32 %v641, 16
      %v993 = vrot.slane %v991, 5
      %v994 = vor.u32 %v990, %v993
      %v995 = vrot.slane %v994, 4
      %v997 = vshll.u32 %v642, 16
      %v999 = vrot.slane %v997, 5
      %v1000 = vsel %vm674, %v995, %v999
      %v1001 = vshrl.u32 %v642, 16
      %v1003 = vrot.slane %v1001, 4
      %v1004 = vor.u32 %v1003, %v999
      %v1005 = vrot.slane %v1004, 4
      %v1007 = vshll.u32 %v643, 16
      %v1009 = vrot.slane %v1007, 5
      %v1010 = vsel %vm674, %v1005, %v1009
      %v1012 = vshrl.u32 %v644, 16
      %v1014 = vrot.slane %v1012, 4
      %v1015 = vshll.u32 %v644, 16
      %v1017 = vrot.slane %v1015, 5
      %v1018 = vor.u32 %v1014, %v1017
      %v1019 = vrot.slane %v1018, 4
      %v1021 = vshll.u32 %v645, 16
      %v1023 = vrot.slane %v1021, 5
      %v1024 = vsel %vm674, %v1019, %v1023
      %v1025 = vshrl.u32 %v645, 16
      %v1027 = vrot.slane %v1025, 4
      %v1028 = vor.u32 %v1027, %v1023
      %v1029 = vrot.slane %v1028, 4
      %v1031 = vshll.u32 %v646, 16
      %v1033 = vrot.slane %v1031, 5
      %v1034 = vsel %vm674, %v1029, %v1033
      %v1036 = vshrl.u32 %v647, 16
      %v1038 = vrot.slane %v1036, 4
      %v1039 = vshll.u32 %v647, 16
      %v1041 = vrot.slane %v1039, 5
      %v1042 = vor.u32 %v1038, %v1041
      %v1043 = vrot.slane %v1042, 4
      %v1045 = vshll.u32 %v648, 16
      %v1047 = vrot.slane %v1045, 5
      %v1048 = vsel %vm674, %v1043, %v1047
      %v1049 = vshrl.u32 %v648, 16
      %v1051 = vrot.slane %v1049, 4
      %v1052 = vor.u32 %v1051, %v1047
      %v1053 = vrot.slane %v1052, 4
      %v1055 = vshll.u32 %v649, 16
      %v1057 = vrot.slane %v1055, 5
      %v1058 = vsel %vm674, %v1053, %v1057
      %s1059 = scalar_lea.vmem %s1, 64
      %v1060 = vld [vmem:[%s1059] sm:$0xf]
      %v1061 = vld [vmem:[%s1059 + $0x4] sm:$0xf]
      %v1062 = vld [vmem:[%s1059 + $0x8] sm:$0xf]
      %v1063 = vld [vmem:[%s1059 + $0xc] sm:$0xf]
      %v1064 = vld [vmem:[%s1059 + $0x10] sm:$0xf]
      %v1065 = vld [vmem:[%s1059 + $0x14] sm:$0xf]
      %v1066 = vld [vmem:[%s1059 + $0x18] sm:$0xf]
      %v1067 = vld [vmem:[%s1059 + $0x1c] sm:$0xf]
      %v1068 = vld [vmem:[%s1059 + $0x20] sm:$0xf]
      %v1069 = vld [vmem:[%s1059 + $0x24] sm:$0xf]
      %v1070 = vld [vmem:[%s1059 + $0x28] sm:$0xf]
      %v1071 = vld [vmem:[%s1059 + $0x2c] sm:$0xf]
      %v1072 = vld [vmem:[%s1059 + $0x30] sm:$0xf]
      %v1073 = vld [vmem:[%s1059 + $0x34] sm:$0xf]
      %v1074 = vld [vmem:[%s1059 + $0x38] sm:$0xf]
      %v1075 = vld [vmem:[%s1059 + $0x3c] sm:$0xf]
      %v1076 = vunpack.c.l.b16 %v688
      %v1077 = vunpack.c.l.b16 %v698
      %v1078 = vunpack.c.l.b16 %v712
      %v1079 = vunpack.c.l.b16 %v722
      %v1080 = vunpack.c.l.b16 %v736
      %v1081 = vunpack.c.l.b16 %v746
      %v1082 = vunpack.c.l.b16 %v760
      %v1083 = vunpack.c.l.b16 %v770
      %v1084 = vunpack.c.l.b16 %v784
      %v1085 = vunpack.c.l.b16 %v794
      %v1086 = vunpack.c.l.b16 %v808
      %v1087 = vunpack.c.l.b16 %v818
      %v1088 = vunpack.c.l.b16 %v832
      %v1089 = vunpack.c.l.b16 %v842
      %v1090 = vunpack.c.l.b16 %v856
      %v1091 = vunpack.c.l.b16 %v866
      %v1092 = vunpack.c.l.b16 %v880
      %v1093 = vunpack.c.l.b16 %v890
      %v1094 = vunpack.c.l.b16 %v904
      %v1095 = vunpack.c.l.b16 %v914
      %v1096 = vunpack.c.l.b16 %v928
      %v1097 = vunpack.c.l.b16 %v938
      %v1098 = vunpack.c.l.b16 %v952
      %v1099 = vunpack.c.l.b16 %v962
      %v1100 = vunpack.c.l.b16 %v976
      %v1101 = vunpack.c.l.b16 %v986
      %v1102 = vunpack.c.l.b16 %v1000
      %v1103 = vunpack.c.l.b16 %v1010
      %v1104 = vunpack.c.l.b16 %v1024
      %v1105 = vunpack.c.l.b16 %v1034
      %v1106 = vunpack.c.l.b16 %v1048
      %v1107 = vunpack.c.l.b16 %v1058
      %v1108 = vpack.c.b16 %v1077, %v1076
      %v1109 = vpack.c.b16 %v1079, %v1078
      %v1110 = vpack.c.b16 %v1081, %v1080
      %v1111 = vpack.c.b16 %v1083, %v1082
      %v1112 = vpack.c.b16 %v1085, %v1084
      %v1113 = vpack.c.b16 %v1087, %v1086
      %v1114 = vpack.c.b16 %v1089, %v1088
      %v1115 = vpack.c.b16 %v1091, %v1090
      %v1116 = vpack.c.b16 %v1093, %v1092
      %v1117 = vpack.c.b16 %v1095, %v1094
      %v1118 = vpack.c.b16 %v1097, %v1096
      %v1119 = vpack.c.b16 %v1099, %v1098
      %v1120 = vpack.c.b16 %v1101, %v1100
      %v1121 = vpack.c.b16 %v1103, %v1102
      %v1122 = vpack.c.b16 %v1105, %v1104
      %v1123 = vpack.c.b16 %v1107, %v1106
      %v1156 = vunpack.c.l.b16 %v1060
      %v1157 = vunpack.c.l.b16 %v1061
      %v1158 = vunpack.c.l.b16 %v1062
      %v1159 = vunpack.c.l.b16 %v1063
      %v1160 = vunpack.c.l.b16 %v1064
      %v1161 = vunpack.c.l.b16 %v1065
      %v1162 = vunpack.c.l.b16 %v1066
      %v1163 = vunpack.c.l.b16 %v1067
      %v1164 = vunpack.c.l.b16 %v1068
      %v1165 = vunpack.c.l.b16 %v1069
      %v1166 = vunpack.c.l.b16 %v1070
      %v1167 = vunpack.c.l.b16 %v1071
      %v1168 = vunpack.c.l.b16 %v1072
      %v1169 = vunpack.c.l.b16 %v1073
      %v1170 = vunpack.c.l.b16 %v1074
      %v1171 = vunpack.c.l.b16 %v1075
      %v1172 = vpack.c.b16 %v1157, %v1156
      %v1173 = vpack.c.b16 %v1159, %v1158
      %v1174 = vpack.c.b16 %v1161, %v1160
      %v1175 = vpack.c.b16 %v1163, %v1162
      %v1176 = vpack.c.b16 %v1165, %v1164
      %v1177 = vpack.c.b16 %v1167, %v1166
      %v1178 = vpack.c.b16 %v1169, %v1168
      %v1179 = vpack.c.b16 %v1171, %v1170
      %1188 = vmatpush.bf16.msra.mxu0 %v1179
      %1189 = vmatpush.bf16.msra.mxu0 %v1178
      %1190 = vmatpush.bf16.msra.mxu0 %v1177
      %1191 = vmatpush.bf16.msra.mxu0 %v1176
      %1192 = vmatpush.bf16.msra.mxu0 %v1175
      %1193 = vmatpush.bf16.msra.mxu0 %v1174
      %1194 = vmatpush.bf16.msra.mxu0 %v1173
      %1195 = vmatpush.bf16.msra.mxu0 %v1172
      %1196 = vmatmul.bf16.gmra.mxu0 %v1108
      %v1197 = vpop.f32.mrf.mxu0
      %v1198 = vadd.f32 0.0, %v1197
      %v1199 = vpop.f32.mrf.mxu0
      %v1200 = vadd.f32 0.0, %v1199
      %1201 = vmatmul.bf16.gmra.mxu0 %v1109
      %v1202 = vpop.f32.mrf.mxu0
      %v1203 = vadd.f32 0.0, %v1202
      %v1204 = vpop.f32.mrf.mxu0
      %v1205 = vadd.f32 0.0, %v1204
      %1206 = vmatmul.bf16.gmra.mxu0 %v1110
      %v1207 = vpop.f32.mrf.mxu0
      %v1208 = vadd.f32 0.0, %v1207
      %v1209 = vpop.f32.mrf.mxu0
      %v1210 = vadd.f32 0.0, %v1209
      %1211 = vmatmul.bf16.gmra.mxu0 %v1111
      %v1212 = vpop.f32.mrf.mxu0
      %v1213 = vadd.f32 0.0, %v1212
      %v1214 = vpop.f32.mrf.mxu0
      %v1215 = vadd.f32 0.0, %v1214
      %1216 = vmatmul.bf16.gmra.mxu0 %v1112
      %v1217 = vpop.f32.mrf.mxu0
      %v1218 = vadd.f32 0.0, %v1217
      %v1219 = vpop.f32.mrf.mxu0
      %v1220 = vadd.f32 0.0, %v1219
      %1221 = vmatmul.bf16.gmra.mxu0 %v1113
      %v1222 = vpop.f32.mrf.mxu0
      %v1223 = vadd.f32 0.0, %v1222
      %v1224 = vpop.f32.mrf.mxu0
      %v1225 = vadd.f32 0.0, %v1224
      %1226 = vmatmul.bf16.gmra.mxu0 %v1114
      %v1227 = vpop.f32.mrf.mxu0
      %v1228 = vadd.f32 0.0, %v1227
      %v1229 = vpop.f32.mrf.mxu0
      %v1230 = vadd.f32 0.0, %v1229
      %1231 = vmatmul.bf16.gmra.mxu0 %v1115
      %v1232 = vpop.f32.mrf.mxu0
      %v1233 = vadd.f32 0.0, %v1232
      %v1234 = vpop.f32.mrf.mxu0
      %v1235 = vadd.f32 0.0, %v1234
      %1236 = vmatmul.bf16.gmra.mxu0 %v1116
      %v1237 = vpop.f32.mrf.mxu0
      %v1238 = vadd.f32 0.0, %v1237
      %v1239 = vpop.f32.mrf.mxu0
      %v1240 = vadd.f32 0.0, %v1239
      %1241 = vmatmul.bf16.gmra.mxu0 %v1117
      %v1242 = vpop.f32.mrf.mxu0
      %v1243 = vadd.f32 0.0, %v1242
      %v1244 = vpop.f32.mrf.mxu0
      %v1245 = vadd.f32 0.0, %v1244
      %1246 = vmatmul.bf16.gmra.mxu0 %v1118
      %v1247 = vpop.f32.mrf.mxu0
      %v1248 = vadd.f32 0.0, %v1247
      %v1249 = vpop.f32.mrf.mxu0
      %v1250 = vadd.f32 0.0, %v1249
      %1251 = vmatmul.bf16.gmra.mxu0 %v1119
      %v1252 = vpop.f32.mrf.mxu0
      %v1253 = vadd.f32 0.0, %v1252
      %v1254 = vpop.f32.mrf.mxu0
      %v1255 = vadd.f32 0.0, %v1254
      %1256 = vmatmul.bf16.gmra.mxu0 %v1120
      %v1257 = vpop.f32.mrf.mxu0
      %v1258 = vadd.f32 0.0, %v1257
      %v1259 = vpop.f32.mrf.mxu0
      %v1260 = vadd.f32 0.0, %v1259
      %1261 = vmatmul.bf16.gmra.mxu0 %v1121
      %v1262 = vpop.f32.mrf.mxu0
      %v1263 = vadd.f32 0.0, %v1262
      %v1264 = vpop.f32.mrf.mxu0
      %v1265 = vadd.f32 0.0, %v1264
      %1266 = vmatmul.bf16.gmra.mxu0 %v1122
      %v1267 = vpop.f32.mrf.mxu0
      %v1268 = vadd.f32 0.0, %v1267
      %v1269 = vpop.f32.mrf.mxu0
      %v1270 = vadd.f32 0.0, %v1269
      %1271 = vmatmul.bf16.gmra.mxu0 %v1123
      %v1272 = vpop.f32.mrf.mxu0
      %v1273 = vadd.f32 0.0, %v1272
      %v1274 = vpop.f32.mrf.mxu0
      %v1275 = vadd.f32 0.0, %v1274
      %1276 = vdwg.mxu0
      %v1309 = vunpack.c.l.b16 %v602
      %v1310 = vunpack.c.l.b16 %v603
      %v1311 = vunpack.c.l.b16 %v605
      %v1312 = vunpack.c.l.b16 %v606
      %v1313 = vunpack.c.l.b16 %v608
      %v1314 = vunpack.c.l.b16 %v609
      %v1315 = vunpack.c.l.b16 %v611
      %v1316 = vunpack.c.l.b16 %v612
      %v1317 = vunpack.c.l.b16 %v614
      %v1318 = vunpack.c.l.b16 %v615
      %v1319 = vunpack.c.l.b16 %v617
      %v1320 = vunpack.c.l.b16 %v618
      %v1321 = vunpack.c.l.b16 %v620
      %v1322 = vunpack.c.l.b16 %v621
      %v1323 = vunpack.c.l.b16 %v623
      %v1324 = vunpack.c.l.b16 %v624
      %v1325 = vunpack.c.l.b16 %v626
      %v1326 = vunpack.c.l.b16 %v627
      %v1327 = vunpack.c.l.b16 %v629
      %v1328 = vunpack.c.l.b16 %v630
      %v1329 = vunpack.c.l.b16 %v632
      %v1330 = vunpack.c.l.b16 %v633
      %v1331 = vunpack.c.l.b16 %v635
      %v1332 = vunpack.c.l.b16 %v636
      %v1333 = vunpack.c.l.b16 %v638
      %v1334 = vunpack.c.l.b16 %v639
      %v1335 = vunpack.c.l.b16 %v641
      %v1336 = vunpack.c.l.b16 %v642
      %v1337 = vunpack.c.l.b16 %v644
      %v1338 = vunpack.c.l.b16 %v645
      %v1339 = vunpack.c.l.b16 %v647
      %v1340 = vunpack.c.l.b16 %v648
      %v1341 = vpack.c.b16 %v1310, %v1309
      %v1342 = vpack.c.b16 %v1312, %v1311
      %v1343 = vpack.c.b16 %v1314, %v1313
      %v1344 = vpack.c.b16 %v1316, %v1315
      %v1345 = vpack.c.b16 %v1318, %v1317
      %v1346 = vpack.c.b16 %v1320, %v1319
      %v1347 = vpack.c.b16 %v1322, %v1321
      %v1348 = vpack.c.b16 %v1324, %v1323
      %v1349 = vpack.c.b16 %v1326, %v1325
      %v1350 = vpack.c.b16 %v1328, %v1327
      %v1351 = vpack.c.b16 %v1330, %v1329
      %v1352 = vpack.c.b16 %v1332, %v1331
      %v1353 = vpack.c.b16 %v1334, %v1333
      %v1354 = vpack.c.b16 %v1336, %v1335
      %v1355 = vpack.c.b16 %v1338, %v1337
      %v1356 = vpack.c.b16 %v1340, %v1339
      %v1389 = vunpack.c.l.b16 %v656
      %v1390 = vunpack.c.l.b16 %v657
      %v1391 = vunpack.c.l.b16 %v658
      %v1392 = vunpack.c.l.b16 %v659
      %v1393 = vunpack.c.l.b16 %v660
      %v1394 = vunpack.c.l.b16 %v661
      %v1395 = vunpack.c.l.b16 %v662
      %v1396 = vunpack.c.l.b16 %v663
      %v1397 = vunpack.c.l.b16 %v664
      %v1398 = vunpack.c.l.b16 %v665
      %v1399 = vunpack.c.l.b16 %v666
      %v1400 = vunpack.c.l.b16 %v667
      %v1401 = vunpack.c.l.b16 %v668
      %v1402 = vunpack.c.l.b16 %v669
      %v1403 = vunpack.c.l.b16 %v670
      %v1404 = vunpack.c.l.b16 %v671
      %v1405 = vpack.c.b16 %v1390, %v1389
      %v1406 = vpack.c.b16 %v1392, %v1391
      %v1407 = vpack.c.b16 %v1394, %v1393
      %v1408 = vpack.c.b16 %v1396, %v1395
      %v1409 = vpack.c.b16 %v1398, %v1397
      %v1410 = vpack.c.b16 %v1400, %v1399
      %v1411 = vpack.c.b16 %v1402, %v1401
      %v1412 = vpack.c.b16 %v1404, %v1403
      %1421 = vmatpush.bf16.msra.mxu0 %v1412
      %1422 = vmatpush.bf16.msra.mxu0 %v1411
      %1423 = vmatpush.bf16.msra.mxu0 %v1410
      %1424 = vmatpush.bf16.msra.mxu0 %v1409
      %1425 = vmatpush.bf16.msra.mxu0 %v1408
      %1426 = vmatpush.bf16.msra.mxu0 %v1407
      %1427 = vmatpush.bf16.msra.mxu0 %v1406
      %1428 = vmatpush.bf16.msra.mxu0 %v1405
      %1429 = vmatmul.bf16.gmra.mxu0 %v1341
      %v1430 = vpop.f32.mrf.mxu0
      %v1431 = vadd.f32 %v1198, %v1430
      %v1432 = vpop.f32.mrf.mxu0
      %v1433 = vadd.f32 %v1200, %v1432
      %1434 = vmatmul.bf16.gmra.mxu0 %v1342
      %v1435 = vpop.f32.mrf.mxu0
      %v1436 = vadd.f32 %v1203, %v1435
      %v1437 = vpop.f32.mrf.mxu0
      %v1438 = vadd.f32 %v1205, %v1437
      %1439 = vmatmul.bf16.gmra.mxu0 %v1343
      %v1440 = vpop.f32.mrf.mxu0
      %v1441 = vadd.f32 %v1208, %v1440
      %v1442 = vpop.f32.mrf.mxu0
      %v1443 = vadd.f32 %v1210, %v1442
      %1444 = vmatmul.bf16.gmra.mxu0 %v1344
      %v1445 = vpop.f32.mrf.mxu0
      %v1446 = vadd.f32 %v1213, %v1445
      %v1447 = vpop.f32.mrf.mxu0
      %v1448 = vadd.f32 %v1215, %v1447
      %1449 = vmatmul.bf16.gmra.mxu0 %v1345
      %v1450 = vpop.f32.mrf.mxu0
      %v1451 = vadd.f32 %v1218, %v1450
      %v1452 = vpop.f32.mrf.mxu0
      %v1453 = vadd.f32 %v1220, %v1452
      %1454 = vmatmul.bf16.gmra.mxu0 %v1346
      %v1455 = vpop.f32.mrf.mxu0
      %v1456 = vadd.f32 %v1223, %v1455
      %v1457 = vpop.f32.mrf.mxu0
      %v1458 = vadd.f32 %v1225, %v1457
      %1459 = vmatmul.bf16.gmra.mxu0 %v1347
      %v1460 = vpop.f32.mrf.mxu0
      %v1461 = vadd.f32 %v1228, %v1460
      %v1462 = vpop.f32.mrf.mxu0
      %v1463 = vadd.f32 %v1230, %v1462
      %1464 = vmatmul.bf16.gmra.mxu0 %v1348
      %v1465 = vpop.f32.mrf.mxu0
      %v1466 = vadd.f32 %v1233, %v1465
      %v1467 = vpop.f32.mrf.mxu0
      %v1468 = vadd.f32 %v1235, %v1467
      %1469 = vmatmul.bf16.gmra.mxu0 %v1349
      %v1470 = vpop.f32.mrf.mxu0
      %v1471 = vadd.f32 %v1238, %v1470
      %v1472 = vpop.f32.mrf.mxu0
      %v1473 = vadd.f32 %v1240, %v1472
      %1474 = vmatmul.bf16.gmra.mxu0 %v1350
      %v1475 = vpop.f32.mrf.mxu0
      %v1476 = vadd.f32 %v1243, %v1475
      %v1477 = vpop.f32.mrf.mxu0
      %v1478 = vadd.f32 %v1245, %v1477
      %1479 = vmatmul.bf16.gmra.mxu0 %v1351
      %v1480 = vpop.f32.mrf.mxu0
      %v1481 = vadd.f32 %v1248, %v1480
      %v1482 = vpop.f32.mrf.mxu0
      %v1483 = vadd.f32 %v1250, %v1482
      %1484 = vmatmul.bf16.gmra.mxu0 %v1352
      %v1485 = vpop.f32.mrf.mxu0
      %v1486 = vadd.f32 %v1253, %v1485
      %v1487 = vpop.f32.mrf.mxu0
      %v1488 = vadd.f32 %v1255, %v1487
      %1489 = vmatmul.bf16.gmra.mxu0 %v1353
      %v1490 = vpop.f32.mrf.mxu0
      %v1491 = vadd.f32 %v1258, %v1490
      %v1492 = vpop.f32.mrf.mxu0
      %v1493 = vadd.f32 %v1260, %v1492
      %1494 = vmatmul.bf16.gmra.mxu0 %v1354
      %v1495 = vpop.f32.mrf.mxu0
      %v1496 = vadd.f32 %v1263, %v1495
      %v1497 = vpop.f32.mrf.mxu0
      %v1498 = vadd.f32 %v1265, %v1497
      %1499 = vmatmul.bf16.gmra.mxu0 %v1355
      %v1500 = vpop.f32.mrf.mxu0
      %v1501 = vadd.f32 %v1268, %v1500
      %v1502 = vpop.f32.mrf.mxu0
      %v1503 = vadd.f32 %v1270, %v1502
      %1504 = vmatmul.bf16.gmra.mxu0 %v1356
      %v1505 = vpop.f32.mrf.mxu0
      %v1506 = vadd.f32 %v1273, %v1505
      %v1507 = vpop.f32.mrf.mxu0
      %v1508 = vadd.f32 %v1275, %v1507
      %1509 = vdwg.mxu0
      %vm1526 = vcmask 1042432
      %vm1527 = vcmask 1046532
      %vm1528 = vmor %vm1526, %vm1527
      %v1529 = vrot.slane %v602, 5
      %v1530 = vrot.slane %v1529, 4
      %v1531 = vrot.slane %v603, 5
      %v1532 = vsel %vm1528, %v1530, %v1531
      %v1533 = vrot.slane %v1531, 4
      %v1534 = vrot.slane %v604, 5
      %v1535 = vsel %vm1528, %v1533, %v1534
      %v1536 = vrot.slane %v605, 5
      %v1537 = vrot.slane %v1536, 4
      %v1538 = vrot.slane %v606, 5
      %v1539 = vsel %vm1528, %v1537, %v1538
      %v1540 = vrot.slane %v1538, 4
      %v1541 = vrot.slane %v607, 5
      %v1542 = vsel %vm1528, %v1540, %v1541
      %v1543 = vrot.slane %v608, 5
      %v1544 = vrot.slane %v1543, 4
      %v1545 = vrot.slane %v609, 5
      %v1546 = vsel %vm1528, %v1544, %v1545
      %v1547 = vrot.slane %v1545, 4
      %v1548 = vrot.slane %v610, 5
      %v1549 = vsel %vm1528, %v1547, %v1548
      %v1550 = vrot.slane %v611, 5
      %v1551 = vrot.slane %v1550, 4
      %v1552 = vrot.slane %v612, 5
      %v1553 = vsel %vm1528, %v1551, %v1552
      %v1554 = vrot.slane %v1552, 4
      %v1555 = vrot.slane %v613, 5
      %v1556 = vsel %vm1528, %v1554, %v1555
      %v1557 = vrot.slane %v614, 5
      %v1558 = vrot.slane %v1557, 4
      %v1559 = vrot.slane %v615, 5
      %v1560 = vsel %vm1528, %v1558, %v1559
      %v1561 = vrot.slane %v1559, 4
      %v1562 = vrot.slane %v616, 5
      %v1563 = vsel %vm1528, %v1561, %v1562
      %v1564 = vrot.slane %v617, 5
      %v1565 = vrot.slane %v1564, 4
      %v1566 = vrot.slane %v618, 5
      %v1567 = vsel %vm1528, %v1565, %v1566
      %v1568 = vrot.slane %v1566, 4
      %v1569 = vrot.slane %v619, 5
      %v1570 = vsel %vm1528, %v1568, %v1569
      %v1571 = vrot.slane %v620, 5
      %v1572 = vrot.slane %v1571, 4
      %v1573 = vrot.slane %v621, 5
      %v1574 = vsel %vm1528, %v1572, %v1573
      %v1575 = vrot.slane %v1573, 4
      %v1576 = vrot.slane %v622, 5
      %v1577 = vsel %vm1528, %v1575, %v1576
      %v1578 = vrot.slane %v623, 5
      %v1579 = vrot.slane %v1578, 4
      %v1580 = vrot.slane %v624, 5
      %v1581 = vsel %vm1528, %v1579, %v1580
      %v1582 = vrot.slane %v1580, 4
      %v1583 = vrot.slane %v625, 5
      %v1584 = vsel %vm1528, %v1582, %v1583
      %v1585 = vrot.slane %v626, 5
      %v1586 = vrot.slane %v1585, 4
      %v1587 = vrot.slane %v627, 5
      %v1588 = vsel %vm1528, %v1586, %v1587
      %v1589 = vrot.slane %v1587, 4
      %v1590 = vrot.slane %v628, 5
      %v1591 = vsel %vm1528, %v1589, %v1590
      %v1592 = vrot.slane %v629, 5
      %v1593 = vrot.slane %v1592, 4
      %v1594 = vrot.slane %v630, 5
      %v1595 = vsel %vm1528, %v1593, %v1594
      %v1596 = vrot.slane %v1594, 4
      %v1597 = vrot.slane %v631, 5
      %v1598 = vsel %vm1528, %v1596, %v1597
      %v1599 = vrot.slane %v632, 5
      %v1600 = vrot.slane %v1599, 4
      %v1601 = vrot.slane %v633, 5
      %v1602 = vsel %vm1528, %v1600, %v1601
      %v1603 = vrot.slane %v1601, 4
      %v1604 = vrot.slane %v634, 5
      %v1605 = vsel %vm1528, %v1603, %v1604
      %v1606 = vrot.slane %v635, 5
      %v1607 = vrot.slane %v1606, 4
      %v1608 = vrot.slane %v636, 5
      %v1609 = vsel %vm1528, %v1607, %v1608
      %v1610 = vrot.slane %v1608, 4
      %v1611 = vrot.slane %v637, 5
      %v1612 = vsel %vm1528, %v1610, %v1611
      %v1613 = vrot.slane %v638, 5
      %v1614 = vrot.slane %v1613, 4
      %v1615 = vrot.slane %v639, 5
      %v1616 = vsel %vm1528, %v1614, %v1615
      %v1617 = vrot.slane %v1615, 4
      %v1618 = vrot.slane %v640, 5
      %v1619 = vsel %vm1528, %v1617, %v1618
      %v1620 = vrot.slane %v641, 5
      %v1621 = vrot.slane %v1620, 4
      %v1622 = vrot.slane %v642, 5
      %v1623 = vsel %vm1528, %v1621, %v1622
      %v1624 = vrot.slane %v1622, 4
      %v1625 = vrot.slane %v643, 5
      %v1626 = vsel %vm1528, %v1624, %v1625
      %v1627 = vrot.slane %v644, 5
      %v1628 = vrot.slane %v1627, 4
      %v1629 = vrot.slane %v645, 5
      %v1630 = vsel %vm1528, %v1628, %v1629
      %v1631 = vrot.slane %v1629, 4
      %v1632 = vrot.slane %v646, 5
      %v1633 = vsel %vm1528, %v1631, %v1632
      %v1634 = vrot.slane %v647, 5
      %v1635 = vrot.slane %v1634, 4
      %v1636 = vrot.slane %v648, 5
      %v1637 = vsel %vm1528, %v1635, %v1636
      %v1638 = vrot.slane %v1636, 4
      %v1639 = vrot.slane %v649, 5
      %v1640 = vsel %vm1528, %v1638, %v1639
      %s1641 = scalar_lea.vmem %s1, 128
      %v1642 = vld [vmem:[%s1641] sm:$0xf]
      %v1643 = vld [vmem:[%s1641 + $0x4] sm:$0xf]
      %v1644 = vld [vmem:[%s1641 + $0x8] sm:$0xf]
      %v1645 = vld [vmem:[%s1641 + $0xc] sm:$0xf]
      %v1646 = vld [vmem:[%s1641 + $0x10] sm:$0xf]
      %v1647 = vld [vmem:[%s1641 + $0x14] sm:$0xf]
      %v1648 = vld [vmem:[%s1641 + $0x18] sm:$0xf]
      %v1649 = vld [vmem:[%s1641 + $0x1c] sm:$0xf]
      %v1650 = vld [vmem:[%s1641 + $0x20] sm:$0xf]
      %v1651 = vld [vmem:[%s1641 + $0x24] sm:$0xf]
      %v1652 = vld [vmem:[%s1641 + $0x28] sm:$0xf]
      %v1653 = vld [vmem:[%s1641 + $0x2c] sm:$0xf]
      %v1654 = vld [vmem:[%s1641 + $0x30] sm:$0xf]
      %v1655 = vld [vmem:[%s1641 + $0x34] sm:$0xf]
      %v1656 = vld [vmem:[%s1641 + $0x38] sm:$0xf]
      %v1657 = vld [vmem:[%s1641 + $0x3c] sm:$0xf]
      %v1658 = vunpack.c.l.b16 %v1532
      %v1659 = vunpack.c.l.b16 %v1535
      %v1660 = vunpack.c.l.b16 %v1539
      %v1661 = vunpack.c.l.b16 %v1542
      %v1662 = vunpack.c.l.b16 %v1546
      %v1663 = vunpack.c.l.b16 %v1549
      %v1664 = vunpack.c.l.b16 %v1553
      %v1665 = vunpack.c.l.b16 %v1556
      %v1666 = vunpack.c.l.b16 %v1560
      %v1667 = vunpack.c.l.b16 %v1563
      %v1668 = vunpack.c.l.b16 %v1567
      %v1669 = vunpack.c.l.b16 %v1570
      %v1670 = vunpack.c.l.b16 %v1574
      %v1671 = vunpack.c.l.b16 %v1577
      %v1672 = vunpack.c.l.b16 %v1581
      %v1673 = vunpack.c.l.b16 %v1584
      %v1674 = vunpack.c.l.b16 %v1588
      %v1675 = vunpack.c.l.b16 %v1591
      %v1676 = vunpack.c.l.b16 %v1595
      %v1677 = vunpack.c.l.b16 %v1598
      %v1678 = vunpack.c.l.b16 %v1602
      %v1679 = vunpack.c.l.b16 %v1605
      %v1680 = vunpack.c.l.b16 %v1609
      %v1681 = vunpack.c.l.b16 %v1612
      %v1682 = vunpack.c.l.b16 %v1616
      %v1683 = vunpack.c.l.b16 %v1619
      %v1684 = vunpack.c.l.b16 %v1623
      %v1685 = vunpack.c.l.b16 %v1626
      %v1686 = vunpack.c.l.b16 %v1630
      %v1687 = vunpack.c.l.b16 %v1633
      %v1688 = vunpack.c.l.b16 %v1637
      %v1689 = vunpack.c.l.b16 %v1640
      %v1690 = vpack.c.b16 %v1659, %v1658
      %v1691 = vpack.c.b16 %v1661, %v1660
      %v1692 = vpack.c.b16 %v1663, %v1662
      %v1693 = vpack.c.b16 %v1665, %v1664
      %v1694 = vpack.c.b16 %v1667, %v1666
      %v1695 = vpack.c.b16 %v1669, %v1668
      %v1696 = vpack.c.b16 %v1671, %v1670
      %v1697 = vpack.c.b16 %v1673, %v1672
      %v1698 = vpack.c.b16 %v1675, %v1674
      %v1699 = vpack.c.b16 %v1677, %v1676
      %v1700 = vpack.c.b16 %v1679, %v1678
      %v1701 = vpack.c.b16 %v1681, %v1680
      %v1702 = vpack.c.b16 %v1683, %v1682
      %v1703 = vpack.c.b16 %v1685, %v1684
      %v1704 = vpack.c.b16 %v1687, %v1686
      %v1705 = vpack.c.b16 %v1689, %v1688
      %v1738 = vunpack.c.l.b16 %v1642
      %v1739 = vunpack.c.l.b16 %v1643
      %v1740 = vunpack.c.l.b16 %v1644
      %v1741 = vunpack.c.l.b16 %v1645
      %v1742 = vunpack.c.l.b16 %v1646
      %v1743 = vunpack.c.l.b16 %v1647
      %v1744 = vunpack.c.l.b16 %v1648
      %v1745 = vunpack.c.l.b16 %v1649
      %v1746 = vunpack.c.l.b16 %v1650
      %v1747 = vunpack.c.l.b16 %v1651
      %v1748 = vunpack.c.l.b16 %v1652
      %v1749 = vunpack.c.l.b16 %v1653
      %v1750 = vunpack.c.l.b16 %v1654
      %v1751 = vunpack.c.l.b16 %v1655
      %v1752 = vunpack.c.l.b16 %v1656
      %v1753 = vunpack.c.l.b16 %v1657
      %v1754 = vpack.c.b16 %v1739, %v1738
      %v1755 = vpack.c.b16 %v1741, %v1740
      %v1756 = vpack.c.b16 %v1743, %v1742
      %v1757 = vpack.c.b16 %v1745, %v1744
      %v1758 = vpack.c.b16 %v1747, %v1746
      %v1759 = vpack.c.b16 %v1749, %v1748
      %v1760 = vpack.c.b16 %v1751, %v1750
      %v1761 = vpack.c.b16 %v1753, %v1752
      %1770 = vmatpush.bf16.msra.mxu0 %v1761
      %1771 = vmatpush.bf16.msra.mxu0 %v1760
      %1772 = vmatpush.bf16.msra.mxu0 %v1759
      %1773 = vmatpush.bf16.msra.mxu0 %v1758
      %1774 = vmatpush.bf16.msra.mxu0 %v1757
      %1775 = vmatpush.bf16.msra.mxu0 %v1756
      %1776 = vmatpush.bf16.msra.mxu0 %v1755
      %1777 = vmatpush.bf16.msra.mxu0 %v1754
      %1778 = vmatmul.bf16.gmra.mxu0 %v1690
      %v1779 = vpop.f32.mrf.mxu0
      %v1780 = vadd.f32 0.0, %v1779
      %v1781 = vpop.f32.mrf.mxu0
      %v1782 = vadd.f32 0.0, %v1781
      %1783 = vmatmul.bf16.gmra.mxu0 %v1691
      %v1784 = vpop.f32.mrf.mxu0
      %v1785 = vadd.f32 0.0, %v1784
      %v1786 = vpop.f32.mrf.mxu0
      %v1787 = vadd.f32 0.0, %v1786
      %1788 = vmatmul.bf16.gmra.mxu0 %v1692
      %v1789 = vpop.f32.mrf.mxu0
      %v1790 = vadd.f32 0.0, %v1789
      %v1791 = vpop.f32.mrf.mxu0
      %v1792 = vadd.f32 0.0, %v1791
      %1793 = vmatmul.bf16.gmra.mxu0 %v1693
      %v1794 = vpop.f32.mrf.mxu0
      %v1795 = vadd.f32 0.0, %v1794
      %v1796 = vpop.f32.mrf.mxu0
      %v1797 = vadd.f32 0.0, %v1796
      %1798 = vmatmul.bf16.gmra.mxu0 %v1694
      %v1799 = vpop.f32.mrf.mxu0
      %v1800 = vadd.f32 0.0, %v1799
      %v1801 = vpop.f32.mrf.mxu0
      %v1802 = vadd.f32 0.0, %v1801
      %1803 = vmatmul.bf16.gmra.mxu0 %v1695
      %v1804 = vpop.f32.mrf.mxu0
      %v1805 = vadd.f32 0.0, %v1804
      %v1806 = vpop.f32.mrf.mxu0
      %v1807 = vadd.f32 0.0, %v1806
      %1808 = vmatmul.bf16.gmra.mxu0 %v1696
      %v1809 = vpop.f32.mrf.mxu0
      %v1810 = vadd.f32 0.0, %v1809
      %v1811 = vpop.f32.mrf.mxu0
      %v1812 = vadd.f32 0.0, %v1811
      %1813 = vmatmul.bf16.gmra.mxu0 %v1697
      %v1814 = vpop.f32.mrf.mxu0
      %v1815 = vadd.f32 0.0, %v1814
      %v1816 = vpop.f32.mrf.mxu0
      %v1817 = vadd.f32 0.0, %v1816
      %1818 = vmatmul.bf16.gmra.mxu0 %v1698
      %v1819 = vpop.f32.mrf.mxu0
      %v1820 = vadd.f32 0.0, %v1819
      %v1821 = vpop.f32.mrf.mxu0
      %v1822 = vadd.f32 0.0, %v1821
      %1823 = vmatmul.bf16.gmra.mxu0 %v1699
      %v1824 = vpop.f32.mrf.mxu0
      %v1825 = vadd.f32 0.0, %v1824
      %v1826 = vpop.f32.mrf.mxu0
      %v1827 = vadd.f32 0.0, %v1826
      %1828 = vmatmul.bf16.gmra.mxu0 %v1700
      %v1829 = vpop.f32.mrf.mxu0
      %v1830 = vadd.f32 0.0, %v1829
      %v1831 = vpop.f32.mrf.mxu0
      %v1832 = vadd.f32 0.0, %v1831
      %1833 = vmatmul.bf16.gmra.mxu0 %v1701
      %v1834 = vpop.f32.mrf.mxu0
      %v1835 = vadd.f32 0.0, %v1834
      %v1836 = vpop.f32.mrf.mxu0
      %v1837 = vadd.f32 0.0, %v1836
      %1838 = vmatmul.bf16.gmra.mxu0 %v1702
      %v1839 = vpop.f32.mrf.mxu0
      %v1840 = vadd.f32 0.0, %v1839
      %v1841 = vpop.f32.mrf.mxu0
      %v1842 = vadd.f32 0.0, %v1841
      %1843 = vmatmul.bf16.gmra.mxu0 %v1703
      %v1844 = vpop.f32.mrf.mxu0
      %v1845 = vadd.f32 0.0, %v1844
      %v1846 = vpop.f32.mrf.mxu0
      %v1847 = vadd.f32 0.0, %v1846
      %1848 = vmatmul.bf16.gmra.mxu0 %v1704
      %v1849 = vpop.f32.mrf.mxu0
      %v1850 = vadd.f32 0.0, %v1849
      %v1851 = vpop.f32.mrf.mxu0
      %v1852 = vadd.f32 0.0, %v1851
      %1853 = vmatmul.bf16.gmra.mxu0 %v1705
      %v1854 = vpop.f32.mrf.mxu0
      %v1855 = vadd.f32 0.0, %v1854
      %v1856 = vpop.f32.mrf.mxu0
      %v1857 = vadd.f32 0.0, %v1856
      %1858 = vdwg.mxu0
      %v1859 = vadd.f32 %v1431, %v1780
      %v1860 = vadd.f32 %v1433, %v1782
      %v1861 = vadd.f32 %v1436, %v1785
      %v1862 = vadd.f32 %v1438, %v1787
      %v1863 = vadd.f32 %v1441, %v1790
      %v1864 = vadd.f32 %v1443, %v1792
      %v1865 = vadd.f32 %v1446, %v1795
      %v1866 = vadd.f32 %v1448, %v1797
      %v1867 = vadd.f32 %v1451, %v1800
      %v1868 = vadd.f32 %v1453, %v1802
      %v1869 = vadd.f32 %v1456, %v1805
      %v1870 = vadd.f32 %v1458, %v1807
      %v1871 = vadd.f32 %v1461, %v1810
      %v1872 = vadd.f32 %v1463, %v1812
      %v1873 = vadd.f32 %v1466, %v1815
      %v1874 = vadd.f32 %v1468, %v1817
      %v1875 = vadd.f32 %v1471, %v1820
      %v1876 = vadd.f32 %v1473, %v1822
      %v1877 = vadd.f32 %v1476, %v1825
      %v1878 = vadd.f32 %v1478, %v1827
      %v1879 = vadd.f32 %v1481, %v1830
      %v1880 = vadd.f32 %v1483, %v1832
      %v1881 = vadd.f32 %v1486, %v1835
      %v1882 = vadd.f32 %v1488, %v1837
      %v1883 = vadd.f32 %v1491, %v1840
      %v1884 = vadd.f32 %v1493, %v1842
      %v1885 = vadd.f32 %v1496, %v1845
      %v1886 = vadd.f32 %v1498, %v1847
      %v1887 = vadd.f32 %v1501, %v1850
      %v1888 = vadd.f32 %v1503, %v1852
      %v1889 = vadd.f32 %v1506, %v1855
      %v1890 = vadd.f32 %v1508, %v1857
      %s1891 = scalar_lea.vmem %s1, 192
      %v1892 = vld [vmem:[%s1891] sm:$0xf]
      %v1893 = vld [vmem:[%s1891 + $0x4] sm:$0xf]
      %v1894 = vld [vmem:[%s1891 + $0x8] sm:$0xf]
      %v1895 = vld [vmem:[%s1891 + $0xc] sm:$0xf]
      %v1896 = vld [vmem:[%s1891 + $0x10] sm:$0xf]
      %v1897 = vld [vmem:[%s1891 + $0x14] sm:$0xf]
      %v1898 = vld [vmem:[%s1891 + $0x18] sm:$0xf]
      %v1899 = vld [vmem:[%s1891 + $0x1c] sm:$0xf]
      %v1900 = vld [vmem:[%s1891 + $0x20] sm:$0xf]
      %v1901 = vld [vmem:[%s1891 + $0x24] sm:$0xf]
      %v1902 = vld [vmem:[%s1891 + $0x28] sm:$0xf]
      %v1903 = vld [vmem:[%s1891 + $0x2c] sm:$0xf]
      %v1904 = vld [vmem:[%s1891 + $0x30] sm:$0xf]
      %v1905 = vld [vmem:[%s1891 + $0x34] sm:$0xf]
      %v1906 = vld [vmem:[%s1891 + $0x38] sm:$0xf]
      %v1907 = vld [vmem:[%s1891 + $0x3c] sm:$0xf]
      %v1910 = vunpack.c.l.b16 %v650
      %v1911 = vunpack.c.l.b16 %v651
      %v1912 = vpack.c.b16 %v1911, %v1910
      %v1930 = vunpack.c.l.b16 %v1892
      %v1931 = vunpack.c.l.b16 %v1893
      %v1932 = vunpack.c.l.b16 %v1894
      %v1933 = vunpack.c.l.b16 %v1895
      %v1934 = vunpack.c.l.b16 %v1896
      %v1935 = vunpack.c.l.b16 %v1897
      %v1936 = vunpack.c.l.b16 %v1898
      %v1937 = vunpack.c.l.b16 %v1899
      %v1938 = vunpack.c.l.b16 %v1900
      %v1939 = vunpack.c.l.b16 %v1901
      %v1940 = vunpack.c.l.b16 %v1902
      %v1941 = vunpack.c.l.b16 %v1903
      %v1942 = vunpack.c.l.b16 %v1904
      %v1943 = vunpack.c.l.b16 %v1905
      %v1944 = vunpack.c.l.b16 %v1906
      %v1945 = vunpack.c.l.b16 %v1907
      %v1946 = vpack.c.b16 %v1931, %v1930
      %v1947 = vpack.c.b16 %v1933, %v1932
      %v1948 = vpack.c.b16 %v1935, %v1934
      %v1949 = vpack.c.b16 %v1937, %v1936
      %v1950 = vpack.c.b16 %v1939, %v1938
      %v1951 = vpack.c.b16 %v1941, %v1940
      %v1952 = vpack.c.b16 %v1943, %v1942
      %v1953 = vpack.c.b16 %v1945, %v1944
      %1962 = vmatpush.bf16.msra.mxu0 %v1953
      %1963 = vmatpush.bf16.msra.mxu0 %v1952
      %1964 = vmatpush.bf16.msra.mxu0 %v1951
      %1965 = vmatpush.bf16.msra.mxu0 %v1950
      %1966 = vmatpush.bf16.msra.mxu0 %v1949
      %1967 = vmatpush.bf16.msra.mxu0 %v1948
      %1968 = vmatpush.bf16.msra.mxu0 %v1947
      %1969 = vmatpush.bf16.msra.mxu0 %v1946
      %1970 = vmatmul.bf16.gmra.mxu0 %v1342
      %v1971 = vpop.f32.mrf.mxu0
      %v1972 = vadd.f32 0.0, %v1971
      %v1973 = vpop.f32.mrf.mxu0
      %v1974 = vadd.f32 0.0, %v1973
      %1975 = vmatmul.bf16.gmra.mxu0 %v1343
      %v1976 = vpop.f32.mrf.mxu0
      %v1977 = vadd.f32 0.0, %v1976
      %v1978 = vpop.f32.mrf.mxu0
      %v1979 = vadd.f32 0.0, %v1978
      %1980 = vmatmul.bf16.gmra.mxu0 %v1344
      %v1981 = vpop.f32.mrf.mxu0
      %v1982 = vadd.f32 0.0, %v1981
      %v1983 = vpop.f32.mrf.mxu0
      %v1984 = vadd.f32 0.0, %v1983
      %1985 = vmatmul.bf16.gmra.mxu0 %v1345
      %v1986 = vpop.f32.mrf.mxu0
      %v1987 = vadd.f32 0.0, %v1986
      %v1988 = vpop.f32.mrf.mxu0
      %v1989 = vadd.f32 0.0, %v1988
      %1990 = vmatmul.bf16.gmra.mxu0 %v1346
      %v1991 = vpop.f32.mrf.mxu0
      %v1992 = vadd.f32 0.0, %v1991
      %v1993 = vpop.f32.mrf.mxu0
      %v1994 = vadd.f32 0.0, %v1993
      %1995 = vmatmul.bf16.gmra.mxu0 %v1347
      %v1996 = vpop.f32.mrf.mxu0
      %v1997 = vadd.f32 0.0, %v1996
      %v1998 = vpop.f32.mrf.mxu0
      %v1999 = vadd.f32 0.0, %v1998
      %2000 = vmatmul.bf16.gmra.mxu0 %v1348
      %v2001 = vpop.f32.mrf.mxu0
      %v2002 = vadd.f32 0.0, %v2001
      %v2003 = vpop.f32.mrf.mxu0
      %v2004 = vadd.f32 0.0, %v2003
      %2005 = vmatmul.bf16.gmra.mxu0 %v1349
      %v2006 = vpop.f32.mrf.mxu0
      %v2007 = vadd.f32 0.0, %v2006
      %v2008 = vpop.f32.mrf.mxu0
      %v2009 = vadd.f32 0.0, %v2008
      %2010 = vmatmul.bf16.gmra.mxu0 %v1350
      %v2011 = vpop.f32.mrf.mxu0
      %v2012 = vadd.f32 0.0, %v2011
      %v2013 = vpop.f32.mrf.mxu0
      %v2014 = vadd.f32 0.0, %v2013
      %2015 = vmatmul.bf16.gmra.mxu0 %v1351
      %v2016 = vpop.f32.mrf.mxu0
      %v2017 = vadd.f32 0.0, %v2016
      %v2018 = vpop.f32.mrf.mxu0
      %v2019 = vadd.f32 0.0, %v2018
      %2020 = vmatmul.bf16.gmra.mxu0 %v1352
      %v2021 = vpop.f32.mrf.mxu0
      %v2022 = vadd.f32 0.0, %v2021
      %v2023 = vpop.f32.mrf.mxu0
      %v2024 = vadd.f32 0.0, %v2023
      %2025 = vmatmul.bf16.gmra.mxu0 %v1353
      %v2026 = vpop.f32.mrf.mxu0
      %v2027 = vadd.f32 0.0, %v2026
      %v2028 = vpop.f32.mrf.mxu0
      %v2029 = vadd.f32 0.0, %v2028
      %2030 = vmatmul.bf16.gmra.mxu0 %v1354
      %v2031 = vpop.f32.mrf.mxu0
      %v2032 = vadd.f32 0.0, %v2031
      %v2033 = vpop.f32.mrf.mxu0
      %v2034 = vadd.f32 0.0, %v2033
      %2035 = vmatmul.bf16.gmra.mxu0 %v1355
      %v2036 = vpop.f32.mrf.mxu0
      %v2037 = vadd.f32 0.0, %v2036
      %v2038 = vpop.f32.mrf.mxu0
      %v2039 = vadd.f32 0.0, %v2038
      %2040 = vmatmul.bf16.gmra.mxu0 %v1356
      %v2041 = vpop.f32.mrf.mxu0
      %v2042 = vadd.f32 0.0, %v2041
      %v2043 = vpop.f32.mrf.mxu0
      %v2044 = vadd.f32 0.0, %v2043
      %2045 = vmatmul.bf16.gmra.mxu0 %v1912
      %v2046 = vpop.f32.mrf.mxu0
      %v2047 = vadd.f32 0.0, %v2046
      %v2048 = vpop.f32.mrf.mxu0
      %v2049 = vadd.f32 0.0, %v2048
      %2050 = vdwg.mxu0
      %v2051 = vadd.f32 %v1859, %v1972
      %v2052 = vadd.f32 %v1860, %v1974
      %v2053 = vadd.f32 %v1861, %v1977
      %v2054 = vadd.f32 %v1862, %v1979
      %v2055 = vadd.f32 %v1863, %v1982
      %v2056 = vadd.f32 %v1864, %v1984
      %v2057 = vadd.f32 %v1865, %v1987
      %v2058 = vadd.f32 %v1866, %v1989
      %v2059 = vadd.f32 %v1867, %v1992
      %v2060 = vadd.f32 %v1868, %v1994
      %v2061 = vadd.f32 %v1869, %v1997
      %v2062 = vadd.f32 %v1870, %v1999
      %v2063 = vadd.f32 %v1871, %v2002
      %v2064 = vadd.f32 %v1872, %v2004
      %v2065 = vadd.f32 %v1873, %v2007
      %v2066 = vadd.f32 %v1874, %v2009
      %v2067 = vadd.f32 %v1875, %v2012
      %v2068 = vadd.f32 %v1876, %v2014
      %v2069 = vadd.f32 %v1877, %v2017
      %v2070 = vadd.f32 %v1878, %v2019
      %v2071 = vadd.f32 %v1879, %v2022
      %v2072 = vadd.f32 %v1880, %v2024
      %v2073 = vadd.f32 %v1881, %v2027
      %v2074 = vadd.f32 %v1882, %v2029
      %v2075 = vadd.f32 %v1883, %v2032
      %v2076 = vadd.f32 %v1884, %v2034
      %v2077 = vadd.f32 %v1885, %v2037
      %v2078 = vadd.f32 %v1886, %v2039
      %v2079 = vadd.f32 %v1887, %v2042
      %v2080 = vadd.f32 %v1888, %v2044
      %v2081 = vadd.f32 %v1889, %v2047
      %v2082 = vadd.f32 %v1890, %v2049
      %v2084 = vshrl.u32 %v650, 16
      %v2086 = vrot.slane %v2084, 4
      %v2087 = vshll.u32 %v650, 16
      %v2089 = vrot.slane %v2087, 5
      %v2090 = vor.u32 %v2086, %v2089
      %v2091 = vrot.slane %v2090, 4
      %v2093 = vshll.u32 %v651, 16
      %v2095 = vrot.slane %v2093, 5
      %v2096 = vsel %vm674, %v2091, %v2095
      %v2097 = vshrl.u32 %v651, 16
      %v2099 = vrot.slane %v2097, 4
      %v2100 = vor.u32 %v2099, %v2095
      %v2101 = vrot.slane %v2100, 4
      %v2103 = vshll.u32 %v652, 16
      %v2105 = vrot.slane %v2103, 5
      %v2106 = vsel %vm674, %v2101, %v2105
      %s2107 = scalar_lea.vmem %s1, 256
      %v2108 = vld [vmem:[%s2107] sm:$0xf]
      %v2109 = vld [vmem:[%s2107 + $0x4] sm:$0xf]
      %v2110 = vld [vmem:[%s2107 + $0x8] sm:$0xf]
      %v2111 = vld [vmem:[%s2107 + $0xc] sm:$0xf]
      %v2112 = vld [vmem:[%s2107 + $0x10] sm:$0xf]
      %v2113 = vld [vmem:[%s2107 + $0x14] sm:$0xf]
      %v2114 = vld [vmem:[%s2107 + $0x18] sm:$0xf]
      %v2115 = vld [vmem:[%s2107 + $0x1c] sm:$0xf]
      %v2116 = vld [vmem:[%s2107 + $0x20] sm:$0xf]
      %v2117 = vld [vmem:[%s2107 + $0x24] sm:$0xf]
      %v2118 = vld [vmem:[%s2107 + $0x28] sm:$0xf]
      %v2119 = vld [vmem:[%s2107 + $0x2c] sm:$0xf]
      %v2120 = vld [vmem:[%s2107 + $0x30] sm:$0xf]
      %v2121 = vld [vmem:[%s2107 + $0x34] sm:$0xf]
      %v2122 = vld [vmem:[%s2107 + $0x38] sm:$0xf]
      %v2123 = vld [vmem:[%s2107 + $0x3c] sm:$0xf]
      %v2124 = vunpack.c.l.b16 %v2096
      %v2125 = vunpack.c.l.b16 %v2106
      %v2126 = vpack.c.b16 %v2125, %v2124
      %v2144 = vunpack.c.l.b16 %v2108
      %v2145 = vunpack.c.l.b16 %v2109
      %v2146 = vunpack.c.l.b16 %v2110
      %v2147 = vunpack.c.l.b16 %v2111
      %v2148 = vunpack.c.l.b16 %v2112
      %v2149 = vunpack.c.l.b16 %v2113
      %v2150 = vunpack.c.l.b16 %v2114
      %v2151 = vunpack.c.l.b16 %v2115
      %v2152 = vunpack.c.l.b16 %v2116
      %v2153 = vunpack.c.l.b16 %v2117
      %v2154 = vunpack.c.l.b16 %v2118
      %v2155 = vunpack.c.l.b16 %v2119
      %v2156 = vunpack.c.l.b16 %v2120
      %v2157 = vunpack.c.l.b16 %v2121
      %v2158 = vunpack.c.l.b16 %v2122
      %v2159 = vunpack.c.l.b16 %v2123
      %v2160 = vpack.c.b16 %v2145, %v2144
      %v2161 = vpack.c.b16 %v2147, %v2146
      %v2162 = vpack.c.b16 %v2149, %v2148
      %v2163 = vpack.c.b16 %v2151, %v2150
      %v2164 = vpack.c.b16 %v2153, %v2152
      %v2165 = vpack.c.b16 %v2155, %v2154
      %v2166 = vpack.c.b16 %v2157, %v2156
      %v2167 = vpack.c.b16 %v2159, %v2158
      %2176 = vmatpush.bf16.msra.mxu0 %v2167
      %2177 = vmatpush.bf16.msra.mxu0 %v2166
      %2178 = vmatpush.bf16.msra.mxu0 %v2165
      %2179 = vmatpush.bf16.msra.mxu0 %v2164
      %2180 = vmatpush.bf16.msra.mxu0 %v2163
      %2181 = vmatpush.bf16.msra.mxu0 %v2162
      %2182 = vmatpush.bf16.msra.mxu0 %v2161
      %2183 = vmatpush.bf16.msra.mxu0 %v2160
      %2184 = vmatmul.bf16.gmra.mxu0 %v1109
      %v2185 = vpop.f32.mrf.mxu0
      %v2186 = vadd.f32 0.0, %v2185
      %v2187 = vpop.f32.mrf.mxu0
      %v2188 = vadd.f32 0.0, %v2187
      %2189 = vmatmul.bf16.gmra.mxu0 %v1110
      %v2190 = vpop.f32.mrf.mxu0
      %v2191 = vadd.f32 0.0, %v2190
      %v2192 = vpop.f32.mrf.mxu0
      %v2193 = vadd.f32 0.0, %v2192
      %2194 = vmatmul.bf16.gmra.mxu0 %v1111
      %v2195 = vpop.f32.mrf.mxu0
      %v2196 = vadd.f32 0.0, %v2195
      %v2197 = vpop.f32.mrf.mxu0
      %v2198 = vadd.f32 0.0, %v2197
      %2199 = vmatmul.bf16.gmra.mxu0 %v1112
      %v2200 = vpop.f32.mrf.mxu0
      %v2201 = vadd.f32 0.0, %v2200
      %v2202 = vpop.f32.mrf.mxu0
      %v2203 = vadd.f32 0.0, %v2202
      %2204 = vmatmul.bf16.gmra.mxu0 %v1113
      %v2205 = vpop.f32.mrf.mxu0
      %v2206 = vadd.f32 0.0, %v2205
      %v2207 = vpop.f32.mrf.mxu0
      %v2208 = vadd.f32 0.0, %v2207
      %2209 = vmatmul.bf16.gmra.mxu0 %v1114
      %v2210 = vpop.f32.mrf.mxu0
      %v2211 = vadd.f32 0.0, %v2210
      %v2212 = vpop.f32.mrf.mxu0
      %v2213 = vadd.f32 0.0, %v2212
      %2214 = vmatmul.bf16.gmra.mxu0 %v1115
      %v2215 = vpop.f32.mrf.mxu0
      %v2216 = vadd.f32 0.0, %v2215
      %v2217 = vpop.f32.mrf.mxu0
      %v2218 = vadd.f32 0.0, %v2217
      %2219 = vmatmul.bf16.gmra.mxu0 %v1116
      %v2220 = vpop.f32.mrf.mxu0
      %v2221 = vadd.f32 0.0, %v2220
      %v2222 = vpop.f32.mrf.mxu0
      %v2223 = vadd.f32 0.0, %v2222
      %2224 = vmatmul.bf16.gmra.mxu0 %v1117
      %v2225 = vpop.f32.mrf.mxu0
      %v2226 = vadd.f32 0.0, %v2225
      %v2227 = vpop.f32.mrf.mxu0
      %v2228 = vadd.f32 0.0, %v2227
      %2229 = vmatmul.bf16.gmra.mxu0 %v1118
      %v2230 = vpop.f32.mrf.mxu0
      %v2231 = vadd.f32 0.0, %v2230
      %v2232 = vpop.f32.mrf.mxu0
      %v2233 = vadd.f32 0.0, %v2232
      %2234 = vmatmul.bf16.gmra.mxu0 %v1119
      %v2235 = vpop.f32.mrf.mxu0
      %v2236 = vadd.f32 0.0, %v2235
      %v2237 = vpop.f32.mrf.mxu0
      %v2238 = vadd.f32 0.0, %v2237
      %2239 = vmatmul.bf16.gmra.mxu0 %v1120
      %v2240 = vpop.f32.mrf.mxu0
      %v2241 = vadd.f32 0.0, %v2240
      %v2242 = vpop.f32.mrf.mxu0
      %v2243 = vadd.f32 0.0, %v2242
      %2244 = vmatmul.bf16.gmra.mxu0 %v1121
      %v2245 = vpop.f32.mrf.mxu0
      %v2246 = vadd.f32 0.0, %v2245
      %v2247 = vpop.f32.mrf.mxu0
      %v2248 = vadd.f32 0.0, %v2247
      %2249 = vmatmul.bf16.gmra.mxu0 %v1122
      %v2250 = vpop.f32.mrf.mxu0
      %v2251 = vadd.f32 0.0, %v2250
      %v2252 = vpop.f32.mrf.mxu0
      %v2253 = vadd.f32 0.0, %v2252
      %2254 = vmatmul.bf16.gmra.mxu0 %v1123
      %v2255 = vpop.f32.mrf.mxu0
      %v2256 = vadd.f32 0.0, %v2255
      %v2257 = vpop.f32.mrf.mxu0
      %v2258 = vadd.f32 0.0, %v2257
      %2259 = vmatmul.bf16.gmra.mxu0 %v2126
      %v2260 = vpop.f32.mrf.mxu0
      %v2261 = vadd.f32 0.0, %v2260
      %v2262 = vpop.f32.mrf.mxu0
      %v2263 = vadd.f32 0.0, %v2262
      %2264 = vdwg.mxu0
      %v2265 = vadd.f32 %v2051, %v2186
      %v2266 = vadd.f32 %v2052, %v2188
      %v2267 = vadd.f32 %v2053, %v2191
      %v2268 = vadd.f32 %v2054, %v2193
      %v2269 = vadd.f32 %v2055, %v2196
      %v2270 = vadd.f32 %v2056, %v2198
      %v2271 = vadd.f32 %v2057, %v2201
      %v2272 = vadd.f32 %v2058, %v2203
      %v2273 = vadd.f32 %v2059, %v2206
      %v2274 = vadd.f32 %v2060, %v2208
      %v2275 = vadd.f32 %v2061, %v2211
      %v2276 = vadd.f32 %v2062, %v2213
      %v2277 = vadd.f32 %v2063, %v2216
      %v2278 = vadd.f32 %v2064, %v2218
      %v2279 = vadd.f32 %v2065, %v2221
      %v2280 = vadd.f32 %v2066, %v2223
      %v2281 = vadd.f32 %v2067, %v2226
      %v2282 = vadd.f32 %v2068, %v2228
      %v2283 = vadd.f32 %v2069, %v2231
      %v2284 = vadd.f32 %v2070, %v2233
      %v2285 = vadd.f32 %v2071, %v2236
      %v2286 = vadd.f32 %v2072, %v2238
      %v2287 = vadd.f32 %v2073, %v2241
      %v2288 = vadd.f32 %v2074, %v2243
      %v2289 = vadd.f32 %v2075, %v2246
      %v2290 = vadd.f32 %v2076, %v2248
      %v2291 = vadd.f32 %v2077, %v2251
      %v2292 = vadd.f32 %v2078, %v2253
      %v2293 = vadd.f32 %v2079, %v2256
      %v2294 = vadd.f32 %v2080, %v2258
      %v2295 = vadd.f32 %v2081, %v2261
      %v2296 = vadd.f32 %v2082, %v2263
      %v2298 = vrot.slane %v650, 5
      %v2299 = vrot.slane %v2298, 4
      %v2300 = vrot.slane %v651, 5
      %v2301 = vsel %vm1528, %v2299, %v2300
      %v2302 = vrot.slane %v2300, 4
      %v2303 = vrot.slane %v652, 5
      %v2304 = vsel %vm1528, %v2302, %v2303
      %s2305 = scalar_lea.vmem %s1, 320
      %v2306 = vld [vmem:[%s2305] sm:$0xf]
      %v2307 = vld [vmem:[%s2305 + $0x4] sm:$0xf]
      %v2308 = vld [vmem:[%s2305 + $0x8] sm:$0xf]
      %v2309 = vld [vmem:[%s2305 + $0xc] sm:$0xf]
      %v2310 = vld [vmem:[%s2305 + $0x10] sm:$0xf]
      %v2311 = vld [vmem:[%s2305 + $0x14] sm:$0xf]
      %v2312 = vld [vmem:[%s2305 + $0x18] sm:$0xf]
      %v2313 = vld [vmem:[%s2305 + $0x1c] sm:$0xf]
      %v2314 = vld [vmem:[%s2305 + $0x20] sm:$0xf]
      %v2315 = vld [vmem:[%s2305 + $0x24] sm:$0xf]
      %v2316 = vld [vmem:[%s2305 + $0x28] sm:$0xf]
      %v2317 = vld [vmem:[%s2305 + $0x2c] sm:$0xf]
      %v2318 = vld [vmem:[%s2305 + $0x30] sm:$0xf]
      %v2319 = vld [vmem:[%s2305 + $0x34] sm:$0xf]
      %v2320 = vld [vmem:[%s2305 + $0x38] sm:$0xf]
      %v2321 = vld [vmem:[%s2305 + $0x3c] sm:$0xf]
      %v2322 = vunpack.c.l.b16 %v2301
      %v2323 = vunpack.c.l.b16 %v2304
      %v2324 = vpack.c.b16 %v2323, %v2322
      %v2342 = vunpack.c.l.b16 %v2306
      %v2343 = vunpack.c.l.b16 %v2307
      %v2344 = vunpack.c.l.b16 %v2308
      %v2345 = vunpack.c.l.b16 %v2309
      %v2346 = vunpack.c.l.b16 %v2310
      %v2347 = vunpack.c.l.b16 %v2311
      %v2348 = vunpack.c.l.b16 %v2312
      %v2349 = vunpack.c.l.b16 %v2313
      %v2350 = vunpack.c.l.b16 %v2314
      %v2351 = vunpack.c.l.b16 %v2315
      %v2352 = vunpack.c.l.b16 %v2316
      %v2353 = vunpack.c.l.b16 %v2317
      %v2354 = vunpack.c.l.b16 %v2318
      %v2355 = vunpack.c.l.b16 %v2319
      %v2356 = vunpack.c.l.b16 %v2320
      %v2357 = vunpack.c.l.b16 %v2321
      %v2358 = vpack.c.b16 %v2343, %v2342
      %v2359 = vpack.c.b16 %v2345, %v2344
      %v2360 = vpack.c.b16 %v2347, %v2346
      %v2361 = vpack.c.b16 %v2349, %v2348
      %v2362 = vpack.c.b16 %v2351, %v2350
      %v2363 = vpack.c.b16 %v2353, %v2352
      %v2364 = vpack.c.b16 %v2355, %v2354
      %v2365 = vpack.c.b16 %v2357, %v2356
      %2374 = vmatpush.bf16.msra.mxu0 %v2365
      %2375 = vmatpush.bf16.msra.mxu0 %v2364
      %2376 = vmatpush.bf16.msra.mxu0 %v2363
      %2377 = vmatpush.bf16.msra.mxu0 %v2362
      %2378 = vmatpush.bf16.msra.mxu0 %v2361
      %2379 = vmatpush.bf16.msra.mxu0 %v2360
      %2380 = vmatpush.bf16.msra.mxu0 %v2359
      %2381 = vmatpush.bf16.msra.mxu0 %v2358
      %2382 = vmatmul.bf16.gmra.mxu0 %v1691
      %v2383 = vpop.f32.mrf.mxu0
      %v2384 = vadd.f32 0.0, %v2383
      %v2385 = vpop.f32.mrf.mxu0
      %v2386 = vadd.f32 0.0, %v2385
      %2387 = vmatmul.bf16.gmra.mxu0 %v1692
      %v2388 = vpop.f32.mrf.mxu0
      %v2389 = vadd.f32 0.0, %v2388
      %v2390 = vpop.f32.mrf.mxu0
      %v2391 = vadd.f32 0.0, %v2390
      %2392 = vmatmul.bf16.gmra.mxu0 %v1693
      %v2393 = vpop.f32.mrf.mxu0
      %v2394 = vadd.f32 0.0, %v2393
      %v2395 = vpop.f32.mrf.mxu0
      %v2396 = vadd.f32 0.0, %v2395
      %2397 = vmatmul.bf16.gmra.mxu0 %v1694
      %v2398 = vpop.f32.mrf.mxu0
      %v2399 = vadd.f32 0.0, %v2398
      %v2400 = vpop.f32.mrf.mxu0
      %v2401 = vadd.f32 0.0, %v2400
      %2402 = vmatmul.bf16.gmra.mxu0 %v1695
      %v2403 = vpop.f32.mrf.mxu0
      %v2404 = vadd.f32 0.0, %v2403
      %v2405 = vpop.f32.mrf.mxu0
      %v2406 = vadd.f32 0.0, %v2405
      %2407 = vmatmul.bf16.gmra.mxu0 %v1696
      %v2408 = vpop.f32.mrf.mxu0
      %v2409 = vadd.f32 0.0, %v2408
      %v2410 = vpop.f32.mrf.mxu0
      %v2411 = vadd.f32 0.0, %v2410
      %2412 = vmatmul.bf16.gmra.mxu0 %v1697
      %v2413 = vpop.f32.mrf.mxu0
      %v2414 = vadd.f32 0.0, %v2413
      %v2415 = vpop.f32.mrf.mxu0
      %v2416 = vadd.f32 0.0, %v2415
      %2417 = vmatmul.bf16.gmra.mxu0 %v1698
      %v2418 = vpop.f32.mrf.mxu0
      %v2419 = vadd.f32 0.0, %v2418
      %v2420 = vpop.f32.mrf.mxu0
      %v2421 = vadd.f32 0.0, %v2420
      %2422 = vmatmul.bf16.gmra.mxu0 %v1699
      %v2423 = vpop.f32.mrf.mxu0
      %v2424 = vadd.f32 0.0, %v2423
      %v2425 = vpop.f32.mrf.mxu0
      %v2426 = vadd.f32 0.0, %v2425
      %2427 = vmatmul.bf16.gmra.mxu0 %v1700
      %v2428 = vpop.f32.mrf.mxu0
      %v2429 = vadd.f32 0.0, %v2428
      %v2430 = vpop.f32.mrf.mxu0
      %v2431 = vadd.f32 0.0, %v2430
      %2432 = vmatmul.bf16.gmra.mxu0 %v1701
      %v2433 = vpop.f32.mrf.mxu0
      %v2434 = vadd.f32 0.0, %v2433
      %v2435 = vpop.f32.mrf.mxu0
      %v2436 = vadd.f32 0.0, %v2435
      %2437 = vmatmul.bf16.gmra.mxu0 %v1702
      %v2438 = vpop.f32.mrf.mxu0
      %v2439 = vadd.f32 0.0, %v2438
      %v2440 = vpop.f32.mrf.mxu0
      %v2441 = vadd.f32 0.0, %v2440
      %2442 = vmatmul.bf16.gmra.mxu0 %v1703
      %v2443 = vpop.f32.mrf.mxu0
      %v2444 = vadd.f32 0.0, %v2443
      %v2445 = vpop.f32.mrf.mxu0
      %v2446 = vadd.f32 0.0, %v2445
      %2447 = vmatmul.bf16.gmra.mxu0 %v1704
      %v2448 = vpop.f32.mrf.mxu0
      %v2449 = vadd.f32 0.0, %v2448
      %v2450 = vpop.f32.mrf.mxu0
      %v2451 = vadd.f32 0.0, %v2450
      %2452 = vmatmul.bf16.gmra.mxu0 %v1705
      %v2453 = vpop.f32.mrf.mxu0
      %v2454 = vadd.f32 0.0, %v2453
      %v2455 = vpop.f32.mrf.mxu0
      %v2456 = vadd.f32 0.0, %v2455
      %2457 = vmatmul.bf16.gmra.mxu0 %v2324
      %v2458 = vpop.f32.mrf.mxu0
      %v2459 = vadd.f32 0.0, %v2458
      %v2460 = vpop.f32.mrf.mxu0
      %v2461 = vadd.f32 0.0, %v2460
      %2462 = vdwg.mxu0
      %v2463 = vadd.f32 %v2265, %v2384
      %v2464 = vadd.f32 %v2266, %v2386
      %v2465 = vadd.f32 %v2267, %v2389
      %v2466 = vadd.f32 %v2268, %v2391
      %v2467 = vadd.f32 %v2269, %v2394
      %v2468 = vadd.f32 %v2270, %v2396
      %v2469 = vadd.f32 %v2271, %v2399
      %v2470 = vadd.f32 %v2272, %v2401
      %v2471 = vadd.f32 %v2273, %v2404
      %v2472 = vadd.f32 %v2274, %v2406
      %v2473 = vadd.f32 %v2275, %v2409
      %v2474 = vadd.f32 %v2276, %v2411
      %v2475 = vadd.f32 %v2277, %v2414
      %v2476 = vadd.f32 %v2278, %v2416
      %v2477 = vadd.f32 %v2279, %v2419
      %v2478 = vadd.f32 %v2280, %v2421
      %v2479 = vadd.f32 %v2281, %v2424
      %v2480 = vadd.f32 %v2282, %v2426
      %v2481 = vadd.f32 %v2283, %v2429
      %v2482 = vadd.f32 %v2284, %v2431
      %v2483 = vadd.f32 %v2285, %v2434
      %v2484 = vadd.f32 %v2286, %v2436
      %v2485 = vadd.f32 %v2287, %v2439
      %v2486 = vadd.f32 %v2288, %v2441
      %v2487 = vadd.f32 %v2289, %v2444
      %v2488 = vadd.f32 %v2290, %v2446
      %v2489 = vadd.f32 %v2291, %v2449
      %v2490 = vadd.f32 %v2292, %v2451
      %v2491 = vadd.f32 %v2293, %v2454
      %v2492 = vadd.f32 %v2294, %v2456
      %v2493 = vadd.f32 %v2295, %v2459
      %v2494 = vadd.f32 %v2296, %v2461
      %s2495 = scalar_lea.vmem %s1, 384
      %v2496 = vld [vmem:[%s2495] sm:$0xf]
      %v2497 = vld [vmem:[%s2495 + $0x4] sm:$0xf]
      %v2498 = vld [vmem:[%s2495 + $0x8] sm:$0xf]
      %v2499 = vld [vmem:[%s2495 + $0xc] sm:$0xf]
      %v2500 = vld [vmem:[%s2495 + $0x10] sm:$0xf]
      %v2501 = vld [vmem:[%s2495 + $0x14] sm:$0xf]
      %v2502 = vld [vmem:[%s2495 + $0x18] sm:$0xf]
      %v2503 = vld [vmem:[%s2495 + $0x1c] sm:$0xf]
      %v2504 = vld [vmem:[%s2495 + $0x20] sm:$0xf]
      %v2505 = vld [vmem:[%s2495 + $0x24] sm:$0xf]
      %v2506 = vld [vmem:[%s2495 + $0x28] sm:$0xf]
      %v2507 = vld [vmem:[%s2495 + $0x2c] sm:$0xf]
      %v2508 = vld [vmem:[%s2495 + $0x30] sm:$0xf]
      %v2509 = vld [vmem:[%s2495 + $0x34] sm:$0xf]
      %v2510 = vld [vmem:[%s2495 + $0x38] sm:$0xf]
      %v2511 = vld [vmem:[%s2495 + $0x3c] sm:$0xf]
      %v2514 = vunpack.c.l.b16 %v653
      %v2515 = vunpack.c.l.b16 %v654
      %v2516 = vpack.c.b16 %v2515, %v2514
      %v2534 = vunpack.c.l.b16 %v2496
      %v2535 = vunpack.c.l.b16 %v2497
      %v2536 = vunpack.c.l.b16 %v2498
      %v2537 = vunpack.c.l.b16 %v2499
      %v2538 = vunpack.c.l.b16 %v2500
      %v2539 = vunpack.c.l.b16 %v2501
      %v2540 = vunpack.c.l.b16 %v2502
      %v2541 = vunpack.c.l.b16 %v2503
      %v2542 = vunpack.c.l.b16 %v2504
      %v2543 = vunpack.c.l.b16 %v2505
      %v2544 = vunpack.c.l.b16 %v2506
      %v2545 = vunpack.c.l.b16 %v2507
      %v2546 = vunpack.c.l.b16 %v2508
      %v2547 = vunpack.c.l.b16 %v2509
      %v2548 = vunpack.c.l.b16 %v2510
      %v2549 = vunpack.c.l.b16 %v2511
      %v2550 = vpack.c.b16 %v2535, %v2534
      %v2551 = vpack.c.b16 %v2537, %v2536
      %v2552 = vpack.c.b16 %v2539, %v2538
      %v2553 = vpack.c.b16 %v2541, %v2540
      %v2554 = vpack.c.b16 %v2543, %v2542
      %v2555 = vpack.c.b16 %v2545, %v2544
      %v2556 = vpack.c.b16 %v2547, %v2546
      %v2557 = vpack.c.b16 %v2549, %v2548
      %2566 = vmatpush.bf16.msra.mxu0 %v2557
      %2567 = vmatpush.bf16.msra.mxu0 %v2556
      %2568 = vmatpush.bf16.msra.mxu0 %v2555
      %2569 = vmatpush.bf16.msra.mxu0 %v2554
      %2570 = vmatpush.bf16.msra.mxu0 %v2553
      %2571 = vmatpush.bf16.msra.mxu0 %v2552
      %2572 = vmatpush.bf16.msra.mxu0 %v2551
      %2573 = vmatpush.bf16.msra.mxu0 %v2550
      %2574 = vmatmul.bf16.gmra.mxu0 %v1343
      %v2575 = vpop.f32.mrf.mxu0
      %v2576 = vadd.f32 0.0, %v2575
      %v2577 = vpop.f32.mrf.mxu0
      %v2578 = vadd.f32 0.0, %v2577
      %2579 = vmatmul.bf16.gmra.mxu0 %v1344
      %v2580 = vpop.f32.mrf.mxu0
      %v2581 = vadd.f32 0.0, %v2580
      %v2582 = vpop.f32.mrf.mxu0
      %v2583 = vadd.f32 0.0, %v2582
      %2584 = vmatmul.bf16.gmra.mxu0 %v1345
      %v2585 = vpop.f32.mrf.mxu0
      %v2586 = vadd.f32 0.0, %v2585
      %v2587 = vpop.f32.mrf.mxu0
      %v2588 = vadd.f32 0.0, %v2587
      %2589 = vmatmul.bf16.gmra.mxu0 %v1346
      %v2590 = vpop.f32.mrf.mxu0
      %v2591 = vadd.f32 0.0, %v2590
      %v2592 = vpop.f32.mrf.mxu0
      %v2593 = vadd.f32 0.0, %v2592
      %2594 = vmatmul.bf16.gmra.mxu0 %v1347
      %v2595 = vpop.f32.mrf.mxu0
      %v2596 = vadd.f32 0.0, %v2595
      %v2597 = vpop.f32.mrf.mxu0
      %v2598 = vadd.f32 0.0, %v2597
      %2599 = vmatmul.bf16.gmra.mxu0 %v1348
      %v2600 = vpop.f32.mrf.mxu0
      %v2601 = vadd.f32 0.0, %v2600
      %v2602 = vpop.f32.mrf.mxu0
      %v2603 = vadd.f32 0.0, %v2602
      %2604 = vmatmul.bf16.gmra.mxu0 %v1349
      %v2605 = vpop.f32.mrf.mxu0
      %v2606 = vadd.f32 0.0, %v2605
      %v2607 = vpop.f32.mrf.mxu0
      %v2608 = vadd.f32 0.0, %v2607
      %2609 = vmatmul.bf16.gmra.mxu0 %v1350
      %v2610 = vpop.f32.mrf.mxu0
      %v2611 = vadd.f32 0.0, %v2610
      %v2612 = vpop.f32.mrf.mxu0
      %v2613 = vadd.f32 0.0, %v2612
      %2614 = vmatmul.bf16.gmra.mxu0 %v1351
      %v2615 = vpop.f32.mrf.mxu0
      %v2616 = vadd.f32 0.0, %v2615
      %v2617 = vpop.f32.mrf.mxu0
      %v2618 = vadd.f32 0.0, %v2617
      %2619 = vmatmul.bf16.gmra.mxu0 %v1352
      %v2620 = vpop.f32.mrf.mxu0
      %v2621 = vadd.f32 0.0, %v2620
      %v2622 = vpop.f32.mrf.mxu0
      %v2623 = vadd.f32 0.0, %v2622
      %2624 = vmatmul.bf16.gmra.mxu0 %v1353
      %v2625 = vpop.f32.mrf.mxu0
      %v2626 = vadd.f32 0.0, %v2625
      %v2627 = vpop.f32.mrf.mxu0
      %v2628 = vadd.f32 0.0, %v2627
      %2629 = vmatmul.bf16.gmra.mxu0 %v1354
      %v2630 = vpop.f32.mrf.mxu0
      %v2631 = vadd.f32 0.0, %v2630
      %v2632 = vpop.f32.mrf.mxu0
      %v2633 = vadd.f32 0.0, %v2632
      %2634 = vmatmul.bf16.gmra.mxu0 %v1355
      %v2635 = vpop.f32.mrf.mxu0
      %v2636 = vadd.f32 0.0, %v2635
      %v2637 = vpop.f32.mrf.mxu0
      %v2638 = vadd.f32 0.0, %v2637
      %2639 = vmatmul.bf16.gmra.mxu0 %v1356
      %v2640 = vpop.f32.mrf.mxu0
      %v2641 = vadd.f32 0.0, %v2640
      %v2642 = vpop.f32.mrf.mxu0
      %v2643 = vadd.f32 0.0, %v2642
      %2644 = vmatmul.bf16.gmra.mxu0 %v1912
      %v2645 = vpop.f32.mrf.mxu0
      %v2646 = vadd.f32 0.0, %v2645
      %v2647 = vpop.f32.mrf.mxu0
      %v2648 = vadd.f32 0.0, %v2647
      %2649 = vmatmul.bf16.gmra.mxu0 %v2516
      %v2650 = vpop.f32.mrf.mxu0
      %v2651 = vadd.f32 0.0, %v2650
      %v2652 = vpop.f32.mrf.mxu0
      %v2653 = vadd.f32 0.0, %v2652
      %2654 = vdwg.mxu0
      %v2655 = vadd.f32 %v2463, %v2576
      %v2656 = vadd.f32 %v2464, %v2578
      %v2657 = vadd.f32 %v2465, %v2581
      %v2658 = vadd.f32 %v2466, %v2583
      %v2659 = vadd.f32 %v2467, %v2586
      %v2660 = vadd.f32 %v2468, %v2588
      %v2661 = vadd.f32 %v2469, %v2591
      %v2662 = vadd.f32 %v2470, %v2593
      %v2663 = vadd.f32 %v2471, %v2596
      %v2664 = vadd.f32 %v2472, %v2598
      %v2665 = vadd.f32 %v2473, %v2601
      %v2666 = vadd.f32 %v2474, %v2603
      %v2667 = vadd.f32 %v2475, %v2606
      %v2668 = vadd.f32 %v2476, %v2608
      %v2669 = vadd.f32 %v2477, %v2611
      %v2670 = vadd.f32 %v2478, %v2613
      %v2671 = vadd.f32 %v2479, %v2616
      %v2672 = vadd.f32 %v2480, %v2618
      %v2673 = vadd.f32 %v2481, %v2621
      %v2674 = vadd.f32 %v2482, %v2623
      %v2675 = vadd.f32 %v2483, %v2626
      %v2676 = vadd.f32 %v2484, %v2628
      %v2677 = vadd.f32 %v2485, %v2631
      %v2678 = vadd.f32 %v2486, %v2633
      %v2679 = vadd.f32 %v2487, %v2636
      %v2680 = vadd.f32 %v2488, %v2638
      %v2681 = vadd.f32 %v2489, %v2641
      %v2682 = vadd.f32 %v2490, %v2643
      %v2683 = vadd.f32 %v2491, %v2646
      %v2684 = vadd.f32 %v2492, %v2648
      %v2685 = vadd.f32 %v2493, %v2651
      %v2686 = vadd.f32 %v2494, %v2653
      %v2688 = vshrl.u32 %v653, 16
      %v2690 = vrot.slane %v2688, 4
      %v2691 = vshll.u32 %v653, 16
      %v2693 = vrot.slane %v2691, 5
      %v2694 = vor.u32 %v2690, %v2693
      %v2695 = vrot.slane %v2694, 4
      %v2697 = vshll.u32 %v654, 16
      %v2699 = vrot.slane %v2697, 5
      %v2700 = vsel %vm674, %v2695, %v2699
      %v2701 = vshrl.u32 %v654, 16
      %v2703 = vrot.slane %v2701, 4
      %v2704 = vor.u32 %v2703, %v2699
      %v2705 = vrot.slane %v2704, 4
      %v2707 = vshll.u32 %v655, 16
      %v2709 = vrot.slane %v2707, 5
      %v2710 = vsel %vm674, %v2705, %v2709
      %s2711 = scalar_lea.vmem %s1, 448
      %v2712 = vld [vmem:[%s2711] sm:$0xf]
      %v2713 = vld [vmem:[%s2711 + $0x4] sm:$0xf]
      %v2714 = vld [vmem:[%s2711 + $0x8] sm:$0xf]
      %v2715 = vld [vmem:[%s2711 + $0xc] sm:$0xf]
      %v2716 = vld [vmem:[%s2711 + $0x10] sm:$0xf]
      %v2717 = vld [vmem:[%s2711 + $0x14] sm:$0xf]
      %v2718 = vld [vmem:[%s2711 + $0x18] sm:$0xf]
      %v2719 = vld [vmem:[%s2711 + $0x1c] sm:$0xf]
      %v2720 = vld [vmem:[%s2711 + $0x20] sm:$0xf]
      %v2721 = vld [vmem:[%s2711 + $0x24] sm:$0xf]
      %v2722 = vld [vmem:[%s2711 + $0x28] sm:$0xf]
      %v2723 = vld [vmem:[%s2711 + $0x2c] sm:$0xf]
      %v2724 = vld [vmem:[%s2711 + $0x30] sm:$0xf]
      %v2725 = vld [vmem:[%s2711 + $0x34] sm:$0xf]
      %v2726 = vld [vmem:[%s2711 + $0x38] sm:$0xf]
      %v2727 = vld [vmem:[%s2711 + $0x3c] sm:$0xf]
      %v2728 = vunpack.c.l.b16 %v2700
      %v2729 = vunpack.c.l.b16 %v2710
      %v2730 = vpack.c.b16 %v2729, %v2728
      %v2748 = vunpack.c.l.b16 %v2712
      %v2749 = vunpack.c.l.b16 %v2713
      %v2750 = vunpack.c.l.b16 %v2714
      %v2751 = vunpack.c.l.b16 %v2715
      %v2752 = vunpack.c.l.b16 %v2716
      %v2753 = vunpack.c.l.b16 %v2717
      %v2754 = vunpack.c.l.b16 %v2718
      %v2755 = vunpack.c.l.b16 %v2719
      %v2756 = vunpack.c.l.b16 %v2720
      %v2757 = vunpack.c.l.b16 %v2721
      %v2758 = vunpack.c.l.b16 %v2722
      %v2759 = vunpack.c.l.b16 %v2723
      %v2760 = vunpack.c.l.b16 %v2724
      %v2761 = vunpack.c.l.b16 %v2725
      %v2762 = vunpack.c.l.b16 %v2726
      %v2763 = vunpack.c.l.b16 %v2727
      %v2764 = vpack.c.b16 %v2749, %v2748
      %v2765 = vpack.c.b16 %v2751, %v2750
      %v2766 = vpack.c.b16 %v2753, %v2752
      %v2767 = vpack.c.b16 %v2755, %v2754
      %v2768 = vpack.c.b16 %v2757, %v2756
      %v2769 = vpack.c.b16 %v2759, %v2758
      %v2770 = vpack.c.b16 %v2761, %v2760
      %v2771 = vpack.c.b16 %v2763, %v2762
      %2780 = vmatpush.bf16.msra.mxu0 %v2771
      %2781 = vmatpush.bf16.msra.mxu0 %v2770
      %2782 = vmatpush.bf16.msra.mxu0 %v2769
      %2783 = vmatpush.bf16.msra.mxu0 %v2768
      %2784 = vmatpush.bf16.msra.mxu0 %v2767
      %2785 = vmatpush.bf16.msra.mxu0 %v2766
      %2786 = vmatpush.bf16.msra.mxu0 %v2765
      %2787 = vmatpush.bf16.msra.mxu0 %v2764
      %2788 = vmatmul.bf16.gmra.mxu0 %v1110
      %v2789 = vpop.f32.mrf.mxu0
      %v2790 = vadd.f32 0.0, %v2789
      %v2791 = vpop.f32.mrf.mxu0
      %v2792 = vadd.f32 0.0, %v2791
      %2793 = vmatmul.bf16.gmra.mxu0 %v1111
      %v2794 = vpop.f32.mrf.mxu0
      %v2795 = vadd.f32 0.0, %v2794
      %v2796 = vpop.f32.mrf.mxu0
      %v2797 = vadd.f32 0.0, %v2796
      %2798 = vmatmul.bf16.gmra.mxu0 %v1112
      %v2799 = vpop.f32.mrf.mxu0
      %v2800 = vadd.f32 0.0, %v2799
      %v2801 = vpop.f32.mrf.mxu0
      %v2802 = vadd.f32 0.0, %v2801
      %2803 = vmatmul.bf16.gmra.mxu0 %v1113
      %v2804 = vpop.f32.mrf.mxu0
      %v2805 = vadd.f32 0.0, %v2804
      %v2806 = vpop.f32.mrf.mxu0
      %v2807 = vadd.f32 0.0, %v2806
      %2808 = vmatmul.bf16.gmra.mxu0 %v1114
      %v2809 = vpop.f32.mrf.mxu0
      %v2810 = vadd.f32 0.0, %v2809
      %v2811 = vpop.f32.mrf.mxu0
      %v2812 = vadd.f32 0.0, %v2811
      %2813 = vmatmul.bf16.gmra.mxu0 %v1115
      %v2814 = vpop.f32.mrf.mxu0
      %v2815 = vadd.f32 0.0, %v2814
      %v2816 = vpop.f32.mrf.mxu0
      %v2817 = vadd.f32 0.0, %v2816
      %2818 = vmatmul.bf16.gmra.mxu0 %v1116
      %v2819 = vpop.f32.mrf.mxu0
      %v2820 = vadd.f32 0.0, %v2819
      %v2821 = vpop.f32.mrf.mxu0
      %v2822 = vadd.f32 0.0, %v2821
      %2823 = vmatmul.bf16.gmra.mxu0 %v1117
      %v2824 = vpop.f32.mrf.mxu0
      %v2825 = vadd.f32 0.0, %v2824
      %v2826 = vpop.f32.mrf.mxu0
      %v2827 = vadd.f32 0.0, %v2826
      %2828 = vmatmul.bf16.gmra.mxu0 %v1118
      %v2829 = vpop.f32.mrf.mxu0
      %v2830 = vadd.f32 0.0, %v2829
      %v2831 = vpop.f32.mrf.mxu0
      %v2832 = vadd.f32 0.0, %v2831
      %2833 = vmatmul.bf16.gmra.mxu0 %v1119
      %v2834 = vpop.f32.mrf.mxu0
      %v2835 = vadd.f32 0.0, %v2834
      %v2836 = vpop.f32.mrf.mxu0
      %v2837 = vadd.f32 0.0, %v2836
      %2838 = vmatmul.bf16.gmra.mxu0 %v1120
      %v2839 = vpop.f32.mrf.mxu0
      %v2840 = vadd.f32 0.0, %v2839
      %v2841 = vpop.f32.mrf.mxu0
      %v2842 = vadd.f32 0.0, %v2841
      %2843 = vmatmul.bf16.gmra.mxu0 %v1121
      %v2844 = vpop.f32.mrf.mxu0
      %v2845 = vadd.f32 0.0, %v2844
      %v2846 = vpop.f32.mrf.mxu0
      %v2847 = vadd.f32 0.0, %v2846
      %2848 = vmatmul.bf16.gmra.mxu0 %v1122
      %v2849 = vpop.f32.mrf.mxu0
      %v2850 = vadd.f32 0.0, %v2849
      %v2851 = vpop.f32.mrf.mxu0
      %v2852 = vadd.f32 0.0, %v2851
      %2853 = vmatmul.bf16.gmra.mxu0 %v1123
      %v2854 = vpop.f32.mrf.mxu0
      %v2855 = vadd.f32 0.0, %v2854
      %v2856 = vpop.f32.mrf.mxu0
      %v2857 = vadd.f32 0.0, %v2856
      %2858 = vmatmul.bf16.gmra.mxu0 %v2126
      %v2859 = vpop.f32.mrf.mxu0
      %v2860 = vadd.f32 0.0, %v2859
      %v2861 = vpop.f32.mrf.mxu0
      %v2862 = vadd.f32 0.0, %v2861
      %2863 = vmatmul.bf16.gmra.mxu0 %v2730
      %v2864 = vpop.f32.mrf.mxu0
      %v2865 = vadd.f32 0.0, %v2864
      %v2866 = vpop.f32.mrf.mxu0
      %v2867 = vadd.f32 0.0, %v2866
      %2868 = vdwg.mxu0
      %v2869 = vadd.f32 %v2655, %v2790
      %v2870 = vadd.f32 %v2656, %v2792
      %v2871 = vadd.f32 %v2657, %v2795
      %v2872 = vadd.f32 %v2658, %v2797
      %v2873 = vadd.f32 %v2659, %v2800
      %v2874 = vadd.f32 %v2660, %v2802
      %v2875 = vadd.f32 %v2661, %v2805
      %v2876 = vadd.f32 %v2662, %v2807
      %v2877 = vadd.f32 %v2663, %v2810
      %v2878 = vadd.f32 %v2664, %v2812
      %v2879 = vadd.f32 %v2665, %v2815
      %v2880 = vadd.f32 %v2666, %v2817
      %v2881 = vadd.f32 %v2667, %v2820
      %v2882 = vadd.f32 %v2668, %v2822
      %v2883 = vadd.f32 %v2669, %v2825
      %v2884 = vadd.f32 %v2670, %v2827
      %v2885 = vadd.f32 %v2671, %v2830
      %v2886 = vadd.f32 %v2672, %v2832
      %v2887 = vadd.f32 %v2673, %v2835
      %v2888 = vadd.f32 %v2674, %v2837
      %v2889 = vadd.f32 %v2675, %v2840
      %v2890 = vadd.f32 %v2676, %v2842
      %v2891 = vadd.f32 %v2677, %v2845
      %v2892 = vadd.f32 %v2678, %v2847
      %v2893 = vadd.f32 %v2679, %v2850
      %v2894 = vadd.f32 %v2680, %v2852
      %v2895 = vadd.f32 %v2681, %v2855
      %v2896 = vadd.f32 %v2682, %v2857
      %v2897 = vadd.f32 %v2683, %v2860
      %v2898 = vadd.f32 %v2684, %v2862
      %v2899 = vadd.f32 %v2685, %v2865
      %v2900 = vadd.f32 %v2686, %v2867
      %v2902 = vrot.slane %v653, 5
      %v2903 = vrot.slane %v2902, 4
      %v2904 = vrot.slane %v654, 5
      %v2905 = vsel %vm1528, %v2903, %v2904
      %v2906 = vrot.slane %v2904, 4
      %v2907 = vrot.slane %v655, 5
      %v2908 = vsel %vm1528, %v2906, %v2907
      %s2909 = scalar_lea.vmem %s1, 512
      %v2910 = vld [vmem:[%s2909] sm:$0xf]
      %v2911 = vld [vmem:[%s2909 + $0x4] sm:$0xf]
      %v2912 = vld [vmem:[%s2909 + $0x8] sm:$0xf]
      %v2913 = vld [vmem:[%s2909 + $0xc] sm:$0xf]
      %v2914 = vld [vmem:[%s2909 + $0x10] sm:$0xf]
      %v2915 = vld [vmem:[%s2909 + $0x14] sm:$0xf]
      %v2916 = vld [vmem:[%s2909 + $0x18] sm:$0xf]
      %v2917 = vld [vmem:[%s2909 + $0x1c] sm:$0xf]
      %v2918 = vld [vmem:[%s2909 + $0x20] sm:$0xf]
      %v2919 = vld [vmem:[%s2909 + $0x24] sm:$0xf]
      %v2920 = vld [vmem:[%s2909 + $0x28] sm:$0xf]
      %v2921 = vld [vmem:[%s2909 + $0x2c] sm:$0xf]
      %v2922 = vld [vmem:[%s2909 + $0x30] sm:$0xf]
      %v2923 = vld [vmem:[%s2909 + $0x34] sm:$0xf]
      %v2924 = vld [vmem:[%s2909 + $0x38] sm:$0xf]
      %v2925 = vld [vmem:[%s2909 + $0x3c] sm:$0xf]
      %v2926 = vunpack.c.l.b16 %v2905
      %v2927 = vunpack.c.l.b16 %v2908
      %v2928 = vpack.c.b16 %v2927, %v2926
      %v2946 = vunpack.c.l.b16 %v2910
      %v2947 = vunpack.c.l.b16 %v2911
      %v2948 = vunpack.c.l.b16 %v2912
      %v2949 = vunpack.c.l.b16 %v2913
      %v2950 = vunpack.c.l.b16 %v2914
      %v2951 = vunpack.c.l.b16 %v2915
      %v2952 = vunpack.c.l.b16 %v2916
      %v2953 = vunpack.c.l.b16 %v2917
      %v2954 = vunpack.c.l.b16 %v2918
      %v2955 = vunpack.c.l.b16 %v2919
      %v2956 = vunpack.c.l.b16 %v2920
      %v2957 = vunpack.c.l.b16 %v2921
      %v2958 = vunpack.c.l.b16 %v2922
      %v2959 = vunpack.c.l.b16 %v2923
      %v2960 = vunpack.c.l.b16 %v2924
      %v2961 = vunpack.c.l.b16 %v2925
      %v2962 = vpack.c.b16 %v2947, %v2946
      %v2963 = vpack.c.b16 %v2949, %v2948
      %v2964 = vpack.c.b16 %v2951, %v2950
      %v2965 = vpack.c.b16 %v2953, %v2952
      %v2966 = vpack.c.b16 %v2955, %v2954
      %v2967 = vpack.c.b16 %v2957, %v2956
      %v2968 = vpack.c.b16 %v2959, %v2958
      %v2969 = vpack.c.b16 %v2961, %v2960
      %2978 = vmatpush.bf16.msra.mxu0 %v2969
      %2979 = vmatpush.bf16.msra.mxu0 %v2968
      %2980 = vmatpush.bf16.msra.mxu0 %v2967
      %2981 = vmatpush.bf16.msra.mxu0 %v2966
      %2982 = vmatpush.bf16.msra.mxu0 %v2965
      %2983 = vmatpush.bf16.msra.mxu0 %v2964
      %2984 = vmatpush.bf16.msra.mxu0 %v2963
      %2985 = vmatpush.bf16.msra.mxu0 %v2962
      %2986 = vmatmul.bf16.gmra.mxu0 %v1692
      %v2987 = vpop.f32.mrf.mxu0
      %v2988 = vadd.f32 0.0, %v2987
      %v2989 = vpop.f32.mrf.mxu0
      %v2990 = vadd.f32 0.0, %v2989
      %2991 = vmatmul.bf16.gmra.mxu0 %v1693
      %v2992 = vpop.f32.mrf.mxu0
      %v2993 = vadd.f32 0.0, %v2992
      %v2994 = vpop.f32.mrf.mxu0
      %v2995 = vadd.f32 0.0, %v2994
      %2996 = vmatmul.bf16.gmra.mxu0 %v1694
      %v2997 = vpop.f32.mrf.mxu0
      %v2998 = vadd.f32 0.0, %v2997
      %v2999 = vpop.f32.mrf.mxu0
      %v3000 = vadd.f32 0.0, %v2999
      %3001 = vmatmul.bf16.gmra.mxu0 %v1695
      %v3002 = vpop.f32.mrf.mxu0
      %v3003 = vadd.f32 0.0, %v3002
      %v3004 = vpop.f32.mrf.mxu0
      %v3005 = vadd.f32 0.0, %v3004
      %3006 = vmatmul.bf16.gmra.mxu0 %v1696
      %v3007 = vpop.f32.mrf.mxu0
      %v3008 = vadd.f32 0.0, %v3007
      %v3009 = vpop.f32.mrf.mxu0
      %v3010 = vadd.f32 0.0, %v3009
      %3011 = vmatmul.bf16.gmra.mxu0 %v1697
      %v3012 = vpop.f32.mrf.mxu0
      %v3013 = vadd.f32 0.0, %v3012
      %v3014 = vpop.f32.mrf.mxu0
      %v3015 = vadd.f32 0.0, %v3014
      %3016 = vmatmul.bf16.gmra.mxu0 %v1698
      %v3017 = vpop.f32.mrf.mxu0
      %v3018 = vadd.f32 0.0, %v3017
      %v3019 = vpop.f32.mrf.mxu0
      %v3020 = vadd.f32 0.0, %v3019
      %3021 = vmatmul.bf16.gmra.mxu0 %v1699
      %v3022 = vpop.f32.mrf.mxu0
      %v3023 = vadd.f32 0.0, %v3022
      %v3024 = vpop.f32.mrf.mxu0
      %v3025 = vadd.f32 0.0, %v3024
      %3026 = vmatmul.bf16.gmra.mxu0 %v1700
      %v3027 = vpop.f32.mrf.mxu0
      %v3028 = vadd.f32 0.0, %v3027
      %v3029 = vpop.f32.mrf.mxu0
      %v3030 = vadd.f32 0.0, %v3029
      %3031 = vmatmul.bf16.gmra.mxu0 %v1701
      %v3032 = vpop.f32.mrf.mxu0
      %v3033 = vadd.f32 0.0, %v3032
      %v3034 = vpop.f32.mrf.mxu0
      %v3035 = vadd.f32 0.0, %v3034
      %3036 = vmatmul.bf16.gmra.mxu0 %v1702
      %v3037 = vpop.f32.mrf.mxu0
      %v3038 = vadd.f32 0.0, %v3037
      %v3039 = vpop.f32.mrf.mxu0
      %v3040 = vadd.f32 0.0, %v3039
      %3041 = vmatmul.bf16.gmra.mxu0 %v1703
      %v3042 = vpop.f32.mrf.mxu0
      %v3043 = vadd.f32 0.0, %v3042
      %v3044 = vpop.f32.mrf.mxu0
      %v3045 = vadd.f32 0.0, %v3044
      %3046 = vmatmul.bf16.gmra.mxu0 %v1704
      %v3047 = vpop.f32.mrf.mxu0
      %v3048 = vadd.f32 0.0, %v3047
      %v3049 = vpop.f32.mrf.mxu0
      %v3050 = vadd.f32 0.0, %v3049
      %3051 = vmatmul.bf16.gmra.mxu0 %v1705
      %v3052 = vpop.f32.mrf.mxu0
      %v3053 = vadd.f32 0.0, %v3052
      %v3054 = vpop.f32.mrf.mxu0
      %v3055 = vadd.f32 0.0, %v3054
      %3056 = vmatmul.bf16.gmra.mxu0 %v2324
      %v3057 = vpop.f32.mrf.mxu0
      %v3058 = vadd.f32 0.0, %v3057
      %v3059 = vpop.f32.mrf.mxu0
      %v3060 = vadd.f32 0.0, %v3059
      %3061 = vmatmul.bf16.gmra.mxu0 %v2928
      %v3062 = vpop.f32.mrf.mxu0
      %v3063 = vadd.f32 0.0, %v3062
      %v3064 = vpop.f32.mrf.mxu0
      %v3065 = vadd.f32 0.0, %v3064
      %3066 = vdwg.mxu0
      %v3067 = vadd.f32 %v2869, %v2988
      %v3068 = vadd.f32 %v2870, %v2990
      %v3069 = vadd.f32 %v2871, %v2993
      %v3070 = vadd.f32 %v2872, %v2995
      %v3071 = vadd.f32 %v2873, %v2998
      %v3072 = vadd.f32 %v2874, %v3000
      %v3073 = vadd.f32 %v2875, %v3003
      %v3074 = vadd.f32 %v2876, %v3005
      %v3075 = vadd.f32 %v2877, %v3008
      %v3076 = vadd.f32 %v2878, %v3010
      %v3077 = vadd.f32 %v2879, %v3013
      %v3078 = vadd.f32 %v2880, %v3015
      %v3079 = vadd.f32 %v2881, %v3018
      %v3080 = vadd.f32 %v2882, %v3020
      %v3081 = vadd.f32 %v2883, %v3023
      %v3082 = vadd.f32 %v2884, %v3025
      %v3083 = vadd.f32 %v2885, %v3028
      %v3084 = vadd.f32 %v2886, %v3030
      %v3085 = vadd.f32 %v2887, %v3033
      %v3086 = vadd.f32 %v2888, %v3035
      %v3087 = vadd.f32 %v2889, %v3038
      %v3088 = vadd.f32 %v2890, %v3040
      %v3089 = vadd.f32 %v2891, %v3043
      %v3090 = vadd.f32 %v2892, %v3045
      %v3091 = vadd.f32 %v2893, %v3048
      %v3092 = vadd.f32 %v2894, %v3050
      %v3093 = vadd.f32 %v2895, %v3053
      %v3094 = vadd.f32 %v2896, %v3055
      %v3095 = vadd.f32 %v2897, %v3058
      %v3096 = vadd.f32 %v2898, %v3060
      %v3097 = vadd.f32 %v2899, %v3063
      %v3098 = vadd.f32 %v2900, %v3065
      %v3099 = vadd.f32 %v3067, %v3068
      %v3100 = vadd.f32 %v3099, %v3069
      %v3101 = vadd.f32 %v3100, %v3070
      %v3102 = vadd.f32 %v3101, %v3071
      %v3103 = vadd.f32 %v3102, %v3072
      %v3104 = vadd.f32 %v3103, %v3073
      %v3105 = vadd.f32 %v3104, %v3074
      %v3106 = vadd.f32 %v3105, %v3075
      %v3107 = vadd.f32 %v3106, %v3076
      %v3108 = vadd.f32 %v3107, %v3077
      %v3109 = vadd.f32 %v3108, %v3078
      %v3110 = vadd.f32 %v3109, %v3079
      %v3111 = vadd.f32 %v3110, %v3080
      %v3112 = vadd.f32 %v3111, %v3081
      %v3113 = vadd.f32 %v3112, %v3082
      %v3114 = vadd.f32 %v3113, %v3083
      %v3115 = vadd.f32 %v3114, %v3084
      %v3116 = vadd.f32 %v3115, %v3085
      %v3117 = vadd.f32 %v3116, %v3086
      %v3118 = vadd.f32 %v3117, %v3087
      %v3119 = vadd.f32 %v3118, %v3088
      %v3120 = vadd.f32 %v3119, %v3089
      %v3121 = vadd.f32 %v3120, %v3090
      %v3122 = vadd.f32 %v3121, %v3091
      %v3123 = vadd.f32 %v3122, %v3092
      %v3124 = vadd.f32 %v3123, %v3093
      %v3125 = vadd.f32 %v3124, %v3094
      %v3126 = vadd.f32 %v3125, %v3095
      %v3127 = vadd.f32 %v3126, %v3096
      %v3128 = vadd.f32 %v3127, %v3097
      %v3129 = vadd.f32 %v3128, %v3098
      %v3130 = vrot.slane %v3129, 4
      %v3131 = vadd.f32 %v3129, %v3130
      %v3132 = vrot.slane %v3131, 2
      %v3133 = vadd.f32 %v3131, %v3132
      %v3134 = vrot.slane %v3133, 1
      %v3135 = vadd.f32 %v3133, %v3134
      %v3136 = vmul.f32 %v3067, %v3067
      %v3137 = vmul.f32 %v3068, %v3068
      %v3138 = vmul.f32 %v3069, %v3069
      %v3139 = vmul.f32 %v3070, %v3070
      %v3140 = vmul.f32 %v3071, %v3071
      %v3141 = vmul.f32 %v3072, %v3072
      %v3142 = vmul.f32 %v3073, %v3073
      %v3143 = vmul.f32 %v3074, %v3074
      %v3144 = vmul.f32 %v3075, %v3075
      %v3145 = vmul.f32 %v3076, %v3076
      %v3146 = vmul.f32 %v3077, %v3077
      %v3147 = vmul.f32 %v3078, %v3078
      %v3148 = vmul.f32 %v3079, %v3079
      %v3149 = vmul.f32 %v3080, %v3080
      %v3150 = vmul.f32 %v3081, %v3081
      %v3151 = vmul.f32 %v3082, %v3082
      %v3152 = vmul.f32 %v3083, %v3083
      %v3153 = vmul.f32 %v3084, %v3084
      %v3154 = vmul.f32 %v3085, %v3085
      %v3155 = vmul.f32 %v3086, %v3086
      %v3156 = vmul.f32 %v3087, %v3087
      %v3157 = vmul.f32 %v3088, %v3088
      %v3158 = vmul.f32 %v3089, %v3089
      %v3159 = vmul.f32 %v3090, %v3090
      %v3160 = vmul.f32 %v3091, %v3091
      %v3161 = vmul.f32 %v3092, %v3092
      %v3162 = vmul.f32 %v3093, %v3093
      %v3163 = vmul.f32 %v3094, %v3094
      %v3164 = vmul.f32 %v3095, %v3095
      %v3165 = vmul.f32 %v3096, %v3096
      %v3166 = vmul.f32 %v3097, %v3097
      %v3167 = vmul.f32 %v3098, %v3098
      %v3168 = vadd.f32 %v3136, %v3137
      %v3169 = vadd.f32 %v3168, %v3138
      %v3170 = vadd.f32 %v3169, %v3139
      %v3171 = vadd.f32 %v3170, %v3140
      %v3172 = vadd.f32 %v3171, %v3141
      %v3173 = vadd.f32 %v3172, %v3142
      %v3174 = vadd.f32 %v3173, %v3143
      %v3175 = vadd.f32 %v3174, %v3144
      %v3176 = vadd.f32 %v3175, %v3145
      %v3177 = vadd.f32 %v3176, %v3146
      %v3178 = vadd.f32 %v3177, %v3147
      %v3179 = vadd.f32 %v3178, %v3148
      %v3180 = vadd.f32 %v3179, %v3149
      %v3181 = vadd.f32 %v3180, %v3150
      %v3182 = vadd.f32 %v3181, %v3151
      %v3183 = vadd.f32 %v3182, %v3152
      %v3184 = vadd.f32 %v3183, %v3153
      %v3185 = vadd.f32 %v3184, %v3154
      %v3186 = vadd.f32 %v3185, %v3155
      %v3187 = vadd.f32 %v3186, %v3156
      %v3188 = vadd.f32 %v3187, %v3157
      %v3189 = vadd.f32 %v3188, %v3158
      %v3190 = vadd.f32 %v3189, %v3159
      %v3191 = vadd.f32 %v3190, %v3160
      %v3192 = vadd.f32 %v3191, %v3161
      %v3193 = vadd.f32 %v3192, %v3162
      %v3194 = vadd.f32 %v3193, %v3163
      %v3195 = vadd.f32 %v3194, %v3164
      %v3196 = vadd.f32 %v3195, %v3165
      %v3197 = vadd.f32 %v3196, %v3166
      %v3198 = vadd.f32 %v3197, %v3167
      %v3199 = vrot.slane %v3198, 4
      %v3200 = vadd.f32 %v3198, %v3199
      %v3201 = vrot.slane %v3200, 2
      %v3202 = vadd.f32 %v3200, %v3201
      %v3203 = vrot.slane %v3202, 1
      %v3204 = vadd.f32 %v3202, %v3203
      %vm3205 = vcmask 1040384
      %v3206 = vsel %vm3205, %v3135, %v3204
      %3207 = vst [vmem:[%s235] sm:$0x3] %v3206
      %3208 = vst [vmem:[%s231] sm:$0xff] %v3067
      %3209 = vst [vmem:[%s231 + $0x8] sm:$0xff] %v3068
      %3210 = vst [vmem:[%s231 + $0x10] sm:$0xff] %v3069
      %3211 = vst [vmem:[%s231 + $0x18] sm:$0xff] %v3070
      %3212 = vst [vmem:[%s231 + $0x20] sm:$0xff] %v3071
      %3213 = vst [vmem:[%s231 + $0x28] sm:$0xff] %v3072
      %3214 = vst [vmem:[%s231 + $0x30] sm:$0xff] %v3073
      %3215 = vst [vmem:[%s231 + $0x38] sm:$0xff] %v3074
      %3216 = vst [vmem:[%s231 + $0x40] sm:$0xff] %v3075
      %3217 = vst [vmem:[%s231 + $0x48] sm:$0xff] %v3076
      %3218 = vst [vmem:[%s231 + $0x50] sm:$0xff] %v3077
      %3219 = vst [vmem:[%s231 + $0x58] sm:$0xff] %v3078
      %3220 = vst [vmem:[%s231 + $0x60] sm:$0xff] %v3079
      %3221 = vst [vmem:[%s231 + $0x68] sm:$0xff] %v3080
      %3222 = vst [vmem:[%s231 + $0x70] sm:$0xff] %v3081
      %3223 = vst [vmem:[%s231 + $0x78] sm:$0xff] %v3082
      %3224 = vst [vmem:[%s231 + $0x80] sm:$0xff] %v3083
      %3225 = vst [vmem:[%s231 + $0x88] sm:$0xff] %v3084
      %3226 = vst [vmem:[%s231 + $0x90] sm:$0xff] %v3085
      %3227 = vst [vmem:[%s231 + $0x98] sm:$0xff] %v3086
      %3228 = vst [vmem:[%s231 + $0xa0] sm:$0xff] %v3087
      %3229 = vst [vmem:[%s231 + $0xa8] sm:$0xff] %v3088
      %3230 = vst [vmem:[%s231 + $0xb0] sm:$0xff] %v3089
      %3231 = vst [vmem:[%s231 + $0xb8] sm:$0xff] %v3090
      %3232 = vst [vmem:[%s231 + $0xc0] sm:$0xff] %v3091
      %3233 = vst [vmem:[%s231 + $0xc8] sm:$0xff] %v3092
      %3234 = vst [vmem:[%s231 + $0xd0] sm:$0xff] %v3093
      %3235 = vst [vmem:[%s231 + $0xd8] sm:$0xff] %v3094
      %3236 = vst [vmem:[%s231 + $0xe0] sm:$0xff] %v3095
      %3237 = vst [vmem:[%s231 + $0xe8] sm:$0xff] %v3096
      %3238 = vst [vmem:[%s231 + $0xf0] sm:$0xff] %v3097
      %3239 = vst [vmem:[%s231 + $0xf8] sm:$0xff] %v3098
      %p3240 = scmp.lt.s32.totalorder %s17, 1
      %s3241 = scalar_select %p3240, %s17, 1
      %s3242 = smul.addr %s3241, 32
      %s3243 = smul.addr %s3242, 8
      %s3244 = scalar_lea.vmem %s4, %s3243
      %p3245 = scmp.lt.s32.totalorder %s17, 1
      %s3246 = scalar_select %p3245, %s17, 1
      %s3247 = smul.addr %s3246, 2
      %s3248 = scalar_lea.vmem %s5, %s3247
      // Predicated region
      $region37: #{plain_block_forward.4} parent=35 // pred_check
        %p3249 = pneg %p124
      $region38: #{plain_block_forward.4} parent=35 // pred_check_branch
        %3251 = sbr.rel (%p3249) target = $region40
      $region39: #{plain_block_forward.4} parent=35 // pred_region
        _
      $region40: #{plain_block_forward.4} parent=35 // pred_fallthru
        _
      // Predicated region
      $region41: #{plain_block_forward.4} parent=35 // pred_check
        %p3252 = pneg %p150
      $region42: #{plain_block_forward.4} parent=35 // pred_check_branch
        %3254 = sbr.rel (%p3252) target = $region44
      $region43: #{plain_block_forward.4} parent=35 // pred_region
        _
      $region44: #{plain_block_forward.4} parent=35 // pred_fallthru
        _
    $region36: #{plain_block_forward.4} parent=5 // pred_fallthru
      _
    %p3255 = scmp.le.s32.totalorder 2, %s12
    // Predicated region
    $region45: #{plain_block_forward.4} parent=5 // pred_check
      %p3256 = pneg %p3255
    $region46: #{plain_block_forward.4} parent=5 // pred_check_branch
      %3258 = sbr.rel (%p3256) target = $region48
    $region47: #{plain_block_forward.4} parent=5 // pred_region
      %s3259 = ssub.s32 %s12, 2
      // Predicated region
      $region49: #{plain_block_forward.4} parent=47 // pred_check
        %p3260 = pneg %p130
      $region50: #{plain_block_forward.4} parent=47 // pred_check_branch
        %3262 = sbr.rel (%p3260) target = $region52
      $region51: #{plain_block_forward.4} parent=47 // pred_region
        %p3263 = scmp.lt.s32.totalorder %s18, 1
        %s3264 = scalar_select %p3263, %s18, 1
        %s3265 = smul.addr %s3264, 32
        %s3266 = smul.addr %s3265, 8
        %s3267 = scalar_lea.vmem %s4, %s3266
      $region52: #{plain_block_forward.4} parent=47 // pred_fallthru
        _
      // Predicated region
      $region53: #{plain_block_forward.4} parent=47 // pred_check
        %p3268 = pneg %p156
      $region54: #{plain_block_forward.4} parent=47 // pred_check_branch
        %3270 = sbr.rel (%p3268) target = $region56
      $region55: #{plain_block_forward.4} parent=47 // pred_region
        %p3271 = scmp.lt.s32.totalorder %s18, 1
        %s3272 = scalar_select %p3271, %s18, 1
        %s3273 = smul.addr %s3272, 2
        %s3274 = scalar_lea.vmem %s5, %s3273
      $region56: #{plain_block_forward.4} parent=47 // pred_fallthru
        _
    $region48: #{plain_block_forward.4} parent=5 // pred_fallthru
      _
  $region6: #{plain_block_forward.4} parent=0 // loop_footer
    %s16 = sadd.s32 1, %s12
  $region7: #{plain_block_forward.4} parent=0 // loop_footer_branch
    %11 = sbr.rel target = $region3
  $region8: #{plain_block_forward.4} parent=0 // loop_exit
    _

</llo_original>
